<compile_context>
chip_gen: v5e
topology: v5e:2x2
jax: 0.10.0
libtpu: 0.0.40
codegen_flags: <defaults>
</compile_context>

<pallas_src>
import functools

import jax
import jax.numpy as jnp
from jax.experimental import pallas as pl
from jax.experimental.pallas import tpu as pltpu


def _round_up(x, m):
    return (x + m - 1) // m * m


# ---------------------------------------------------------------------------
# Fused MLP kernel: x_ref, (w1, b1, ..., wL, bL), o_ref
# ---------------------------------------------------------------------------
def _decoder_kernel(x_ref, *refs, activations):
    o_ref = refs[-1]
    wb = refs[:-1]
    n_layers = len(wb) // 2
    assert len(activations) == n_layers

    h = x_ref[...].astype(jnp.float32)          # (tb, F0_pad) f32
    for i in range(n_layers):
        w = wb[2 * i][...]                      # (Kp, Np) bf16, zero-padded
        b = wb[2 * i + 1][...]                  # (1, Np)  f32, zero-padded
        # MXU matmul in bf16 with f32 accumulation; bias/activation on VPU/EUP
        # in f32.  Padded K-rows of w are zero, so padded columns of h are
        # inert; padded N-columns are handled by the zero rows of the next w.
        y = jnp.dot(h.astype(w.dtype), w, preferred_element_type=jnp.float32)
        y = y + b
        if activations[i] == "sigmoid":
            h = jax.nn.sigmoid(y)               # EUP; padded cols -> 0.5, sliced off
        else:
            h = jnp.maximum(y, 0.0)             # ReLU; padded cols stay 0
    o_ref[...] = h.astype(o_ref.dtype)


# ---------------------------------------------------------------------------
# Parameter init (mimics nn.Linear uniform(-1/sqrt(fan_in), +)) and packing
# ---------------------------------------------------------------------------
def init_decoder_params(key, input_, layers):
    params = []
    in_f = input_
    for out_f in layers:
        key, kw, kb = jax.random.split(key, 3)
        bound = 1.0 / (in_f ** 0.5)
        w = jax.random.uniform(kw, (in_f, out_f), jnp.float32, -bound, bound)
        b = jax.random.uniform(kb, (out_f,), jnp.float32, -bound, bound)
        params.append((w, b))
        in_f = out_f
    return params


def pack_decoder_params(params):
    """Zero-pad feature dims to multiples of 128, cast weights to bf16,
    reshape biases to (1, N_pad) f32 — done once, host side."""
    packed = []
    for w, b in params:
        K, N = w.shape
        Kp, Np = _round_up(K, 128), _round_up(N, 128)
        wp = jnp.zeros((Kp, Np), jnp.bfloat16).at[:K, :N].set(w.astype(jnp.bfloat16))
        bp = jnp.zeros((1, Np), jnp.float32).at[0, :N].set(b)
        packed.append((wp, bp))
    return packed


def decoder_activations(layers):
    """Replicates the PyTorch gate: sigmoid iff layer size == layers[-1]."""
    return tuple("sigmoid" if layer == layers[-1] else "relu" for layer in layers)


# ---------------------------------------------------------------------------
# Wrapper
# ---------------------------------------------------------------------------
def decoder_forward(x, packed_params, layers, *, batch_tile=256):
    B, F = x.shape
    Kp = packed_params[0][0].shape[0]          # padded input feature dim
    Np_last = packed_params[-1][0].shape[1]    # padded output feature dim
    out_dim = layers[-1]
    activations = decoder_activations(layers)

    # Batch tiling: multiple of 8 sublanes; tile up to `batch_tile` rows so a
    # large batch becomes a parallel grid (weights stay VMEM-resident across
    # grid steps; v7x shards the "parallel" axis across both TCs).
    tb = min(batch_tile, _round_up(B, 8))
    Bp = _round_up(B, tb)

    xp = jnp.zeros((Bp, Kp), jnp.float32).at[:B, :F].set(x)

    in_specs = [pl.BlockSpec((tb, Kp), lambda i: (i, 0))]
    flat_params = []
    for w, b in packed_params:
        # Constant block index -> fetched once, reused every grid step.
        in_specs.append(pl.BlockSpec(w.shape, lambda i: (0, 0)))
        in_specs.append(pl.BlockSpec(b.shape, lambda i: (0, 0)))
        flat_params += [w, b]

    kernel = functools.partial(_decoder_kernel, activations=activations)

    out = pl.pallas_call(
        kernel,
        out_shape=jax.ShapeDtypeStruct((Bp, Np_last), jnp.float32),
        grid=(Bp // tb,),
        in_specs=in_specs,
        out_specs=pl.BlockSpec((tb, Np_last), lambda i: (i, 0)),
        compiler_params=pltpu.CompilerParams(
            dimension_semantics=("parallel",)),
    )(xp, *flat_params)

    return out[:B, :out_dim]


def decoder_ref(x, packed_params, dims, layers):
    """Pure-JAX reference using the same (bf16-quantized) packed weights."""
    activations = decoder_activations(layers)
    h = x
    for i, (w, b) in enumerate(packed_params):
        k, nout = dims[i], dims[i + 1]
        w_u = w[:k, :nout]                     # bf16
        b_u = b[0, :nout]                      # f32
        y = jnp.dot(h.astype(w_u.dtype), w_u,
                    preferred_element_type=jnp.float32) + b_u
        h = jax.nn.sigmoid(y) if activations[i] == "sigmoid" else jnp.maximum(y, 0.0)
    return h


if __name__ == "__main__":
    key = jax.random.PRNGKey(0)
    input_ = 8                                 # latent dim fed to the decoder
    layers = [10, 100, 500, 1000, 784]
    batch = 8

    kx, kp = jax.random.split(key)
    x = jax.random.normal(kx, (batch, input_), jnp.float32)
    params = init_decoder_params(kp, input_, layers)
    packed = pack_decoder_params(params)

    fwd = jax.jit(lambda xx: decoder_forward(xx, packed, layers))
    out = jax.block_until_ready(fwd(x))

    ref = decoder_ref(x, packed, [input_] + layers, layers)

    assert out.shape == (batch, layers[-1]), out.shape
    assert bool(jnp.all((out >= 0.0) & (out <= 1.0)))       # sigmoid output range
    assert jnp.allclose(out, ref, atol=1e-2, rtol=1e-2), (
        float(jnp.max(jnp.abs(out - ref))))

    print("KERNEL_OK")
</pallas_src>

<mosaic_0001>
module attributes {stable_mosaic.version = 11 : i64} {
  func.func @_decoder_kernel(%arg0: i32, %arg1: memref<8x128xf32, #tpu.memory_space<vmem>>, %arg2: memref<128x128xbf16, #tpu.memory_space<vmem>>, %arg3: memref<1x128xf32, #tpu.memory_space<vmem>>, %arg4: memref<128x128xbf16, #tpu.memory_space<vmem>>, %arg5: memref<1x128xf32, #tpu.memory_space<vmem>>, %arg6: memref<128x512xbf16, #tpu.memory_space<vmem>>, %arg7: memref<1x512xf32, #tpu.memory_space<vmem>>, %arg8: memref<512x1024xbf16, #tpu.memory_space<vmem>>, %arg9: memref<1x1024xf32, #tpu.memory_space<vmem>>, %arg10: memref<1024x896xbf16, #tpu.memory_space<vmem>>, %arg11: memref<1x896xf32, #tpu.memory_space<vmem>>, %arg12: memref<8x896xf32, #tpu.memory_space<vmem>>) attributes {dimension_semantics = [#tpu.dimension_semantics<parallel>], iteration_bounds = array<i64: 1>, scalar_prefetch = 0 : i64, scratch_operands = 0 : i64, tpu.core_type = #tpu.core_type<tc>, window_params = [{transform_indices = @transform_0, window_bounds = array<i64: 8, 128>}, {pipeline_mode = #tpu.pipeline_mode<synchronous>, transform_indices = @transform_1, window_bounds = array<i64: 128, 128>}, {pipeline_mode = #tpu.pipeline_mode<synchronous>, transform_indices = @transform_2, window_bounds = array<i64: 1, 128>}, {pipeline_mode = #tpu.pipeline_mode<synchronous>, transform_indices = @transform_3, window_bounds = array<i64: 128, 128>}, {pipeline_mode = #tpu.pipeline_mode<synchronous>, transform_indices = @transform_4, window_bounds = array<i64: 1, 128>}, {pipeline_mode = #tpu.pipeline_mode<synchronous>, transform_indices = @transform_5, window_bounds = array<i64: 128, 512>}, {pipeline_mode = #tpu.pipeline_mode<synchronous>, transform_indices = @transform_6, window_bounds = array<i64: 1, 512>}, {pipeline_mode = #tpu.pipeline_mode<synchronous>, transform_indices = @transform_7, window_bounds = array<i64: 512, 1024>}, {pipeline_mode = #tpu.pipeline_mode<synchronous>, transform_indices = @transform_8, window_bounds = array<i64: 1, 1024>}, {pipeline_mode = #tpu.pipeline_mode<synchronous>, transform_indices = @transform_9, window_bounds = array<i64: 1024, 896>}, {pipeline_mode = #tpu.pipeline_mode<synchronous>, transform_indices = @transform_10, window_bounds = array<i64: 1, 896>}, {transform_indices = @transform_11, window_bounds = array<i64: 8, 896>}]} {
    %c0 = arith.constant 0 : index
    %c0_0 = arith.constant 0 : index
    %0 = vector.load %arg1[%c0, %c0_0] : memref<8x128xf32, #tpu.memory_space<vmem>>, vector<8x128xf32>
    %c0_1 = arith.constant 0 : index
    %c0_2 = arith.constant 0 : index
    %1 = vector.load %arg2[%c0_1, %c0_2] : memref<128x128xbf16, #tpu.memory_space<vmem>>, vector<128x128xbf16>
    %c0_3 = arith.constant 0 : index
    %c0_4 = arith.constant 0 : index
    %2 = vector.load %arg3[%c0_3, %c0_4] : memref<1x128xf32, #tpu.memory_space<vmem>>, vector<1x128xf32>
    %3 = arith.truncf %0 : vector<8x128xf32> to vector<8x128xbf16>
    %cst = arith.constant dense<0.000000e+00> : vector<8x128xf32>
    %4 = tpu.matmul %3, %1, %cst {dimension_numbers = #tpu.dot_dimension_numbers<[1], [0], [0], [1], [0, 0, 1, 1], [], []>} : vector<8x128xbf16>, vector<128x128xbf16>, vector<8x128xf32> -> vector<8x128xf32>
    %5 = vector.broadcast %2 : vector<1x128xf32> to vector<8x128xf32>
    %6 = arith.addf %4, %5 : vector<8x128xf32>
    %cst_5 = arith.constant 0.000000e+00 : f32
    %7 = vector.broadcast %cst_5 : f32 to vector<8x128xf32>
    %8 = arith.maximumf %6, %7 : vector<8x128xf32>
    %c0_6 = arith.constant 0 : index
    %c0_7 = arith.constant 0 : index
    %9 = vector.load %arg4[%c0_6, %c0_7] : memref<128x128xbf16, #tpu.memory_space<vmem>>, vector<128x128xbf16>
    %c0_8 = arith.constant 0 : index
    %c0_9 = arith.constant 0 : index
    %10 = vector.load %arg5[%c0_8, %c0_9] : memref<1x128xf32, #tpu.memory_space<vmem>>, vector<1x128xf32>
    %11 = arith.truncf %8 : vector<8x128xf32> to vector<8x128xbf16>
    %cst_10 = arith.constant dense<0.000000e+00> : vector<8x128xf32>
    %12 = tpu.matmul %11, %9, %cst_10 {dimension_numbers = #tpu.dot_dimension_numbers<[1], [0], [0], [1], [0, 0, 1, 1], [], []>} : vector<8x128xbf16>, vector<128x128xbf16>, vector<8x128xf32> -> vector<8x128xf32>
    %13 = vector.broadcast %10 : vector<1x128xf32> to vector<8x128xf32>
    %14 = arith.addf %12, %13 : vector<8x128xf32>
    %cst_11 = arith.constant 0.000000e+00 : f32
    %15 = vector.broadcast %cst_11 : f32 to vector<8x128xf32>
    %16 = arith.maximumf %14, %15 : vector<8x128xf32>
    %c0_12 = arith.constant 0 : index
    %c0_13 = arith.constant 0 : index
    %17 = vector.load %arg6[%c0_12, %c0_13] : memref<128x512xbf16, #tpu.memory_space<vmem>>, vector<128x512xbf16>
    %c0_14 = arith.constant 0 : index
    %c0_15 = arith.constant 0 : index
    %18 = vector.load %arg7[%c0_14, %c0_15] : memref<1x512xf32, #tpu.memory_space<vmem>>, vector<1x512xf32>
    %19 = arith.truncf %16 : vector<8x128xf32> to vector<8x128xbf16>
    %cst_16 = arith.constant dense<0.000000e+00> : vector<8x512xf32>
    %20 = tpu.matmul %19, %17, %cst_16 {dimension_numbers = #tpu.dot_dimension_numbers<[1], [0], [0], [1], [0, 0, 1, 1], [], []>} : vector<8x128xbf16>, vector<128x512xbf16>, vector<8x512xf32> -> vector<8x512xf32>
    %21 = vector.broadcast %18 : vector<1x512xf32> to vector<8x512xf32>
    %22 = arith.addf %20, %21 : vector<8x512xf32>
    %cst_17 = arith.constant 0.000000e+00 : f32
    %23 = vector.broadcast %cst_17 : f32 to vector<8x512xf32>
    %24 = arith.maximumf %22, %23 : vector<8x512xf32>
    %c0_18 = arith.constant 0 : index
    %c0_19 = arith.constant 0 : index
    %25 = vector.load %arg8[%c0_18, %c0_19] : memref<512x1024xbf16, #tpu.memory_space<vmem>>, vector<512x1024xbf16>
    %c0_20 = arith.constant 0 : index
    %c0_21 = arith.constant 0 : index
    %26 = vector.load %arg9[%c0_20, %c0_21] : memref<1x1024xf32, #tpu.memory_space<vmem>>, vector<1x1024xf32>
    %27 = arith.truncf %24 : vector<8x512xf32> to vector<8x512xbf16>
    %cst_22 = arith.constant dense<0.000000e+00> : vector<8x1024xf32>
    %28 = tpu.matmul %27, %25, %cst_22 {dimension_numbers = #tpu.dot_dimension_numbers<[1], [0], [0], [1], [0, 0, 1, 1], [], []>} : vector<8x512xbf16>, vector<512x1024xbf16>, vector<8x1024xf32> -> vector<8x1024xf32>
    %29 = vector.broadcast %26 : vector<1x1024xf32> to vector<8x1024xf32>
    %30 = arith.addf %28, %29 : vector<8x1024xf32>
    %cst_23 = arith.constant 0.000000e+00 : f32
    %31 = vector.broadcast %cst_23 : f32 to vector<8x1024xf32>
    %32 = arith.maximumf %30, %31 : vector<8x1024xf32>
    %c0_24 = arith.constant 0 : index
    %c0_25 = arith.constant 0 : index
    %33 = vector.load %arg10[%c0_24, %c0_25] : memref<1024x896xbf16, #tpu.memory_space<vmem>>, vector<1024x896xbf16>
    %c0_26 = arith.constant 0 : index
    %c0_27 = arith.constant 0 : index
    %34 = vector.load %arg11[%c0_26, %c0_27] : memref<1x896xf32, #tpu.memory_space<vmem>>, vector<1x896xf32>
    %35 = arith.truncf %32 : vector<8x1024xf32> to vector<8x1024xbf16>
    %cst_28 = arith.constant dense<0.000000e+00> : vector<8x896xf32>
    %36 = tpu.matmul %35, %33, %cst_28 {dimension_numbers = #tpu.dot_dimension_numbers<[1], [0], [0], [1], [0, 0, 1, 1], [], []>} : vector<8x1024xbf16>, vector<1024x896xbf16>, vector<8x896xf32> -> vector<8x896xf32>
    %37 = vector.broadcast %34 : vector<1x896xf32> to vector<8x896xf32>
    %38 = arith.addf %36, %37 : vector<8x896xf32>
    %39 = arith.negf %38 : vector<8x896xf32>
    %40 = math.exp %39 : vector<8x896xf32>
    %cst_29 = arith.constant 1.000000e+00 : f32
    %41 = vector.broadcast %cst_29 : f32 to vector<8x896xf32>
    %42 = arith.addf %41, %40 : vector<8x896xf32>
    %43 = arith.divf %41, %42 : vector<8x896xf32>
    %c0_30 = arith.constant 0 : index
    %c0_31 = arith.constant 0 : index
    %44 = vector.load %arg12[%c0_30, %c0_31] : memref<8x896xf32, #tpu.memory_space<vmem>>, vector<8x896xf32>
    tpu.vector_store %arg12[%c0_30, %c0_31], %43 {strides = array<i32>} : memref<8x896xf32, #tpu.memory_space<vmem>>, vector<8x896xf32>,
    return
  }
  func.func @transform_0(%arg0: i32) -> (i32, i32) {
    %c0_i32 = arith.constant 0 : i32
    %c0_i32_0 = arith.constant 0 : i32
    return %arg0, %c0_i32 : i32, i32
  }
  func.func @transform_1(%arg0: i32) -> (i32, i32) {
    %c0_i32 = arith.constant 0 : i32
    %c0_i32_0 = arith.constant 0 : i32
    %c0_i32_1 = arith.constant 0 : i32
    return %c0_i32, %c0_i32_0 : i32, i32
  }
  func.func @transform_2(%arg0: i32) -> (i32, i32) {
    %c0_i32 = arith.constant 0 : i32
    %c0_i32_0 = arith.constant 0 : i32
    %c0_i32_1 = arith.constant 0 : i32
    return %c0_i32, %c0_i32_0 : i32, i32
  }
  func.func @transform_3(%arg0: i32) -> (i32, i32) {
    %c0_i32 = arith.constant 0 : i32
    %c0_i32_0 = arith.constant 0 : i32
    %c0_i32_1 = arith.constant 0 : i32
    return %c0_i32, %c0_i32_0 : i32, i32
  }
  func.func @transform_4(%arg0: i32) -> (i32, i32) {
    %c0_i32 = arith.constant 0 : i32
    %c0_i32_0 = arith.constant 0 : i32
    %c0_i32_1 = arith.constant 0 : i32
    return %c0_i32, %c0_i32_0 : i32, i32
  }
  func.func @transform_5(%arg0: i32) -> (i32, i32) {
    %c0_i32 = arith.constant 0 : i32
    %c0_i32_0 = arith.constant 0 : i32
    %c0_i32_1 = arith.constant 0 : i32
    return %c0_i32, %c0_i32_0 : i32, i32
  }
  func.func @transform_6(%arg0: i32) -> (i32, i32) {
    %c0_i32 = arith.constant 0 : i32
    %c0_i32_0 = arith.constant 0 : i32
    %c0_i32_1 = arith.constant 0 : i32
    return %c0_i32, %c0_i32_0 : i32, i32
  }
  func.func @transform_7(%arg0: i32) -> (i32, i32) {
    %c0_i32 = arith.constant 0 : i32
    %c0_i32_0 = arith.constant 0 : i32
    %c0_i32_1 = arith.constant 0 : i32
    return %c0_i32, %c0_i32_0 : i32, i32
  }
  func.func @transform_8(%arg0: i32) -> (i32, i32) {
    %c0_i32 = arith.constant 0 : i32
    %c0_i32_0 = arith.constant 0 : i32
    %c0_i32_1 = arith.constant 0 : i32
    return %c0_i32, %c0_i32_0 : i32, i32
  }
  func.func @transform_9(%arg0: i32) -> (i32, i32) {
    %c0_i32 = arith.constant 0 : i32
    %c0_i32_0 = arith.constant 0 : i32
    %c0_i32_1 = arith.constant 0 : i32
    return %c0_i32, %c0_i32_0 : i32, i32
  }
  func.func @transform_10(%arg0: i32) -> (i32, i32) {
    %c0_i32 = arith.constant 0 : i32
    %c0_i32_0 = arith.constant 0 : i32
    %c0_i32_1 = arith.constant 0 : i32
    return %c0_i32, %c0_i32_0 : i32, i32
  }
  func.func @transform_11(%arg0: i32) -> (i32, i32) {
    %c0_i32 = arith.constant 0 : i32
    %c0_i32_0 = arith.constant 0 : i32
    return %arg0, %c0_i32 : i32, i32
  }
}

</mosaic_0001>

<llo_original>
// kernel: _lambda_.1
$region0: #{_lambda_.1}
  #allocation0 [shape = 'u32[]', space=smem, size = 0x4, offset = 0x4, fixed_abs, tag = 'smem constant byte address 0x4 - core index']
  #allocation1 [shape = 'u32[72,128]{1,0:T(1,128)}', space=vmem, size = 0x9000, scoped, tag = 'internal scratch']
  %s0 = inlined_call_operand.vmem [shape: f32[8,128], index: 0, kind: input, shape index: {}]
  %s1 = inlined_call_operand.hbm [shape: bf16[128,128], index: 1, kind: input, shape index: {}]
  %s2 = inlined_call_operand.hbm [shape: f32[1,128], index: 2, kind: input, shape index: {}]
  %s3 = inlined_call_operand.hbm [shape: bf16[128,128], index: 3, kind: input, shape index: {}]
  %s4 = inlined_call_operand.hbm [shape: f32[1,128], index: 4, kind: input, shape index: {}]
  %s5 = inlined_call_operand.hbm [shape: bf16[128,512], index: 5, kind: input, shape index: {}]
  %s6 = inlined_call_operand.hbm [shape: f32[1,512], index: 6, kind: input, shape index: {}]
  %s7 = inlined_call_operand.hbm [shape: bf16[512,1024], index: 7, kind: input, shape index: {}]
  %s8 = inlined_call_operand.hbm [shape: f32[1,1024], index: 8, kind: input, shape index: {}]
  %s9 = inlined_call_operand.hbm [shape: bf16[1024,896], index: 9, kind: input, shape index: {}]
  %s10 = inlined_call_operand.hbm [shape: f32[1,896], index: 10, kind: input, shape index: {}]
  %s11 = inlined_call_operand.hbm [shape: f32[8,896], index: 11, kind: output, shape index: {}]
  %s12 = sld [smem:[#allocation0]]
  $region94: #{_lambda_.1} parent=0
    _
  %s14 = ssub.s32 1, %s12
  %s15 = scalar_select 0, %s14, %s12
  $region1: #{_lambda_.1} parent=0
    #allocation2 [shape = 'u8[32768]{0}', space=vmem, size = 0x8000, scoped, tag = 'input window, operand 1, single buffered']
    #allocation3 [shape = 's32[1]{0}', space=sflag, size = 0x4, scoped, tag = 'scoped memory for _lambda_.1']
    #allocation4 [shape = 's32[1]{0}', space=sflag, size = 0x4, scoped, tag = 'scoped memory for _lambda_.1']
    #allocation5 [shape = 'u8[512]{0}', space=vmem, size = 0x400, scoped, tag = 'input window, operand 2, single buffered']
    #allocation6 [shape = 's32[1]{0}', space=sflag, size = 0x4, scoped, tag = 'scoped memory for _lambda_.1']
    #allocation7 [shape = 'u8[32768]{0}', space=vmem, size = 0x8000, scoped, tag = 'input window, operand 3, single buffered']
    #allocation8 [shape = 'u8[512]{0}', space=vmem, size = 0x400, scoped, tag = 'input window, operand 4, single buffered']
    #allocation9 [shape = 's32[1]{0}', space=sflag, size = 0x4, scoped, tag = 'scoped memory for _lambda_.1']
    #allocation10 [shape = 'u8[131072]{0}', space=vmem, size = 0x20000, scoped, tag = 'input window, operand 5, single buffered']
    #allocation11 [shape = 'u8[2048]{0}', space=vmem, size = 0x800, scoped, tag = 'input window, operand 6, single buffered']
    #allocation12 [shape = 's32[1]{0}', space=sflag, size = 0x4, scoped, tag = 'scoped memory for _lambda_.1']
    #allocation13 [shape = 'u8[1048576]{0}', space=vmem, size = 0x100000, scoped, tag = 'input window, operand 7, single buffered']
    #allocation14 [shape = 'u8[4096]{0}', space=vmem, size = 0x1000, scoped, tag = 'input window, operand 8, single buffered']
    #allocation15 [shape = 's32[1]{0}', space=sflag, size = 0x4, scoped, tag = 'scoped memory for _lambda_.1']
    #allocation16 [shape = 'u8[1835008]{0}', space=vmem, size = 0x1c0000, scoped, tag = 'input window, operand 9, single buffered']
    #allocation17 [shape = 'u8[3584]{0}', space=vmem, size = 0x1000, scoped, tag = 'input window, operand 10, single buffered']
    #allocation18 [shape = 's32[1]{0}', space=sflag, size = 0x4, scoped, tag = 'scoped memory for _lambda_.1']
    #allocation19 [shape = 'u8[28672]{0}', space=vmem, size = 0x7000, scoped, tag = 'output window, operand 0, single buffered']
    %16 = vsyncpa [#allocation3], 0
    %17 = vsyncpa [#allocation6], 0
    %18 = vsyncpa [#allocation9], 0
    %19 = vsyncpa [#allocation12], 0
    %20 = vsyncpa [#allocation15], 0
    %21 = vsyncpa [#allocation18], 0
    %22 = vsyncpa [#allocation4], 0
    // Predicated region
    $region2: #{_lambda_.1} parent=1 // pred_check
      _
    $region3: #{_lambda_.1} parent=1 // pred_check_branch
      %24 = sbr.rel (0) target = $region5
    $region4: #{_lambda_.1} parent=1 // pred_region
      _
    $region5: #{_lambda_.1} parent=1 // pred_fallthru
      _
    // Predicated region
    $region6: #{_lambda_.1} parent=1 // pred_check
      _
    $region7: #{_lambda_.1} parent=1 // pred_check_branch
      %26 = sbr.rel (0) target = $region9
    $region8: #{_lambda_.1} parent=1 // pred_region
      %28 = vsyncadd [#allocation3], 0
      %s29 = sshll.u32 %s1, 4
      %s30 = int_to_ptr.hbm [resolvable:$true] %s29
      %s31 = sshll.u32 [#allocation2], 4
      %s32 = int_to_ptr.vmem [resolvable:$true] %s31
      %37 = dma.hbm_to_vmem [thread:$0]  %s30, 1024, %s32, [#allocation3], 64, 64, 4
    $region9: #{_lambda_.1} parent=1 // pred_fallthru
      _
    // Predicated region
    $region10: #{_lambda_.1} parent=1 // pred_check
      _
    $region11: #{_lambda_.1} parent=1 // pred_check_branch
      %39 = sbr.rel (0) target = $region13
    $region12: #{_lambda_.1} parent=1 // pred_region
      %41 = vsyncadd [#allocation6], 0
      %s43 = sshll.u32 %s2, 4
      %s44 = int_to_ptr.hbm [resolvable:$true] %s43
      %s45 = sshll.u32 [#allocation5], 4
      %s46 = int_to_ptr.vmem [resolvable:$true] %s45
      %48 = dma.hbm_to_vmem [thread:$0]  %s44, 16, %s46, [#allocation6]
    $region13: #{_lambda_.1} parent=1 // pred_fallthru
      _
    // Predicated region
    $region14: #{_lambda_.1} parent=1 // pred_check
      _
    $region15: #{_lambda_.1} parent=1 // pred_check_branch
      %50 = sbr.rel (0) target = $region17
    $region16: #{_lambda_.1} parent=1 // pred_region
      %52 = vsyncadd [#allocation6], 0
      %s53 = sshll.u32 %s3, 4
      %s54 = int_to_ptr.hbm [resolvable:$true] %s53
      %s55 = sshll.u32 [#allocation7], 4
      %s56 = int_to_ptr.vmem [resolvable:$true] %s55
      %61 = dma.hbm_to_vmem [thread:$0]  %s54, 1024, %s56, [#allocation6], 64, 64, 4
    $region17: #{_lambda_.1} parent=1 // pred_fallthru
      _
    // Predicated region
    $region18: #{_lambda_.1} parent=1 // pred_check
      _
    $region19: #{_lambda_.1} parent=1 // pred_check_branch
      %63 = sbr.rel (0) target = $region21
    $region20: #{_lambda_.1} parent=1 // pred_region
      %65 = vsyncadd [#allocation9], 0
      %s67 = sshll.u32 %s4, 4
      %s68 = int_to_ptr.hbm [resolvable:$true] %s67
      %s69 = sshll.u32 [#allocation8], 4
      %s70 = int_to_ptr.vmem [resolvable:$true] %s69
      %72 = dma.hbm_to_vmem [thread:$0]  %s68, 16, %s70, [#allocation9]
    $region21: #{_lambda_.1} parent=1 // pred_fallthru
      _
    // Predicated region
    $region22: #{_lambda_.1} parent=1 // pred_check
      _
    $region23: #{_lambda_.1} parent=1 // pred_check_branch
      %74 = sbr.rel (0) target = $region25
    $region24: #{_lambda_.1} parent=1 // pred_region
      %76 = vsyncadd [#allocation9], 0
      %s77 = sshll.u32 %s5, 4
      %s78 = int_to_ptr.hbm [resolvable:$true] %s77
      %s79 = sshll.u32 [#allocation10], 4
      %s80 = int_to_ptr.vmem [resolvable:$true] %s79
      %85 = dma.hbm_to_vmem [thread:$0]  %s78, 4096, %s80, [#allocation9], 256, 256, 16
    $region25: #{_lambda_.1} parent=1 // pred_fallthru
      _
    // Predicated region
    $region26: #{_lambda_.1} parent=1 // pred_check
      _
    $region27: #{_lambda_.1} parent=1 // pred_check_branch
      %87 = sbr.rel (0) target = $region29
    $region28: #{_lambda_.1} parent=1 // pred_region
      %89 = vsyncadd [#allocation12], 0
      %s91 = sshll.u32 %s6, 4
      %s92 = int_to_ptr.hbm [resolvable:$true] %s91
      %s93 = sshll.u32 [#allocation11], 4
      %s94 = int_to_ptr.vmem [resolvable:$true] %s93
      %96 = dma.hbm_to_vmem [thread:$0]  %s92, 64, %s94, [#allocation12]
    $region29: #{_lambda_.1} parent=1 // pred_fallthru
      _
    // Predicated region
    $region30: #{_lambda_.1} parent=1 // pred_check
      _
    $region31: #{_lambda_.1} parent=1 // pred_check_branch
      %98 = sbr.rel (0) target = $region33
    $region32: #{_lambda_.1} parent=1 // pred_region
      %100 = vsyncadd [#allocation12], 0
      %s101 = sshll.u32 %s7, 4
      %s102 = int_to_ptr.hbm [resolvable:$true] %s101
      %s103 = sshll.u32 [#allocation13], 4
      %s104 = int_to_ptr.vmem [resolvable:$true] %s103
      %109 = dma.hbm_to_vmem [thread:$0]  %s102, 32768, %s104, [#allocation12], 512, 512, 32
    $region33: #{_lambda_.1} parent=1 // pred_fallthru
      _
    // Predicated region
    $region34: #{_lambda_.1} parent=1 // pred_check
      _
    $region35: #{_lambda_.1} parent=1 // pred_check_branch
      %111 = sbr.rel (0) target = $region37
    $region36: #{_lambda_.1} parent=1 // pred_region
      %113 = vsyncadd [#allocation15], 0
      %s115 = sshll.u32 %s8, 4
      %s116 = int_to_ptr.hbm [resolvable:$true] %s115
      %s117 = sshll.u32 [#allocation14], 4
      %s118 = int_to_ptr.vmem [resolvable:$true] %s117
      %120 = dma.hbm_to_vmem [thread:$0]  %s116, 128, %s118, [#allocation15]
    $region37: #{_lambda_.1} parent=1 // pred_fallthru
      _
    // Predicated region
    $region38: #{_lambda_.1} parent=1 // pred_check
      _
    $region39: #{_lambda_.1} parent=1 // pred_check_branch
      %122 = sbr.rel (0) target = $region41
    $region40: #{_lambda_.1} parent=1 // pred_region
      %124 = vsyncadd [#allocation15], 0
      %s125 = sshll.u32 %s9, 4
      %s126 = int_to_ptr.hbm [resolvable:$true] %s125
      %s127 = sshll.u32 [#allocation16], 4
      %s128 = int_to_ptr.vmem [resolvable:$true] %s127
      %133 = dma.hbm_to_vmem [thread:$0]  %s126, 57344, %s128, [#allocation15], 448, 448, 28
    $region41: #{_lambda_.1} parent=1 // pred_fallthru
      _
    // Predicated region
    $region42: #{_lambda_.1} parent=1 // pred_check
      _
    $region43: #{_lambda_.1} parent=1 // pred_check_branch
      %135 = sbr.rel (0) target = $region45
    $region44: #{_lambda_.1} parent=1 // pred_region
      %137 = vsyncadd [#allocation18], 0
      %s139 = sshll.u32 %s10, 4
      %s140 = int_to_ptr.hbm [resolvable:$true] %s139
      %s141 = sshll.u32 [#allocation17], 4
      %s142 = int_to_ptr.vmem [resolvable:$true] %s141
      %144 = dma.hbm_to_vmem [thread:$0]  %s140, 112, %s142, [#allocation18]
    $region45: #{_lambda_.1} parent=1 // pred_fallthru
      _
    // Predicated region
    $region46: #{_lambda_.1} parent=1 // pred_check
      _
    $region47: #{_lambda_.1} parent=1 // pred_check_branch
      %146 = sbr.rel (0) target = $region49
    $region48: #{_lambda_.1} parent=1 // pred_region
      %148 = dma.done [#allocation3], 1024
    $region49: #{_lambda_.1} parent=1 // pred_fallthru
      _
    // Predicated region
    $region50: #{_lambda_.1} parent=1 // pred_check
      _
    $region51: #{_lambda_.1} parent=1 // pred_check_branch
      %150 = sbr.rel (0) target = $region53
    $region52: #{_lambda_.1} parent=1 // pred_region
      %152 = dma.done [#allocation6], 16
    $region53: #{_lambda_.1} parent=1 // pred_fallthru
      _
    // Predicated region
    $region54: #{_lambda_.1} parent=1 // pred_check
      _
    $region55: #{_lambda_.1} parent=1 // pred_check_branch
      %154 = sbr.rel (0) target = $region57
    $region56: #{_lambda_.1} parent=1 // pred_region
      %156 = dma.done [#allocation6], 1024
    $region57: #{_lambda_.1} parent=1 // pred_fallthru
      _
    // Predicated region
    $region58: #{_lambda_.1} parent=1 // pred_check
      _
    $region59: #{_lambda_.1} parent=1 // pred_check_branch
      %158 = sbr.rel (0) target = $region61
    $region60: #{_lambda_.1} parent=1 // pred_region
      %160 = dma.done [#allocation9], 16
    $region61: #{_lambda_.1} parent=1 // pred_fallthru
      _
    // Predicated region
    $region62: #{_lambda_.1} parent=1 // pred_check
      _
    $region63: #{_lambda_.1} parent=1 // pred_check_branch
      %162 = sbr.rel (0) target = $region65
    $region64: #{_lambda_.1} parent=1 // pred_region
      %164 = dma.done [#allocation9], 4096
    $region65: #{_lambda_.1} parent=1 // pred_fallthru
      _
    // Predicated region
    $region66: #{_lambda_.1} parent=1 // pred_check
      _
    $region67: #{_lambda_.1} parent=1 // pred_check_branch
      %166 = sbr.rel (0) target = $region69
    $region68: #{_lambda_.1} parent=1 // pred_region
      %168 = dma.done [#allocation12], 64
    $region69: #{_lambda_.1} parent=1 // pred_fallthru
      _
    // Predicated region
    $region70: #{_lambda_.1} parent=1 // pred_check
      _
    $region71: #{_lambda_.1} parent=1 // pred_check_branch
      %170 = sbr.rel (0) target = $region73
    $region72: #{_lambda_.1} parent=1 // pred_region
      %172 = dma.done [#allocation12], 32768
    $region73: #{_lambda_.1} parent=1 // pred_fallthru
      _
    // Predicated region
    $region74: #{_lambda_.1} parent=1 // pred_check
      _
    $region75: #{_lambda_.1} parent=1 // pred_check_branch
      %174 = sbr.rel (0) target = $region77
    $region76: #{_lambda_.1} parent=1 // pred_region
      %176 = dma.done [#allocation15], 128
    $region77: #{_lambda_.1} parent=1 // pred_fallthru
      _
    // Predicated region
    $region78: #{_lambda_.1} parent=1 // pred_check
      _
    $region79: #{_lambda_.1} parent=1 // pred_check_branch
      %178 = sbr.rel (0) target = $region81
    $region80: #{_lambda_.1} parent=1 // pred_region
      %180 = dma.done [#allocation15], 57344
    $region81: #{_lambda_.1} parent=1 // pred_fallthru
      _
    // Predicated region
    $region82: #{_lambda_.1} parent=1 // pred_check
      _
    $region83: #{_lambda_.1} parent=1 // pred_check_branch
      %182 = sbr.rel (0) target = $region85
    $region84: #{_lambda_.1} parent=1 // pred_region
      %184 = dma.done [#allocation18], 112
    $region85: #{_lambda_.1} parent=1 // pred_fallthru
      _
    %v185 = vld [vmem:[%s0] sm:$0xff]
    %v186 = vld [vmem:[#allocation2] sm:$0xf]
    %v187 = vld [vmem:[#allocation2 + $0x4] sm:$0xf]
    %v188 = vld [vmem:[#allocation2 + $0x8] sm:$0xf]
    %v189 = vld [vmem:[#allocation2 + $0xc] sm:$0xf]
    %v190 = vld [vmem:[#allocation2 + $0x10] sm:$0xf]
    %v191 = vld [vmem:[#allocation2 + $0x14] sm:$0xf]
    %v192 = vld [vmem:[#allocation2 + $0x18] sm:$0xf]
    %v193 = vld [vmem:[#allocation2 + $0x1c] sm:$0xf]
    %v194 = vld [vmem:[#allocation2 + $0x20] sm:$0xf]
    %v195 = vld [vmem:[#allocation2 + $0x24] sm:$0xf]
    %v196 = vld [vmem:[#allocation2 + $0x28] sm:$0xf]
    %v197 = vld [vmem:[#allocation2 + $0x2c] sm:$0xf]
    %v198 = vld [vmem:[#allocation2 + $0x30] sm:$0xf]
    %v199 = vld [vmem:[#allocation2 + $0x34] sm:$0xf]
    %v200 = vld [vmem:[#allocation2 + $0x38] sm:$0xf]
    %v201 = vld [vmem:[#allocation2 + $0x3c] sm:$0xf]
    %v202 = vld [vmem:[#allocation5] sm:$0x1]
    %v203 = vpack.c.bf16 %v185, %v185
    %v205 = vperm.slane %v202, 0
    %v223 = vunpack.c.l.b16 %v186
    %v224 = vunpack.c.l.b16 %v187
    %v225 = vunpack.c.l.b16 %v188
    %v226 = vunpack.c.l.b16 %v189
    %v227 = vunpack.c.l.b16 %v190
    %v228 = vunpack.c.l.b16 %v191
    %v229 = vunpack.c.l.b16 %v192
    %v230 = vunpack.c.l.b16 %v193
    %v231 = vunpack.c.l.b16 %v194
    %v232 = vunpack.c.l.b16 %v195
    %v233 = vunpack.c.l.b16 %v196
    %v234 = vunpack.c.l.b16 %v197
    %v235 = vunpack.c.l.b16 %v198
    %v236 = vunpack.c.l.b16 %v199
    %v237 = vunpack.c.l.b16 %v200
    %v238 = vunpack.c.l.b16 %v201
    %v239 = vpack.c.b16 %v224, %v223
    %v240 = vpack.c.b16 %v226, %v225
    %v241 = vpack.c.b16 %v228, %v227
    %v242 = vpack.c.b16 %v230, %v229
    %v243 = vpack.c.b16 %v232, %v231
    %v244 = vpack.c.b16 %v234, %v233
    %v245 = vpack.c.b16 %v236, %v235
    %v246 = vpack.c.b16 %v238, %v237
    %255 = vmatpush.bf16.msra.mxu0 %v246
    %256 = vmatpush.bf16.msra.mxu0 %v245
    %257 = vmatpush.bf16.msra.mxu0 %v244
    %258 = vmatpush.bf16.msra.mxu0 %v243
    %259 = vmatpush.bf16.msra.mxu0 %v242
    %260 = vmatpush.bf16.msra.mxu0 %v241
    %261 = vmatpush.bf16.msra.mxu0 %v240
    %262 = vmatpush.bf16.msra.mxu0 %v239
    %263 = vmatmul.bf16.gmra.mxu0 %v203
    %v264 = vpop.f32.mrf.mxu0
    %v265 = vadd.f32 %v205, %v264
    %v266 = vpop.f32.mrf.mxu0
    %267 = vdwg.mxu0
    %v268 = vmax.f32 %v265, 0.0
    %v269 = vld [vmem:[#allocation7] sm:$0xf]
    %v270 = vld [vmem:[#allocation7 + $0x4] sm:$0xf]
    %v271 = vld [vmem:[#allocation7 + $0x8] sm:$0xf]
    %v272 = vld [vmem:[#allocation7 + $0xc] sm:$0xf]
    %v273 = vld [vmem:[#allocation7 + $0x10] sm:$0xf]
    %v274 = vld [vmem:[#allocation7 + $0x14] sm:$0xf]
    %v275 = vld [vmem:[#allocation7 + $0x18] sm:$0xf]
    %v276 = vld [vmem:[#allocation7 + $0x1c] sm:$0xf]
    %v277 = vld [vmem:[#allocation7 + $0x20] sm:$0xf]
    %v278 = vld [vmem:[#allocation7 + $0x24] sm:$0xf]
    %v279 = vld [vmem:[#allocation7 + $0x28] sm:$0xf]
    %v280 = vld [vmem:[#allocation7 + $0x2c] sm:$0xf]
    %v281 = vld [vmem:[#allocation7 + $0x30] sm:$0xf]
    %v282 = vld [vmem:[#allocation7 + $0x34] sm:$0xf]
    %v283 = vld [vmem:[#allocation7 + $0x38] sm:$0xf]
    %v284 = vld [vmem:[#allocation7 + $0x3c] sm:$0xf]
    %v285 = vld [vmem:[#allocation8] sm:$0x1]
    %v286 = vpack.c.bf16 %v268, %v268
    %v288 = vperm.slane %v285, 0
    %v306 = vunpack.c.l.b16 %v269
    %v307 = vunpack.c.l.b16 %v270
    %v308 = vunpack.c.l.b16 %v271
    %v309 = vunpack.c.l.b16 %v272
    %v310 = vunpack.c.l.b16 %v273
    %v311 = vunpack.c.l.b16 %v274
    %v312 = vunpack.c.l.b16 %v275
    %v313 = vunpack.c.l.b16 %v276
    %v314 = vunpack.c.l.b16 %v277
    %v315 = vunpack.c.l.b16 %v278
    %v316 = vunpack.c.l.b16 %v279
    %v317 = vunpack.c.l.b16 %v280
    %v318 = vunpack.c.l.b16 %v281
    %v319 = vunpack.c.l.b16 %v282
    %v320 = vunpack.c.l.b16 %v283
    %v321 = vunpack.c.l.b16 %v284
    %v322 = vpack.c.b16 %v307, %v306
    %v323 = vpack.c.b16 %v309, %v308
    %v324 = vpack.c.b16 %v311, %v310
    %v325 = vpack.c.b16 %v313, %v312
    %v326 = vpack.c.b16 %v315, %v314
    %v327 = vpack.c.b16 %v317, %v316
    %v328 = vpack.c.b16 %v319, %v318
    %v329 = vpack.c.b16 %v321, %v320
    %338 = vmatpush.bf16.msra.mxu0 %v329
    %339 = vmatpush.bf16.msra.mxu0 %v328
    %340 = vmatpush.bf16.msra.mxu0 %v327
    %341 = vmatpush.bf16.msra.mxu0 %v326
    %342 = vmatpush.bf16.msra.mxu0 %v325
    %343 = vmatpush.bf16.msra.mxu0 %v324
    %344 = vmatpush.bf16.msra.mxu0 %v323
    %345 = vmatpush.bf16.msra.mxu0 %v322
    %346 = vmatmul.bf16.gmra.mxu0 %v286
    %v347 = vpop.f32.mrf.mxu0
    %v348 = vadd.f32 %v288, %v347
    %v349 = vpop.f32.mrf.mxu0
    %350 = vdwg.mxu0
    %v351 = vmax.f32 %v348, 0.0
    %v352 = vld [vmem:[#allocation10] sm:$0xff]
    %v353 = vld [vmem:[#allocation10 + $0x8] sm:$0xff]
    %v354 = vld [vmem:[#allocation10 + $0x10] sm:$0xff]
    %v355 = vld [vmem:[#allocation10 + $0x18] sm:$0xff]
    %v356 = vld [vmem:[#allocation10 + $0x20] sm:$0xff]
    %v357 = vld [vmem:[#allocation10 + $0x28] sm:$0xff]
    %v358 = vld [vmem:[#allocation10 + $0x30] sm:$0xff]
    %v359 = vld [vmem:[#allocation10 + $0x38] sm:$0xff]
    %v360 = vld [vmem:[#allocation10 + $0x40] sm:$0xff]
    %v361 = vld [vmem:[#allocation10 + $0x48] sm:$0xff]
    %v362 = vld [vmem:[#allocation10 + $0x50] sm:$0xff]
    %v363 = vld [vmem:[#allocation10 + $0x58] sm:$0xff]
    %v364 = vld [vmem:[#allocation10 + $0x60] sm:$0xff]
    %v365 = vld [vmem:[#allocation10 + $0x68] sm:$0xff]
    %v366 = vld [vmem:[#allocation10 + $0x70] sm:$0xff]
    %v367 = vld [vmem:[#allocation10 + $0x78] sm:$0xff]
    %v368 = vld [vmem:[#allocation10 + $0x80] sm:$0xff]
    %v369 = vld [vmem:[#allocation10 + $0x88] sm:$0xff]
    %v370 = vld [vmem:[#allocation10 + $0x90] sm:$0xff]
    %v371 = vld [vmem:[#allocation10 + $0x98] sm:$0xff]
    %v372 = vld [vmem:[#allocation10 + $0xa0] sm:$0xff]
    %v373 = vld [vmem:[#allocation10 + $0xa8] sm:$0xff]
    %v374 = vld [vmem:[#allocation10 + $0xb0] sm:$0xff]
    %v375 = vld [vmem:[#allocation10 + $0xb8] sm:$0xff]
    %v376 = vld [vmem:[#allocation10 + $0xc0] sm:$0xff]
    %v377 = vld [vmem:[#allocation10 + $0xc8] sm:$0xff]
    %v378 = vld [vmem:[#allocation10 + $0xd0] sm:$0xff]
    %v379 = vld [vmem:[#allocation10 + $0xd8] sm:$0xff]
    %v380 = vld [vmem:[#allocation10 + $0xe0] sm:$0xff]
    %v381 = vld [vmem:[#allocation10 + $0xe8] sm:$0xff]
    %v382 = vld [vmem:[#allocation10 + $0xf0] sm:$0xff]
    %v383 = vld [vmem:[#allocation10 + $0xf8] sm:$0xff]
    %v384 = vld [vmem:[#allocation11] sm:$0xf]
    %v385 = vpack.c.bf16 %v351, %v351
    %v387 = vperm.slane %v384, 0
    %v388 = vperm.slane %v384, 1
    %v389 = vperm.slane %v384, 2
    %v390 = vperm.slane %v384, 3
    %v427 = vunpack.c.l.b16 %v352
    %v428 = vunpack.c.h.b16 %v352
    %v429 = vunpack.c.l.b16 %v353
    %v430 = vunpack.c.h.b16 %v353
    %v431 = vunpack.c.l.b16 %v354
    %v432 = vunpack.c.h.b16 %v354
    %v433 = vunpack.c.l.b16 %v355
    %v434 = vunpack.c.h.b16 %v355
    %v435 = vunpack.c.l.b16 %v356
    %v436 = vunpack.c.h.b16 %v356
    %v437 = vunpack.c.l.b16 %v357
    %v438 = vunpack.c.h.b16 %v357
    %v439 = vunpack.c.l.b16 %v358
    %v440 = vunpack.c.h.b16 %v358
    %v441 = vunpack.c.l.b16 %v359
    %v442 = vunpack.c.h.b16 %v359
    %v443 = vunpack.c.l.b16 %v360
    %v444 = vunpack.c.h.b16 %v360
    %v445 = vunpack.c.l.b16 %v361
    %v446 = vunpack.c.h.b16 %v361
    %v447 = vunpack.c.l.b16 %v362
    %v448 = vunpack.c.h.b16 %v362
    %v449 = vunpack.c.l.b16 %v363
    %v450 = vunpack.c.h.b16 %v363
    %v451 = vunpack.c.l.b16 %v364
    %v452 = vunpack.c.h.b16 %v364
    %v453 = vunpack.c.l.b16 %v365
    %v454 = vunpack.c.h.b16 %v365
    %v455 = vunpack.c.l.b16 %v366
    %v456 = vunpack.c.h.b16 %v366
    %v457 = vunpack.c.l.b16 %v367
    %v458 = vunpack.c.h.b16 %v367
    %v459 = vunpack.c.l.b16 %v368
    %v460 = vunpack.c.h.b16 %v368
    %v461 = vunpack.c.l.b16 %v369
    %v462 = vunpack.c.h.b16 %v369
    %v463 = vunpack.c.l.b16 %v370
    %v464 = vunpack.c.h.b16 %v370
    %v465 = vunpack.c.l.b16 %v371
    %v466 = vunpack.c.h.b16 %v371
    %v467 = vunpack.c.l.b16 %v372
    %v468 = vunpack.c.h.b16 %v372
    %v469 = vunpack.c.l.b16 %v373
    %v470 = vunpack.c.h.b16 %v373
    %v471 = vunpack.c.l.b16 %v374
    %v472 = vunpack.c.h.b16 %v374
    %v473 = vunpack.c.l.b16 %v375
    %v474 = vunpack.c.h.b16 %v375
    %v475 = vunpack.c.l.b16 %v376
    %v476 = vunpack.c.h.b16 %v376
    %v477 = vunpack.c.l.b16 %v377
    %v478 = vunpack.c.h.b16 %v377
    %v479 = vunpack.c.l.b16 %v378
    %v480 = vunpack.c.h.b16 %v378
    %v481 = vunpack.c.l.b16 %v379
    %v482 = vunpack.c.h.b16 %v379
    %v483 = vunpack.c.l.b16 %v380
    %v484 = vunpack.c.h.b16 %v380
    %v485 = vunpack.c.l.b16 %v381
    %v486 = vunpack.c.h.b16 %v381
    %v487 = vunpack.c.l.b16 %v382
    %v488 = vunpack.c.h.b16 %v382
    %v489 = vunpack.c.l.b16 %v383
    %v490 = vunpack.c.h.b16 %v383
    %v491 = vpack.c.b16 %v431, %v427
    %v492 = vpack.c.b16 %v432, %v428
    %v493 = vpack.c.b16 %v433, %v429
    %v494 = vpack.c.b16 %v434, %v430
    %v495 = vpack.c.b16 %v439, %v435
    %v496 = vpack.c.b16 %v440, %v436
    %v497 = vpack.c.b16 %v441, %v437
    %v498 = vpack.c.b16 %v442, %v438
    %v499 = vpack.c.b16 %v447, %v443
    %v500 = vpack.c.b16 %v448, %v444
    %v501 = vpack.c.b16 %v449, %v445
    %v502 = vpack.c.b16 %v450, %v446
    %v503 = vpack.c.b16 %v455, %v451
    %v504 = vpack.c.b16 %v456, %v452
    %v505 = vpack.c.b16 %v457, %v453
    %v506 = vpack.c.b16 %v458, %v454
    %v507 = vpack.c.b16 %v463, %v459
    %v508 = vpack.c.b16 %v464, %v460
    %v509 = vpack.c.b16 %v465, %v461
    %v510 = vpack.c.b16 %v466, %v462
    %v511 = vpack.c.b16 %v471, %v467
    %v512 = vpack.c.b16 %v472, %v468
    %v513 = vpack.c.b16 %v473, %v469
    %v514 = vpack.c.b16 %v474, %v470
    %v515 = vpack.c.b16 %v479, %v475
    %v516 = vpack.c.b16 %v480, %v476
    %v517 = vpack.c.b16 %v481, %v477
    %v518 = vpack.c.b16 %v482, %v478
    %v519 = vpack.c.b16 %v487, %v483
    %v520 = vpack.c.b16 %v488, %v484
    %v521 = vpack.c.b16 %v489, %v485
    %v522 = vpack.c.b16 %v490, %v486
    %555 = vmatpush.bf16.msra.mxu0 %v519
    %556 = vmatpush.bf16.msra.mxu0 %v515
    %557 = vmatpush.bf16.msra.mxu0 %v511
    %558 = vmatpush.bf16.msra.mxu0 %v507
    %559 = vmatpush.bf16.msra.mxu0 %v503
    %560 = vmatpush.bf16.msra.mxu0 %v499
    %561 = vmatpush.bf16.msra.mxu0 %v495
    %562 = vmatpush.bf16.msra.mxu0 %v491
    %563 = vmatmul.bf16.gmra.mxu0 %v385
    %v564 = vpop.f32.mrf.mxu0
    %v565 = vadd.f32 %v387, %v564
    %v566 = vpop.f32.mrf.mxu0
    %567 = vdwg.mxu0
    %568 = vmatpush.bf16.msra.mxu0 %v520
    %569 = vmatpush.bf16.msra.mxu0 %v516
    %570 = vmatpush.bf16.msra.mxu0 %v512
    %571 = vmatpush.bf16.msra.mxu0 %v508
    %572 = vmatpush.bf16.msra.mxu0 %v504
    %573 = vmatpush.bf16.msra.mxu0 %v500
    %574 = vmatpush.bf16.msra.mxu0 %v496
    %575 = vmatpush.bf16.msra.mxu0 %v492
    %576 = vmatmul.bf16.gmra.mxu0 %v385
    %v577 = vpop.f32.mrf.mxu0
    %v578 = vadd.f32 %v388, %v577
    %v579 = vpop.f32.mrf.mxu0
    %580 = vdwg.mxu0
    %581 = vmatpush.bf16.msra.mxu0 %v521
    %582 = vmatpush.bf16.msra.mxu0 %v517
    %583 = vmatpush.bf16.msra.mxu0 %v513
    %584 = vmatpush.bf16.msra.mxu0 %v509
    %585 = vmatpush.bf16.msra.mxu0 %v505
    %586 = vmatpush.bf16.msra.mxu0 %v501
    %587 = vmatpush.bf16.msra.mxu0 %v497
    %588 = vmatpush.bf16.msra.mxu0 %v493
    %589 = vmatmul.bf16.gmra.mxu0 %v385
    %v590 = vpop.f32.mrf.mxu0
    %v591 = vadd.f32 %v389, %v590
    %v592 = vpop.f32.mrf.mxu0
    %593 = vdwg.mxu0
    %594 = vmatpush.bf16.msra.mxu0 %v522
    %595 = vmatpush.bf16.msra.mxu0 %v518
    %596 = vmatpush.bf16.msra.mxu0 %v514
    %597 = vmatpush.bf16.msra.mxu0 %v510
    %598 = vmatpush.bf16.msra.mxu0 %v506
    %599 = vmatpush.bf16.msra.mxu0 %v502
    %600 = vmatpush.bf16.msra.mxu0 %v498
    %601 = vmatpush.bf16.msra.mxu0 %v494
    %602 = vmatmul.bf16.gmra.mxu0 %v385
    %v603 = vpop.f32.mrf.mxu0
    %v604 = vadd.f32 %v390, %v603
    %v605 = vpop.f32.mrf.mxu0
    %606 = vdwg.mxu0
    %v607 = vmax.f32 %v565, 0.0
    %v608 = vmax.f32 %v578, 0.0
    %v609 = vmax.f32 %v591, 0.0
    %v610 = vmax.f32 %v604, 0.0
    %v611 = vld [vmem:[#allocation13] sm:$0xff]
    %v612 = vld [vmem:[#allocation13 + $0x8] sm:$0xff]
    %v613 = vld [vmem:[#allocation13 + $0x10] sm:$0xff]
    %v614 = vld [vmem:[#allocation13 + $0x18] sm:$0xff]
    %v615 = vld [vmem:[#allocation13 + $0x20] sm:$0xff]
    %v616 = vld [vmem:[#allocation13 + $0x28] sm:$0xff]
    %v617 = vld [vmem:[#allocation13 + $0x30] sm:$0xff]
    %v618 = vld [vmem:[#allocation13 + $0x38] sm:$0xff]
    %v619 = vld [vmem:[#allocation13 + $0x40] sm:$0xff]
    %v620 = vld [vmem:[#allocation13 + $0x48] sm:$0xff]
    %v621 = vld [vmem:[#allocation13 + $0x50] sm:$0xff]
    %v622 = vld [vmem:[#allocation13 + $0x58] sm:$0xff]
    %v623 = vld [vmem:[#allocation13 + $0x60] sm:$0xff]
    %v624 = vld [vmem:[#allocation13 + $0x68] sm:$0xff]
    %v625 = vld [vmem:[#allocation13 + $0x70] sm:$0xff]
    %v626 = vld [vmem:[#allocation13 + $0x78] sm:$0xff]
    %v627 = vld [vmem:[#allocation13 + $0x80] sm:$0xff]
    %v628 = vld [vmem:[#allocation13 + $0x88] sm:$0xff]
    %v629 = vld [vmem:[#allocation13 + $0x90] sm:$0xff]
    %v630 = vld [vmem:[#allocation13 + $0x98] sm:$0xff]
    %v631 = vld [vmem:[#allocation13 + $0xa0] sm:$0xff]
    %v632 = vld [vmem:[#allocation13 + $0xa8] sm:$0xff]
    %v633 = vld [vmem:[#allocation13 + $0xb0] sm:$0xff]
    %v634 = vld [vmem:[#allocation13 + $0xb8] sm:$0xff]
    %v635 = vld [vmem:[#allocation13 + $0xc0] sm:$0xff]
    %v636 = vld [vmem:[#allocation13 + $0xc8] sm:$0xff]
    %v637 = vld [vmem:[#allocation13 + $0xd0] sm:$0xff]
    %v638 = vld [vmem:[#allocation13 + $0xd8] sm:$0xff]
    %v639 = vld [vmem:[#allocation13 + $0xe0] sm:$0xff]
    %v640 = vld [vmem:[#allocation13 + $0xe8] sm:$0xff]
    %v641 = vld [vmem:[#allocation13 + $0xf0] sm:$0xff]
    %v642 = vld [vmem:[#allocation13 + $0xf8] sm:$0xff]
    %v643 = vld [vmem:[#allocation13 + $0x100] sm:$0xff]
    %v644 = vld [vmem:[#allocation13 + $0x108] sm:$0xff]
    %v645 = vld [vmem:[#allocation13 + $0x110] sm:$0xff]
    %v646 = vld [vmem:[#allocation13 + $0x118] sm:$0xff]
    %v647 = vld [vmem:[#allocation13 + $0x120] sm:$0xff]
    %v648 = vld [vmem:[#allocation13 + $0x128] sm:$0xff]
    %v649 = vld [vmem:[#allocation13 + $0x130] sm:$0xff]
    %v650 = vld [vmem:[#allocation13 + $0x138] sm:$0xff]
    %v651 = vld [vmem:[#allocation13 + $0x140] sm:$0xff]
    %v652 = vld [vmem:[#allocation13 + $0x148] sm:$0xff]
    %v653 = vld [vmem:[#allocation13 + $0x150] sm:$0xff]
    %v654 = vld [vmem:[#allocation13 + $0x158] sm:$0xff]
    %v655 = vld [vmem:[#allocation13 + $0x160] sm:$0xff]
    %v656 = vld [vmem:[#allocation13 + $0x168] sm:$0xff]
    %v657 = vld [vmem:[#allocation13 + $0x170] sm:$0xff]
    %v658 = vld [vmem:[#allocation13 + $0x178] sm:$0xff]
    %v659 = vld [vmem:[#allocation13 + $0x180] sm:$0xff]
    %v660 = vld [vmem:[#allocation13 + $0x188] sm:$0xff]
    %v661 = vld [vmem:[#allocation13 + $0x190] sm:$0xff]
    %v662 = vld [vmem:[#allocation13 + $0x198] sm:$0xff]
    %v663 = vld [vmem:[#allocation13 + $0x1a0] sm:$0xff]
    %v664 = vld [vmem:[#allocation13 + $0x1a8] sm:$0xff]
    %v665 = vld [vmem:[#allocation13 + $0x1b0] sm:$0xff]
    %v666 = vld [vmem:[#allocation13 + $0x1b8] sm:$0xff]
    %v667 = vld [vmem:[#allocation13 + $0x1c0] sm:$0xff]
    %v668 = vld [vmem:[#allocation13 + $0x1c8] sm:$0xff]
    %v669 = vld [vmem:[#allocation13 + $0x1d0] sm:$0xff]
    %v670 = vld [vmem:[#allocation13 + $0x1d8] sm:$0xff]
    %v671 = vld [vmem:[#allocation13 + $0x1e0] sm:$0xff]
    %v672 = vld [vmem:[#allocation13 + $0x1e8] sm:$0xff]
    %v673 = vld [vmem:[#allocation13 + $0x1f0] sm:$0xff]
    %v674 = vld [vmem:[#allocation13 + $0x1f8] sm:$0xff]
    %v675 = vld [vmem:[#allocation13 + $0x200] sm:$0xff]
    %v676 = vld [vmem:[#allocation13 + $0x208] sm:$0xff]
    %v677 = vld [vmem:[#allocation13 + $0x210] sm:$0xff]
    %v678 = vld [vmem:[#allocation13 + $0x218] sm:$0xff]
    %v679 = vld [vmem:[#allocation13 + $0x220] sm:$0xff]
    %v680 = vld [vmem:[#allocation13 + $0x228] sm:$0xff]
    %v681 = vld [vmem:[#allocation13 + $0x230] sm:$0xff]
    %v682 = vld [vmem:[#allocation13 + $0x238] sm:$0xff]
    %v683 = vld [vmem:[#allocation13 + $0x240] sm:$0xff]
    %v684 = vld [vmem:[#allocation13 + $0x248] sm:$0xff]
    %v685 = vld [vmem:[#allocation13 + $0x250] sm:$0xff]
    %v686 = vld [vmem:[#allocation13 + $0x258] sm:$0xff]
    %v687 = vld [vmem:[#allocation13 + $0x260] sm:$0xff]
    %v688 = vld [vmem:[#allocation13 + $0x268] sm:$0xff]
    %v689 = vld [vmem:[#allocation13 + $0x270] sm:$0xff]
    %v690 = vld [vmem:[#allocation13 + $0x278] sm:$0xff]
    %v691 = vld [vmem:[#allocation13 + $0x280] sm:$0xff]
    %v692 = vld [vmem:[#allocation13 + $0x288] sm:$0xff]
    %v693 = vld [vmem:[#allocation13 + $0x290] sm:$0xff]
    %v694 = vld [vmem:[#allocation13 + $0x298] sm:$0xff]
    %v695 = vld [vmem:[#allocation13 + $0x2a0] sm:$0xff]
    %v696 = vld [vmem:[#allocation13 + $0x2a8] sm:$0xff]
    %v697 = vld [vmem:[#allocation13 + $0x2b0] sm:$0xff]
    %v698 = vld [vmem:[#allocation13 + $0x2b8] sm:$0xff]
    %v699 = vld [vmem:[#allocation13 + $0x2c0] sm:$0xff]
    %v700 = vld [vmem:[#allocation13 + $0x2c8] sm:$0xff]
    %v701 = vld [vmem:[#allocation13 + $0x2d0] sm:$0xff]
    %v702 = vld [vmem:[#allocation13 + $0x2d8] sm:$0xff]
    %v703 = vld [vmem:[#allocation13 + $0x2e0] sm:$0xff]
    %v704 = vld [vmem:[#allocation13 + $0x2e8] sm:$0xff]
    %v705 = vld [vmem:[#allocation13 + $0x2f0] sm:$0xff]
    %v706 = vld [vmem:[#allocation13 + $0x2f8] sm:$0xff]
    %v707 = vld [vmem:[#allocation13 + $0x300] sm:$0xff]
    %v708 = vld [vmem:[#allocation13 + $0x308] sm:$0xff]
    %v709 = vld [vmem:[#allocation13 + $0x310] sm:$0xff]
    %v710 = vld [vmem:[#allocation13 + $0x318] sm:$0xff]
    %v711 = vld [vmem:[#allocation13 + $0x320] sm:$0xff]
    %v712 = vld [vmem:[#allocation13 + $0x328] sm:$0xff]
    %v713 = vld [vmem:[#allocation13 + $0x330] sm:$0xff]
    %v714 = vld [vmem:[#allocation13 + $0x338] sm:$0xff]
    %v715 = vld [vmem:[#allocation13 + $0x340] sm:$0xff]
    %v716 = vld [vmem:[#allocation13 + $0x348] sm:$0xff]
    %v717 = vld [vmem:[#allocation13 + $0x350] sm:$0xff]
    %v718 = vld [vmem:[#allocation13 + $0x358] sm:$0xff]
    %v719 = vld [vmem:[#allocation13 + $0x360] sm:$0xff]
    %v720 = vld [vmem:[#allocation13 + $0x368] sm:$0xff]
    %v721 = vld [vmem:[#allocation13 + $0x370] sm:$0xff]
    %v722 = vld [vmem:[#allocation13 + $0x378] sm:$0xff]
    %v723 = vld [vmem:[#allocation13 + $0x380] sm:$0xff]
    %v724 = vld [vmem:[#allocation13 + $0x388] sm:$0xff]
    %v725 = vld [vmem:[#allocation13 + $0x390] sm:$0xff]
    %v726 = vld [vmem:[#allocation13 + $0x398] sm:$0xff]
    %v727 = vld [vmem:[#allocation13 + $0x3a0] sm:$0xff]
    %v728 = vld [vmem:[#allocation13 + $0x3a8] sm:$0xff]
    %v729 = vld [vmem:[#allocation13 + $0x3b0] sm:$0xff]
    %v730 = vld [vmem:[#allocation13 + $0x3b8] sm:$0xff]
    %v731 = vld [vmem:[#allocation13 + $0x3c0] sm:$0xff]
    %v732 = vld [vmem:[#allocation13 + $0x3c8] sm:$0xff]
    %v733 = vld [vmem:[#allocation13 + $0x3d0] sm:$0xff]
    %v734 = vld [vmem:[#allocation13 + $0x3d8] sm:$0xff]
    %v735 = vld [vmem:[#allocation13 + $0x3e0] sm:$0xff]
    %v736 = vld [vmem:[#allocation13 + $0x3e8] sm:$0xff]
    %v737 = vld [vmem:[#allocation13 + $0x3f0] sm:$0xff]
    %v738 = vld [vmem:[#allocation13 + $0x3f8] sm:$0xff]
    %v739 = vld [vmem:[#allocation13 + $0x400] sm:$0xff]
    %v740 = vld [vmem:[#allocation13 + $0x408] sm:$0xff]
    %v741 = vld [vmem:[#allocation13 + $0x410] sm:$0xff]
    %v742 = vld [vmem:[#allocation13 + $0x418] sm:$0xff]
    %v743 = vld [vmem:[#allocation13 + $0x420] sm:$0xff]
    %v744 = vld [vmem:[#allocation13 + $0x428] sm:$0xff]
    %v745 = vld [vmem:[#allocation13 + $0x430] sm:$0xff]
    %v746 = vld [vmem:[#allocation13 + $0x438] sm:$0xff]
    %v747 = vld [vmem:[#allocation13 + $0x440] sm:$0xff]
    %v748 = vld [vmem:[#allocation13 + $0x448] sm:$0xff]
    %v749 = vld [vmem:[#allocation13 + $0x450] sm:$0xff]
    %v750 = vld [vmem:[#allocation13 + $0x458] sm:$0xff]
    %v751 = vld [vmem:[#allocation13 + $0x460] sm:$0xff]
    %v752 = vld [vmem:[#allocation13 + $0x468] sm:$0xff]
    %v753 = vld [vmem:[#allocation13 + $0x470] sm:$0xff]
    %v754 = vld [vmem:[#allocation13 + $0x478] sm:$0xff]
    %v755 = vld [vmem:[#allocation13 + $0x480] sm:$0xff]
    %v756 = vld [vmem:[#allocation13 + $0x488] sm:$0xff]
    %v757 = vld [vmem:[#allocation13 + $0x490] sm:$0xff]
    %v758 = vld [vmem:[#allocation13 + $0x498] sm:$0xff]
    %v759 = vld [vmem:[#allocation13 + $0x4a0] sm:$0xff]
    %v760 = vld [vmem:[#allocation13 + $0x4a8] sm:$0xff]
    %v761 = vld [vmem:[#allocation13 + $0x4b0] sm:$0xff]
    %v762 = vld [vmem:[#allocation13 + $0x4b8] sm:$0xff]
    %v763 = vld [vmem:[#allocation13 + $0x4c0] sm:$0xff]
    %v764 = vld [vmem:[#allocation13 + $0x4c8] sm:$0xff]
    %v765 = vld [vmem:[#allocation13 + $0x4d0] sm:$0xff]
    %v766 = vld [vmem:[#allocation13 + $0x4d8] sm:$0xff]
    %v767 = vld [vmem:[#allocation13 + $0x4e0] sm:$0xff]
    %v768 = vld [vmem:[#allocation13 + $0x4e8] sm:$0xff]
    %v769 = vld [vmem:[#allocation13 + $0x4f0] sm:$0xff]
    %v770 = vld [vmem:[#allocation13 + $0x4f8] sm:$0xff]
    %v771 = vld [vmem:[#allocation13 + $0x500] sm:$0xff]
    %v772 = vld [vmem:[#allocation13 + $0x508] sm:$0xff]
    %v773 = vld [vmem:[#allocation13 + $0x510] sm:$0xff]
    %v774 = vld [vmem:[#allocation13 + $0x518] sm:$0xff]
    %v775 = vld [vmem:[#allocation13 + $0x520] sm:$0xff]
    %v776 = vld [vmem:[#allocation13 + $0x528] sm:$0xff]
    %v777 = vld [vmem:[#allocation13 + $0x530] sm:$0xff]
    %v778 = vld [vmem:[#allocation13 + $0x538] sm:$0xff]
    %v779 = vld [vmem:[#allocation13 + $0x540] sm:$0xff]
    %v780 = vld [vmem:[#allocation13 + $0x548] sm:$0xff]
    %v781 = vld [vmem:[#allocation13 + $0x550] sm:$0xff]
    %v782 = vld [vmem:[#allocation13 + $0x558] sm:$0xff]
    %v783 = vld [vmem:[#allocation13 + $0x560] sm:$0xff]
    %v784 = vld [vmem:[#allocation13 + $0x568] sm:$0xff]
    %v785 = vld [vmem:[#allocation13 + $0x570] sm:$0xff]
    %v786 = vld [vmem:[#allocation13 + $0x578] sm:$0xff]
    %v787 = vld [vmem:[#allocation13 + $0x580] sm:$0xff]
    %v788 = vld [vmem:[#allocation13 + $0x588] sm:$0xff]
    %v789 = vld [vmem:[#allocation13 + $0x590] sm:$0xff]
    %v790 = vld [vmem:[#allocation13 + $0x598] sm:$0xff]
    %v791 = vld [vmem:[#allocation13 + $0x5a0] sm:$0xff]
    %v792 = vld [vmem:[#allocation13 + $0x5a8] sm:$0xff]
    %v793 = vld [vmem:[#allocation13 + $0x5b0] sm:$0xff]
    %v794 = vld [vmem:[#allocation13 + $0x5b8] sm:$0xff]
    %v795 = vld [vmem:[#allocation13 + $0x5c0] sm:$0xff]
    %v796 = vld [vmem:[#allocation13 + $0x5c8] sm:$0xff]
    %v797 = vld [vmem:[#allocation13 + $0x5d0] sm:$0xff]
    %v798 = vld [vmem:[#allocation13 + $0x5d8] sm:$0xff]
    %v799 = vld [vmem:[#allocation13 + $0x5e0] sm:$0xff]
    %v800 = vld [vmem:[#allocation13 + $0x5e8] sm:$0xff]
    %v801 = vld [vmem:[#allocation13 + $0x5f0] sm:$0xff]
    %v802 = vld [vmem:[#allocation13 + $0x5f8] sm:$0xff]
    %v803 = vld [vmem:[#allocation13 + $0x600] sm:$0xff]
    %v804 = vld [vmem:[#allocation13 + $0x608] sm:$0xff]
    %v805 = vld [vmem:[#allocation13 + $0x610] sm:$0xff]
    %v806 = vld [vmem:[#allocation13 + $0x618] sm:$0xff]
    %v807 = vld [vmem:[#allocation13 + $0x620] sm:$0xff]
    %v808 = vld [vmem:[#allocation13 + $0x628] sm:$0xff]
    %v809 = vld [vmem:[#allocation13 + $0x630] sm:$0xff]
    %v810 = vld [vmem:[#allocation13 + $0x638] sm:$0xff]
    %v811 = vld [vmem:[#allocation13 + $0x640] sm:$0xff]
    %v812 = vld [vmem:[#allocation13 + $0x648] sm:$0xff]
    %v813 = vld [vmem:[#allocation13 + $0x650] sm:$0xff]
    %v814 = vld [vmem:[#allocation13 + $0x658] sm:$0xff]
    %v815 = vld [vmem:[#allocation13 + $0x660] sm:$0xff]
    %v816 = vld [vmem:[#allocation13 + $0x668] sm:$0xff]
    %v817 = vld [vmem:[#allocation13 + $0x670] sm:$0xff]
    %v818 = vld [vmem:[#allocation13 + $0x678] sm:$0xff]
    %v819 = vld [vmem:[#allocation13 + $0x680] sm:$0xff]
    %v820 = vld [vmem:[#allocation13 + $0x688] sm:$0xff]
    %v821 = vld [vmem:[#allocation13 + $0x690] sm:$0xff]
    %v822 = vld [vmem:[#allocation13 + $0x698] sm:$0xff]
    %v823 = vld [vmem:[#allocation13 + $0x6a0] sm:$0xff]
    %v824 = vld [vmem:[#allocation13 + $0x6a8] sm:$0xff]
    %v825 = vld [vmem:[#allocation13 + $0x6b0] sm:$0xff]
    %v826 = vld [vmem:[#allocation13 + $0x6b8] sm:$0xff]
    %v827 = vld [vmem:[#allocation13 + $0x6c0] sm:$0xff]
    %v828 = vld [vmem:[#allocation13 + $0x6c8] sm:$0xff]
    %v829 = vld [vmem:[#allocation13 + $0x6d0] sm:$0xff]
    %v830 = vld [vmem:[#allocation13 + $0x6d8] sm:$0xff]
    %v831 = vld [vmem:[#allocation13 + $0x6e0] sm:$0xff]
    %v832 = vld [vmem:[#allocation13 + $0x6e8] sm:$0xff]
    %v833 = vld [vmem:[#allocation13 + $0x6f0] sm:$0xff]
    %v834 = vld [vmem:[#allocation13 + $0x6f8] sm:$0xff]
    %v835 = vld [vmem:[#allocation13 + $0x700] sm:$0xff]
    %v836 = vld [vmem:[#allocation13 + $0x708] sm:$0xff]
    %v837 = vld [vmem:[#allocation13 + $0x710] sm:$0xff]
    %v838 = vld [vmem:[#allocation13 + $0x718] sm:$0xff]
    %v839 = vld [vmem:[#allocation13 + $0x720] sm:$0xff]
    %v840 = vld [vmem:[#allocation13 + $0x728] sm:$0xff]
    %v841 = vld [vmem:[#allocation13 + $0x730] sm:$0xff]
    %v842 = vld [vmem:[#allocation13 + $0x738] sm:$0xff]
    %v843 = vld [vmem:[#allocation13 + $0x740] sm:$0xff]
    %v844 = vld [vmem:[#allocation13 + $0x748] sm:$0xff]
    %v845 = vld [vmem:[#allocation13 + $0x750] sm:$0xff]
    %v846 = vld [vmem:[#allocation13 + $0x758] sm:$0xff]
    %v847 = vld [vmem:[#allocation13 + $0x760] sm:$0xff]
    %v848 = vld [vmem:[#allocation13 + $0x768] sm:$0xff]
    %v849 = vld [vmem:[#allocation13 + $0x770] sm:$0xff]
    %v850 = vld [vmem:[#allocation13 + $0x778] sm:$0xff]
    %v851 = vld [vmem:[#allocation13 + $0x780] sm:$0xff]
    %v852 = vld [vmem:[#allocation13 + $0x788] sm:$0xff]
    %v853 = vld [vmem:[#allocation13 + $0x790] sm:$0xff]
    %v854 = vld [vmem:[#allocation13 + $0x798] sm:$0xff]
    %v855 = vld [vmem:[#allocation13 + $0x7a0] sm:$0xff]
    %v856 = vld [vmem:[#allocation13 + $0x7a8] sm:$0xff]
    %v857 = vld [vmem:[#allocation13 + $0x7b0] sm:$0xff]
    %v858 = vld [vmem:[#allocation13 + $0x7b8] sm:$0xff]
    %v859 = vld [vmem:[#allocation13 + $0x7c0] sm:$0xff]
    %v860 = vld [vmem:[#allocation13 + $0x7c8] sm:$0xff]
    %v861 = vld [vmem:[#allocation13 + $0x7d0] sm:$0xff]
    %v862 = vld [vmem:[#allocation13 + $0x7d8] sm:$0xff]
    %v863 = vld [vmem:[#allocation13 + $0x7e0] sm:$0xff]
    %v864 = vld [vmem:[#allocation13 + $0x7e8] sm:$0xff]
    %v865 = vld [vmem:[#allocation13 + $0x7f0] sm:$0xff]
    %v866 = vld [vmem:[#allocation13 + $0x7f8] sm:$0xff]
    %v867 = vld [vmem:[#allocation14] sm:$0xff]
    %v868 = vpack.c.bf16 %v607, %v607
    %v869 = vpack.c.bf16 %v608, %v608
    %v870 = vpack.c.bf16 %v609, %v609
    %v871 = vpack.c.bf16 %v610, %v610
    %v873 = vperm.slane %v867, 0
    %v874 = vperm.slane %v867, 1
    %v875 = vperm.slane %v867, 2
    %v876 = vperm.slane %v867, 3
    %v877 = vperm.slane %v867, 4
    %v878 = vperm.slane %v867, 5
    %v879 = vperm.slane %v867, 6
    %v880 = vperm.slane %v867, 7
    %v1145 = vunpack.c.l.b16 %v611
    %v1146 = vunpack.c.h.b16 %v611
    %v1147 = vunpack.c.l.b16 %v612
    %v1148 = vunpack.c.h.b16 %v612
    %v1149 = vunpack.c.l.b16 %v613
    %v1150 = vunpack.c.h.b16 %v613
    %v1151 = vunpack.c.l.b16 %v614
    %v1152 = vunpack.c.h.b16 %v614
    %v1153 = vunpack.c.l.b16 %v615
    %v1154 = vunpack.c.h.b16 %v615
    %v1155 = vunpack.c.l.b16 %v616
    %v1156 = vunpack.c.h.b16 %v616
    %v1157 = vunpack.c.l.b16 %v617
    %v1158 = vunpack.c.h.b16 %v617
    %v1159 = vunpack.c.l.b16 %v618
    %v1160 = vunpack.c.h.b16 %v618
    %v1161 = vunpack.c.l.b16 %v619
    %v1162 = vunpack.c.h.b16 %v619
    %v1163 = vunpack.c.l.b16 %v620
    %v1164 = vunpack.c.h.b16 %v620
    %v1165 = vunpack.c.l.b16 %v621
    %v1166 = vunpack.c.h.b16 %v621
    %v1167 = vunpack.c.l.b16 %v622
    %v1168 = vunpack.c.h.b16 %v622
    %v1169 = vunpack.c.l.b16 %v623
    %v1170 = vunpack.c.h.b16 %v623
    %v1171 = vunpack.c.l.b16 %v624
    %v1172 = vunpack.c.h.b16 %v624
    %v1173 = vunpack.c.l.b16 %v625
    %v1174 = vunpack.c.h.b16 %v625
    %v1175 = vunpack.c.l.b16 %v626
    %v1176 = vunpack.c.h.b16 %v626
    %v1177 = vunpack.c.l.b16 %v627
    %v1178 = vunpack.c.h.b16 %v627
    %v1179 = vunpack.c.l.b16 %v628
    %v1180 = vunpack.c.h.b16 %v628
    %v1181 = vunpack.c.l.b16 %v629
    %v1182 = vunpack.c.h.b16 %v629
    %v1183 = vunpack.c.l.b16 %v630
    %v1184 = vunpack.c.h.b16 %v630
    %v1185 = vunpack.c.l.b16 %v631
    %v1186 = vunpack.c.h.b16 %v631
    %v1187 = vunpack.c.l.b16 %v632
    %v1188 = vunpack.c.h.b16 %v632
    %v1189 = vunpack.c.l.b16 %v633
    %v1190 = vunpack.c.h.b16 %v633
    %v1191 = vunpack.c.l.b16 %v634
    %v1192 = vunpack.c.h.b16 %v634
    %v1193 = vunpack.c.l.b16 %v635
    %v1194 = vunpack.c.h.b16 %v635
    %v1195 = vunpack.c.l.b16 %v636
    %v1196 = vunpack.c.h.b16 %v636
    %v1197 = vunpack.c.l.b16 %v637
    %v1198 = vunpack.c.h.b16 %v637
    %v1199 = vunpack.c.l.b16 %v638
    %v1200 = vunpack.c.h.b16 %v638
    %v1201 = vunpack.c.l.b16 %v639
    %v1202 = vunpack.c.h.b16 %v639
    %v1203 = vunpack.c.l.b16 %v640
    %v1204 = vunpack.c.h.b16 %v640
    %v1205 = vunpack.c.l.b16 %v641
    %v1206 = vunpack.c.h.b16 %v641
    %v1207 = vunpack.c.l.b16 %v642
    %v1208 = vunpack.c.h.b16 %v642
    %v1209 = vunpack.c.l.b16 %v643
    %v1210 = vunpack.c.h.b16 %v643
    %v1211 = vunpack.c.l.b16 %v644
    %v1212 = vunpack.c.h.b16 %v644
    %v1213 = vunpack.c.l.b16 %v645
    %v1214 = vunpack.c.h.b16 %v645
    %v1215 = vunpack.c.l.b16 %v646
    %v1216 = vunpack.c.h.b16 %v646
    %v1217 = vunpack.c.l.b16 %v647
    %v1218 = vunpack.c.h.b16 %v647
    %v1219 = vunpack.c.l.b16 %v648
    %v1220 = vunpack.c.h.b16 %v648
    %v1221 = vunpack.c.l.b16 %v649
    %v1222 = vunpack.c.h.b16 %v649
    %v1223 = vunpack.c.l.b16 %v650
    %v1224 = vunpack.c.h.b16 %v650
    %v1225 = vunpack.c.l.b16 %v651
    %v1226 = vunpack.c.h.b16 %v651
    %v1227 = vunpack.c.l.b16 %v652
    %v1228 = vunpack.c.h.b16 %v652
    %v1229 = vunpack.c.l.b16 %v653
    %v1230 = vunpack.c.h.b16 %v653
    %v1231 = vunpack.c.l.b16 %v654
    %v1232 = vunpack.c.h.b16 %v654
    %v1233 = vunpack.c.l.b16 %v655
    %v1234 = vunpack.c.h.b16 %v655
    %v1235 = vunpack.c.l.b16 %v656
    %v1236 = vunpack.c.h.b16 %v656
    %v1237 = vunpack.c.l.b16 %v657
    %v1238 = vunpack.c.h.b16 %v657
    %v1239 = vunpack.c.l.b16 %v658
    %v1240 = vunpack.c.h.b16 %v658
    %v1241 = vunpack.c.l.b16 %v659
    %v1242 = vunpack.c.h.b16 %v659
    %v1243 = vunpack.c.l.b16 %v660
    %v1244 = vunpack.c.h.b16 %v660
    %v1245 = vunpack.c.l.b16 %v661
    %v1246 = vunpack.c.h.b16 %v661
    %v1247 = vunpack.c.l.b16 %v662
    %v1248 = vunpack.c.h.b16 %v662
    %v1249 = vunpack.c.l.b16 %v663
    %v1250 = vunpack.c.h.b16 %v663
    %v1251 = vunpack.c.l.b16 %v664
    %v1252 = vunpack.c.h.b16 %v664
    %v1253 = vunpack.c.l.b16 %v665
    %v1254 = vunpack.c.h.b16 %v665
    %v1255 = vunpack.c.l.b16 %v666
    %v1256 = vunpack.c.h.b16 %v666
    %v1257 = vunpack.c.l.b16 %v667
    %v1258 = vunpack.c.h.b16 %v667
    %v1259 = vunpack.c.l.b16 %v668
    %v1260 = vunpack.c.h.b16 %v668
    %v1261 = vunpack.c.l.b16 %v669
    %v1262 = vunpack.c.h.b16 %v669
    %v1263 = vunpack.c.l.b16 %v670
    %v1264 = vunpack.c.h.b16 %v670
    %v1265 = vunpack.c.l.b16 %v671
    %v1266 = vunpack.c.h.b16 %v671
    %v1267 = vunpack.c.l.b16 %v672
    %v1268 = vunpack.c.h.b16 %v672
    %v1269 = vunpack.c.l.b16 %v673
    %v1270 = vunpack.c.h.b16 %v673
    %v1271 = vunpack.c.l.b16 %v674
    %v1272 = vunpack.c.h.b16 %v674
    %v1273 = vunpack.c.l.b16 %v675
    %v1274 = vunpack.c.h.b16 %v675
    %v1275 = vunpack.c.l.b16 %v676
    %v1276 = vunpack.c.h.b16 %v676
    %v1277 = vunpack.c.l.b16 %v677
    %v1278 = vunpack.c.h.b16 %v677
    %v1279 = vunpack.c.l.b16 %v678
    %v1280 = vunpack.c.h.b16 %v678
    %v1281 = vunpack.c.l.b16 %v679
    %v1282 = vunpack.c.h.b16 %v679
    %v1283 = vunpack.c.l.b16 %v680
    %v1284 = vunpack.c.h.b16 %v680
    %v1285 = vunpack.c.l.b16 %v681
    %v1286 = vunpack.c.h.b16 %v681
    %v1287 = vunpack.c.l.b16 %v682
    %v1288 = vunpack.c.h.b16 %v682
    %v1289 = vunpack.c.l.b16 %v683
    %v1290 = vunpack.c.h.b16 %v683
    %v1291 = vunpack.c.l.b16 %v684
    %v1292 = vunpack.c.h.b16 %v684
    %v1293 = vunpack.c.l.b16 %v685
    %v1294 = vunpack.c.h.b16 %v685
    %v1295 = vunpack.c.l.b16 %v686
    %v1296 = vunpack.c.h.b16 %v686
    %v1297 = vunpack.c.l.b16 %v687
    %v1298 = vunpack.c.h.b16 %v687
    %v1299 = vunpack.c.l.b16 %v688
    %v1300 = vunpack.c.h.b16 %v688
    %v1301 = vunpack.c.l.b16 %v689
    %v1302 = vunpack.c.h.b16 %v689
    %v1303 = vunpack.c.l.b16 %v690
    %v1304 = vunpack.c.h.b16 %v690
    %v1305 = vunpack.c.l.b16 %v691
    %v1306 = vunpack.c.h.b16 %v691
    %v1307 = vunpack.c.l.b16 %v692
    %v1308 = vunpack.c.h.b16 %v692
    %v1309 = vunpack.c.l.b16 %v693
    %v1310 = vunpack.c.h.b16 %v693
    %v1311 = vunpack.c.l.b16 %v694
    %v1312 = vunpack.c.h.b16 %v694
    %v1313 = vunpack.c.l.b16 %v695
    %v1314 = vunpack.c.h.b16 %v695
    %v1315 = vunpack.c.l.b16 %v696
    %v1316 = vunpack.c.h.b16 %v696
    %v1317 = vunpack.c.l.b16 %v697
    %v1318 = vunpack.c.h.b16 %v697
    %v1319 = vunpack.c.l.b16 %v698
    %v1320 = vunpack.c.h.b16 %v698
    %v1321 = vunpack.c.l.b16 %v699
    %v1322 = vunpack.c.h.b16 %v699
    %v1323 = vunpack.c.l.b16 %v700
    %v1324 = vunpack.c.h.b16 %v700
    %v1325 = vunpack.c.l.b16 %v701
    %v1326 = vunpack.c.h.b16 %v701
    %v1327 = vunpack.c.l.b16 %v702
    %v1328 = vunpack.c.h.b16 %v702
    %v1329 = vunpack.c.l.b16 %v703
    %v1330 = vunpack.c.h.b16 %v703
    %v1331 = vunpack.c.l.b16 %v704
    %v1332 = vunpack.c.h.b16 %v704
    %v1333 = vunpack.c.l.b16 %v705
    %v1334 = vunpack.c.h.b16 %v705
    %v1335 = vunpack.c.l.b16 %v706
    %v1336 = vunpack.c.h.b16 %v706
    %v1337 = vunpack.c.l.b16 %v707
    %v1338 = vunpack.c.h.b16 %v707
    %v1339 = vunpack.c.l.b16 %v708
    %v1340 = vunpack.c.h.b16 %v708
    %v1341 = vunpack.c.l.b16 %v709
    %v1342 = vunpack.c.h.b16 %v709
    %v1343 = vunpack.c.l.b16 %v710
    %v1344 = vunpack.c.h.b16 %v710
    %v1345 = vunpack.c.l.b16 %v711
    %v1346 = vunpack.c.h.b16 %v711
    %v1347 = vunpack.c.l.b16 %v712
    %v1348 = vunpack.c.h.b16 %v712
    %v1349 = vunpack.c.l.b16 %v713
    %v1350 = vunpack.c.h.b16 %v713
    %v1351 = vunpack.c.l.b16 %v714
    %v1352 = vunpack.c.h.b16 %v714
    %v1353 = vunpack.c.l.b16 %v715
    %v1354 = vunpack.c.h.b16 %v715
    %v1355 = vunpack.c.l.b16 %v716
    %v1356 = vunpack.c.h.b16 %v716
    %v1357 = vunpack.c.l.b16 %v717
    %v1358 = vunpack.c.h.b16 %v717
    %v1359 = vunpack.c.l.b16 %v718
    %v1360 = vunpack.c.h.b16 %v718
    %v1361 = vunpack.c.l.b16 %v719
    %v1362 = vunpack.c.h.b16 %v719
    %v1363 = vunpack.c.l.b16 %v720
    %v1364 = vunpack.c.h.b16 %v720
    %v1365 = vunpack.c.l.b16 %v721
    %v1366 = vunpack.c.h.b16 %v721
    %v1367 = vunpack.c.l.b16 %v722
    %v1368 = vunpack.c.h.b16 %v722
    %v1369 = vunpack.c.l.b16 %v723
    %v1370 = vunpack.c.h.b16 %v723
    %v1371 = vunpack.c.l.b16 %v724
    %v1372 = vunpack.c.h.b16 %v724
    %v1373 = vunpack.c.l.b16 %v725
    %v1374 = vunpack.c.h.b16 %v725
    %v1375 = vunpack.c.l.b16 %v726
    %v1376 = vunpack.c.h.b16 %v726
    %v1377 = vunpack.c.l.b16 %v727
    %v1378 = vunpack.c.h.b16 %v727
    %v1379 = vunpack.c.l.b16 %v728
    %v1380 = vunpack.c.h.b16 %v728
    %v1381 = vunpack.c.l.b16 %v729
    %v1382 = vunpack.c.h.b16 %v729
    %v1383 = vunpack.c.l.b16 %v730
    %v1384 = vunpack.c.h.b16 %v730
    %v1385 = vunpack.c.l.b16 %v731
    %v1386 = vunpack.c.h.b16 %v731
    %v1387 = vunpack.c.l.b16 %v732
    %v1388 = vunpack.c.h.b16 %v732
    %v1389 = vunpack.c.l.b16 %v733
    %v1390 = vunpack.c.h.b16 %v733
    %v1391 = vunpack.c.l.b16 %v734
    %v1392 = vunpack.c.h.b16 %v734
    %v1393 = vunpack.c.l.b16 %v735
    %v1394 = vunpack.c.h.b16 %v735
    %v1395 = vunpack.c.l.b16 %v736
    %v1396 = vunpack.c.h.b16 %v736
    %v1397 = vunpack.c.l.b16 %v737
    %v1398 = vunpack.c.h.b16 %v737
    %v1399 = vunpack.c.l.b16 %v738
    %v1400 = vunpack.c.h.b16 %v738
    %v1401 = vunpack.c.l.b16 %v739
    %v1402 = vunpack.c.h.b16 %v739
    %v1403 = vunpack.c.l.b16 %v740
    %v1404 = vunpack.c.h.b16 %v740
    %v1405 = vunpack.c.l.b16 %v741
    %v1406 = vunpack.c.h.b16 %v741
    %v1407 = vunpack.c.l.b16 %v742
    %v1408 = vunpack.c.h.b16 %v742
    %v1409 = vunpack.c.l.b16 %v743
    %v1410 = vunpack.c.h.b16 %v743
    %v1411 = vunpack.c.l.b16 %v744
    %v1412 = vunpack.c.h.b16 %v744
    %v1413 = vunpack.c.l.b16 %v745
    %v1414 = vunpack.c.h.b16 %v745
    %v1415 = vunpack.c.l.b16 %v746
    %v1416 = vunpack.c.h.b16 %v746
    %v1417 = vunpack.c.l.b16 %v747
    %v1418 = vunpack.c.h.b16 %v747
    %v1419 = vunpack.c.l.b16 %v748
    %v1420 = vunpack.c.h.b16 %v748
    %v1421 = vunpack.c.l.b16 %v749
    %v1422 = vunpack.c.h.b16 %v749
    %v1423 = vunpack.c.l.b16 %v750
    %v1424 = vunpack.c.h.b16 %v750
    %v1425 = vunpack.c.l.b16 %v751
    %v1426 = vunpack.c.h.b16 %v751
    %v1427 = vunpack.c.l.b16 %v752
    %v1428 = vunpack.c.h.b16 %v752
    %v1429 = vunpack.c.l.b16 %v753
    %v1430 = vunpack.c.h.b16 %v753
    %v1431 = vunpack.c.l.b16 %v754
    %v1432 = vunpack.c.h.b16 %v754
    %v1433 = vunpack.c.l.b16 %v755
    %v1434 = vunpack.c.h.b16 %v755
    %v1435 = vunpack.c.l.b16 %v756
    %v1436 = vunpack.c.h.b16 %v756
    %v1437 = vunpack.c.l.b16 %v757
    %v1438 = vunpack.c.h.b16 %v757
    %v1439 = vunpack.c.l.b16 %v758
    %v1440 = vunpack.c.h.b16 %v758
    %v1441 = vunpack.c.l.b16 %v759
    %v1442 = vunpack.c.h.b16 %v759
    %v1443 = vunpack.c.l.b16 %v760
    %v1444 = vunpack.c.h.b16 %v760
    %v1445 = vunpack.c.l.b16 %v761
    %v1446 = vunpack.c.h.b16 %v761
    %v1447 = vunpack.c.l.b16 %v762
    %v1448 = vunpack.c.h.b16 %v762
    %v1449 = vunpack.c.l.b16 %v763
    %v1450 = vunpack.c.h.b16 %v763
    %v1451 = vunpack.c.l.b16 %v764
    %v1452 = vunpack.c.h.b16 %v764
    %v1453 = vunpack.c.l.b16 %v765
    %v1454 = vunpack.c.h.b16 %v765
    %v1455 = vunpack.c.l.b16 %v766
    %v1456 = vunpack.c.h.b16 %v766
    %v1457 = vunpack.c.l.b16 %v767
    %v1458 = vunpack.c.h.b16 %v767
    %v1459 = vunpack.c.l.b16 %v768
    %v1460 = vunpack.c.h.b16 %v768
    %v1461 = vunpack.c.l.b16 %v769
    %v1462 = vunpack.c.h.b16 %v769
    %v1463 = vunpack.c.l.b16 %v770
    %v1464 = vunpack.c.h.b16 %v770
    %v1465 = vunpack.c.l.b16 %v771
    %v1466 = vunpack.c.h.b16 %v771
    %v1467 = vunpack.c.l.b16 %v772
    %v1468 = vunpack.c.h.b16 %v772
    %v1469 = vunpack.c.l.b16 %v773
    %v1470 = vunpack.c.h.b16 %v773
    %v1471 = vunpack.c.l.b16 %v774
    %v1472 = vunpack.c.h.b16 %v774
    %v1473 = vunpack.c.l.b16 %v775
    %v1474 = vunpack.c.h.b16 %v775
    %v1475 = vunpack.c.l.b16 %v776
    %v1476 = vunpack.c.h.b16 %v776
    %v1477 = vunpack.c.l.b16 %v777
    %v1478 = vunpack.c.h.b16 %v777
    %v1479 = vunpack.c.l.b16 %v778
    %v1480 = vunpack.c.h.b16 %v778
    %v1481 = vunpack.c.l.b16 %v779
    %v1482 = vunpack.c.h.b16 %v779
    %v1483 = vunpack.c.l.b16 %v780
    %v1484 = vunpack.c.h.b16 %v780
    %v1485 = vunpack.c.l.b16 %v781
    %v1486 = vunpack.c.h.b16 %v781
    %v1487 = vunpack.c.l.b16 %v782
    %v1488 = vunpack.c.h.b16 %v782
    %v1489 = vunpack.c.l.b16 %v783
    %v1490 = vunpack.c.h.b16 %v783
    %v1491 = vunpack.c.l.b16 %v784
    %v1492 = vunpack.c.h.b16 %v784
    %v1493 = vunpack.c.l.b16 %v785
    %v1494 = vunpack.c.h.b16 %v785
    %v1495 = vunpack.c.l.b16 %v786
    %v1496 = vunpack.c.h.b16 %v786
    %v1497 = vunpack.c.l.b16 %v787
    %v1498 = vunpack.c.h.b16 %v787
    %v1499 = vunpack.c.l.b16 %v788
    %v1500 = vunpack.c.h.b16 %v788
    %v1501 = vunpack.c.l.b16 %v789
    %v1502 = vunpack.c.h.b16 %v789
    %v1503 = vunpack.c.l.b16 %v790
    %v1504 = vunpack.c.h.b16 %v790
    %v1505 = vunpack.c.l.b16 %v791
    %v1506 = vunpack.c.h.b16 %v791
    %v1507 = vunpack.c.l.b16 %v792
    %v1508 = vunpack.c.h.b16 %v792
    %v1509 = vunpack.c.l.b16 %v793
    %v1510 = vunpack.c.h.b16 %v793
    %v1511 = vunpack.c.l.b16 %v794
    %v1512 = vunpack.c.h.b16 %v794
    %v1513 = vunpack.c.l.b16 %v795
    %v1514 = vunpack.c.h.b16 %v795
    %v1515 = vunpack.c.l.b16 %v796
    %v1516 = vunpack.c.h.b16 %v796
    %v1517 = vunpack.c.l.b16 %v797
    %v1518 = vunpack.c.h.b16 %v797
    %v1519 = vunpack.c.l.b16 %v798
    %v1520 = vunpack.c.h.b16 %v798
    %v1521 = vunpack.c.l.b16 %v799
    %v1522 = vunpack.c.h.b16 %v799
    %v1523 = vunpack.c.l.b16 %v800
    %v1524 = vunpack.c.h.b16 %v800
    %v1525 = vunpack.c.l.b16 %v801
    %v1526 = vunpack.c.h.b16 %v801
    %v1527 = vunpack.c.l.b16 %v802
    %v1528 = vunpack.c.h.b16 %v802
    %v1529 = vunpack.c.l.b16 %v803
    %v1530 = vunpack.c.h.b16 %v803
    %v1531 = vunpack.c.l.b16 %v804
    %v1532 = vunpack.c.h.b16 %v804
    %v1533 = vunpack.c.l.b16 %v805
    %v1534 = vunpack.c.h.b16 %v805
    %v1535 = vunpack.c.l.b16 %v806
    %v1536 = vunpack.c.h.b16 %v806
    %v1537 = vunpack.c.l.b16 %v807
    %v1538 = vunpack.c.h.b16 %v807
    %v1539 = vunpack.c.l.b16 %v808
    %v1540 = vunpack.c.h.b16 %v808
    %v1541 = vunpack.c.l.b16 %v809
    %v1542 = vunpack.c.h.b16 %v809
    %v1543 = vunpack.c.l.b16 %v810
    %v1544 = vunpack.c.h.b16 %v810
    %v1545 = vunpack.c.l.b16 %v811
    %v1546 = vunpack.c.h.b16 %v811
    %v1547 = vunpack.c.l.b16 %v812
    %v1548 = vunpack.c.h.b16 %v812
    %v1549 = vunpack.c.l.b16 %v813
    %v1550 = vunpack.c.h.b16 %v813
    %v1551 = vunpack.c.l.b16 %v814
    %v1552 = vunpack.c.h.b16 %v814
    %v1553 = vunpack.c.l.b16 %v815
    %v1554 = vunpack.c.h.b16 %v815
    %v1555 = vunpack.c.l.b16 %v816
    %v1556 = vunpack.c.h.b16 %v816
    %v1557 = vunpack.c.l.b16 %v817
    %v1558 = vunpack.c.h.b16 %v817
    %v1559 = vunpack.c.l.b16 %v818
    %v1560 = vunpack.c.h.b16 %v818
    %v1561 = vunpack.c.l.b16 %v819
    %v1562 = vunpack.c.h.b16 %v819
    %v1563 = vunpack.c.l.b16 %v820
    %v1564 = vunpack.c.h.b16 %v820
    %v1565 = vunpack.c.l.b16 %v821
    %v1566 = vunpack.c.h.b16 %v821
    %v1567 = vunpack.c.l.b16 %v822
    %v1568 = vunpack.c.h.b16 %v822
    %v1569 = vunpack.c.l.b16 %v823
    %v1570 = vunpack.c.h.b16 %v823
    %v1571 = vunpack.c.l.b16 %v824
    %v1572 = vunpack.c.h.b16 %v824
    %v1573 = vunpack.c.l.b16 %v825
    %v1574 = vunpack.c.h.b16 %v825
    %v1575 = vunpack.c.l.b16 %v826
    %v1576 = vunpack.c.h.b16 %v826
    %v1577 = vunpack.c.l.b16 %v827
    %v1578 = vunpack.c.h.b16 %v827
    %v1579 = vunpack.c.l.b16 %v828
    %v1580 = vunpack.c.h.b16 %v828
    %v1581 = vunpack.c.l.b16 %v829
    %v1582 = vunpack.c.h.b16 %v829
    %v1583 = vunpack.c.l.b16 %v830
    %v1584 = vunpack.c.h.b16 %v830
    %v1585 = vunpack.c.l.b16 %v831
    %v1586 = vunpack.c.h.b16 %v831
    %v1587 = vunpack.c.l.b16 %v832
    %v1588 = vunpack.c.h.b16 %v832
    %v1589 = vunpack.c.l.b16 %v833
    %v1590 = vunpack.c.h.b16 %v833
    %v1591 = vunpack.c.l.b16 %v834
    %v1592 = vunpack.c.h.b16 %v834
    %v1593 = vunpack.c.l.b16 %v835
    %v1594 = vunpack.c.h.b16 %v835
    %v1595 = vunpack.c.l.b16 %v836
    %v1596 = vunpack.c.h.b16 %v836
    %v1597 = vunpack.c.l.b16 %v837
    %v1598 = vunpack.c.h.b16 %v837
    %v1599 = vunpack.c.l.b16 %v838
    %v1600 = vunpack.c.h.b16 %v838
    %v1601 = vunpack.c.l.b16 %v839
    %v1602 = vunpack.c.h.b16 %v839
    %v1603 = vunpack.c.l.b16 %v840
    %v1604 = vunpack.c.h.b16 %v840
    %v1605 = vunpack.c.l.b16 %v841
    %v1606 = vunpack.c.h.b16 %v841
    %v1607 = vunpack.c.l.b16 %v842
    %v1608 = vunpack.c.h.b16 %v842
    %v1609 = vunpack.c.l.b16 %v843
    %v1610 = vunpack.c.h.b16 %v843
    %v1611 = vunpack.c.l.b16 %v844
    %v1612 = vunpack.c.h.b16 %v844
    %v1613 = vunpack.c.l.b16 %v845
    %v1614 = vunpack.c.h.b16 %v845
    %v1615 = vunpack.c.l.b16 %v846
    %v1616 = vunpack.c.h.b16 %v846
    %v1617 = vunpack.c.l.b16 %v847
    %v1618 = vunpack.c.h.b16 %v847
    %v1619 = vunpack.c.l.b16 %v848
    %v1620 = vunpack.c.h.b16 %v848
    %v1621 = vunpack.c.l.b16 %v849
    %v1622 = vunpack.c.h.b16 %v849
    %v1623 = vunpack.c.l.b16 %v850
    %v1624 = vunpack.c.h.b16 %v850
    %v1625 = vunpack.c.l.b16 %v851
    %v1626 = vunpack.c.h.b16 %v851
    %v1627 = vunpack.c.l.b16 %v852
    %v1628 = vunpack.c.h.b16 %v852
    %v1629 = vunpack.c.l.b16 %v853
    %v1630 = vunpack.c.h.b16 %v853
    %v1631 = vunpack.c.l.b16 %v854
    %v1632 = vunpack.c.h.b16 %v854
    %v1633 = vunpack.c.l.b16 %v855
    %v1634 = vunpack.c.h.b16 %v855
    %v1635 = vunpack.c.l.b16 %v856
    %v1636 = vunpack.c.h.b16 %v856
    %v1637 = vunpack.c.l.b16 %v857
    %v1638 = vunpack.c.h.b16 %v857
    %v1639 = vunpack.c.l.b16 %v858
    %v1640 = vunpack.c.h.b16 %v858
    %v1641 = vunpack.c.l.b16 %v859
    %v1642 = vunpack.c.h.b16 %v859
    %v1643 = vunpack.c.l.b16 %v860
    %v1644 = vunpack.c.h.b16 %v860
    %v1645 = vunpack.c.l.b16 %v861
    %v1646 = vunpack.c.h.b16 %v861
    %v1647 = vunpack.c.l.b16 %v862
    %v1648 = vunpack.c.h.b16 %v862
    %v1649 = vunpack.c.l.b16 %v863
    %v1650 = vunpack.c.h.b16 %v863
    %v1651 = vunpack.c.l.b16 %v864
    %v1652 = vunpack.c.h.b16 %v864
    %v1653 = vunpack.c.l.b16 %v865
    %v1654 = vunpack.c.h.b16 %v865
    %v1655 = vunpack.c.l.b16 %v866
    %v1656 = vunpack.c.h.b16 %v866
    %v1657 = vpack.c.b16 %v1153, %v1145
    %v1658 = vpack.c.b16 %v1154, %v1146
    %v1659 = vpack.c.b16 %v1155, %v1147
    %v1660 = vpack.c.b16 %v1156, %v1148
    %v1661 = vpack.c.b16 %v1157, %v1149
    %v1662 = vpack.c.b16 %v1158, %v1150
    %v1663 = vpack.c.b16 %v1159, %v1151
    %v1664 = vpack.c.b16 %v1160, %v1152
    %v1665 = vpack.c.b16 %v1169, %v1161
    %v1666 = vpack.c.b16 %v1170, %v1162
    %v1667 = vpack.c.b16 %v1171, %v1163
    %v1668 = vpack.c.b16 %v1172, %v1164
    %v1669 = vpack.c.b16 %v1173, %v1165
    %v1670 = vpack.c.b16 %v1174, %v1166
    %v1671 = vpack.c.b16 %v1175, %v1167
    %v1672 = vpack.c.b16 %v1176, %v1168
    %v1673 = vpack.c.b16 %v1185, %v1177
    %v1674 = vpack.c.b16 %v1186, %v1178
    %v1675 = vpack.c.b16 %v1187, %v1179
    %v1676 = vpack.c.b16 %v1188, %v1180
    %v1677 = vpack.c.b16 %v1189, %v1181
    %v1678 = vpack.c.b16 %v1190, %v1182
    %v1679 = vpack.c.b16 %v1191, %v1183
    %v1680 = vpack.c.b16 %v1192, %v1184
    %v1681 = vpack.c.b16 %v1201, %v1193
    %v1682 = vpack.c.b16 %v1202, %v1194
    %v1683 = vpack.c.b16 %v1203, %v1195
    %v1684 = vpack.c.b16 %v1204, %v1196
    %v1685 = vpack.c.b16 %v1205, %v1197
    %v1686 = vpack.c.b16 %v1206, %v1198
    %v1687 = vpack.c.b16 %v1207, %v1199
    %v1688 = vpack.c.b16 %v1208, %v1200
    %v1689 = vpack.c.b16 %v1217, %v1209
    %v1690 = vpack.c.b16 %v1218, %v1210
    %v1691 = vpack.c.b16 %v1219, %v1211
    %v1692 = vpack.c.b16 %v1220, %v1212
    %v1693 = vpack.c.b16 %v1221, %v1213
    %v1694 = vpack.c.b16 %v1222, %v1214
    %v1695 = vpack.c.b16 %v1223, %v1215
    %v1696 = vpack.c.b16 %v1224, %v1216
    %v1697 = vpack.c.b16 %v1233, %v1225
    %v1698 = vpack.c.b16 %v1234, %v1226
    %v1699 = vpack.c.b16 %v1235, %v1227
    %v1700 = vpack.c.b16 %v1236, %v1228
    %v1701 = vpack.c.b16 %v1237, %v1229
    %v1702 = vpack.c.b16 %v1238, %v1230
    %v1703 = vpack.c.b16 %v1239, %v1231
    %v1704 = vpack.c.b16 %v1240, %v1232
    %v1705 = vpack.c.b16 %v1249, %v1241
    %v1706 = vpack.c.b16 %v1250, %v1242
    %v1707 = vpack.c.b16 %v1251, %v1243
    %v1708 = vpack.c.b16 %v1252, %v1244
    %v1709 = vpack.c.b16 %v1253, %v1245
    %v1710 = vpack.c.b16 %v1254, %v1246
    %v1711 = vpack.c.b16 %v1255, %v1247
    %v1712 = vpack.c.b16 %v1256, %v1248
    %v1713 = vpack.c.b16 %v1265, %v1257
    %v1714 = vpack.c.b16 %v1266, %v1258
    %v1715 = vpack.c.b16 %v1267, %v1259
    %v1716 = vpack.c.b16 %v1268, %v1260
    %v1717 = vpack.c.b16 %v1269, %v1261
    %v1718 = vpack.c.b16 %v1270, %v1262
    %v1719 = vpack.c.b16 %v1271, %v1263
    %v1720 = vpack.c.b16 %v1272, %v1264
    %v1721 = vpack.c.b16 %v1281, %v1273
    %v1722 = vpack.c.b16 %v1282, %v1274
    %v1723 = vpack.c.b16 %v1283, %v1275
    %v1724 = vpack.c.b16 %v1284, %v1276
    %v1725 = vpack.c.b16 %v1285, %v1277
    %v1726 = vpack.c.b16 %v1286, %v1278
    %v1727 = vpack.c.b16 %v1287, %v1279
    %v1728 = vpack.c.b16 %v1288, %v1280
    %v1729 = vpack.c.b16 %v1297, %v1289
    %v1730 = vpack.c.b16 %v1298, %v1290
    %v1731 = vpack.c.b16 %v1299, %v1291
    %v1732 = vpack.c.b16 %v1300, %v1292
    %v1733 = vpack.c.b16 %v1301, %v1293
    %v1734 = vpack.c.b16 %v1302, %v1294
    %v1735 = vpack.c.b16 %v1303, %v1295
    %v1736 = vpack.c.b16 %v1304, %v1296
    %v1737 = vpack.c.b16 %v1313, %v1305
    %v1738 = vpack.c.b16 %v1314, %v1306
    %v1739 = vpack.c.b16 %v1315, %v1307
    %v1740 = vpack.c.b16 %v1316, %v1308
    %v1741 = vpack.c.b16 %v1317, %v1309
    %v1742 = vpack.c.b16 %v1318, %v1310
    %v1743 = vpack.c.b16 %v1319, %v1311
    %v1744 = vpack.c.b16 %v1320, %v1312
    %v1745 = vpack.c.b16 %v1329, %v1321
    %v1746 = vpack.c.b16 %v1330, %v1322
    %v1747 = vpack.c.b16 %v1331, %v1323
    %v1748 = vpack.c.b16 %v1332, %v1324
    %v1749 = vpack.c.b16 %v1333, %v1325
    %v1750 = vpack.c.b16 %v1334, %v1326
    %v1751 = vpack.c.b16 %v1335, %v1327
    %v1752 = vpack.c.b16 %v1336, %v1328
    %v1753 = vpack.c.b16 %v1345, %v1337
    %v1754 = vpack.c.b16 %v1346, %v1338
    %v1755 = vpack.c.b16 %v1347, %v1339
    %v1756 = vpack.c.b16 %v1348, %v1340
    %v1757 = vpack.c.b16 %v1349, %v1341
    %v1758 = vpack.c.b16 %v1350, %v1342
    %v1759 = vpack.c.b16 %v1351, %v1343
    %v1760 = vpack.c.b16 %v1352, %v1344
    %v1761 = vpack.c.b16 %v1361, %v1353
    %v1762 = vpack.c.b16 %v1362, %v1354
    %v1763 = vpack.c.b16 %v1363, %v1355
    %v1764 = vpack.c.b16 %v1364, %v1356
    %v1765 = vpack.c.b16 %v1365, %v1357
    %v1766 = vpack.c.b16 %v1366, %v1358
    %v1767 = vpack.c.b16 %v1367, %v1359
    %v1768 = vpack.c.b16 %v1368, %v1360
    %v1769 = vpack.c.b16 %v1377, %v1369
    %v1770 = vpack.c.b16 %v1378, %v1370
    %v1771 = vpack.c.b16 %v1379, %v1371
    %v1772 = vpack.c.b16 %v1380, %v1372
    %v1773 = vpack.c.b16 %v1381, %v1373
    %v1774 = vpack.c.b16 %v1382, %v1374
    %v1775 = vpack.c.b16 %v1383, %v1375
    %v1776 = vpack.c.b16 %v1384, %v1376
    %v1777 = vpack.c.b16 %v1393, %v1385
    %v1778 = vpack.c.b16 %v1394, %v1386
    %v1779 = vpack.c.b16 %v1395, %v1387
    %v1780 = vpack.c.b16 %v1396, %v1388
    %v1781 = vpack.c.b16 %v1397, %v1389
    %v1782 = vpack.c.b16 %v1398, %v1390
    %v1783 = vpack.c.b16 %v1399, %v1391
    %v1784 = vpack.c.b16 %v1400, %v1392
    %v1785 = vpack.c.b16 %v1409, %v1401
    %v1786 = vpack.c.b16 %v1410, %v1402
    %v1787 = vpack.c.b16 %v1411, %v1403
    %v1788 = vpack.c.b16 %v1412, %v1404
    %v1789 = vpack.c.b16 %v1413, %v1405
    %v1790 = vpack.c.b16 %v1414, %v1406
    %v1791 = vpack.c.b16 %v1415, %v1407
    %v1792 = vpack.c.b16 %v1416, %v1408
    %v1793 = vpack.c.b16 %v1425, %v1417
    %v1794 = vpack.c.b16 %v1426, %v1418
    %v1795 = vpack.c.b16 %v1427, %v1419
    %v1796 = vpack.c.b16 %v1428, %v1420
    %v1797 = vpack.c.b16 %v1429, %v1421
    %v1798 = vpack.c.b16 %v1430, %v1422
    %v1799 = vpack.c.b16 %v1431, %v1423
    %v1800 = vpack.c.b16 %v1432, %v1424
    %v1801 = vpack.c.b16 %v1441, %v1433
    %v1802 = vpack.c.b16 %v1442, %v1434
    %v1803 = vpack.c.b16 %v1443, %v1435
    %v1804 = vpack.c.b16 %v1444, %v1436
    %v1805 = vpack.c.b16 %v1445, %v1437
    %v1806 = vpack.c.b16 %v1446, %v1438
    %v1807 = vpack.c.b16 %v1447, %v1439
    %v1808 = vpack.c.b16 %v1448, %v1440
    %v1809 = vpack.c.b16 %v1457, %v1449
    %v1810 = vpack.c.b16 %v1458, %v1450
    %v1811 = vpack.c.b16 %v1459, %v1451
    %v1812 = vpack.c.b16 %v1460, %v1452
    %v1813 = vpack.c.b16 %v1461, %v1453
    %v1814 = vpack.c.b16 %v1462, %v1454
    %v1815 = vpack.c.b16 %v1463, %v1455
    %v1816 = vpack.c.b16 %v1464, %v1456
    %v1817 = vpack.c.b16 %v1473, %v1465
    %v1818 = vpack.c.b16 %v1474, %v1466
    %v1819 = vpack.c.b16 %v1475, %v1467
    %v1820 = vpack.c.b16 %v1476, %v1468
    %v1821 = vpack.c.b16 %v1477, %v1469
    %v1822 = vpack.c.b16 %v1478, %v1470
    %v1823 = vpack.c.b16 %v1479, %v1471
    %v1824 = vpack.c.b16 %v1480, %v1472
    %v1825 = vpack.c.b16 %v1489, %v1481
    %v1826 = vpack.c.b16 %v1490, %v1482
    %v1827 = vpack.c.b16 %v1491, %v1483
    %v1828 = vpack.c.b16 %v1492, %v1484
    %v1829 = vpack.c.b16 %v1493, %v1485
    %v1830 = vpack.c.b16 %v1494, %v1486
    %v1831 = vpack.c.b16 %v1495, %v1487
    %v1832 = vpack.c.b16 %v1496, %v1488
    %v1833 = vpack.c.b16 %v1505, %v1497
    %v1834 = vpack.c.b16 %v1506, %v1498
    %v1835 = vpack.c.b16 %v1507, %v1499
    %v1836 = vpack.c.b16 %v1508, %v1500
    %v1837 = vpack.c.b16 %v1509, %v1501
    %v1838 = vpack.c.b16 %v1510, %v1502
    %v1839 = vpack.c.b16 %v1511, %v1503
    %v1840 = vpack.c.b16 %v1512, %v1504
    %v1841 = vpack.c.b16 %v1521, %v1513
    %v1842 = vpack.c.b16 %v1522, %v1514
    %v1843 = vpack.c.b16 %v1523, %v1515
    %v1844 = vpack.c.b16 %v1524, %v1516
    %v1845 = vpack.c.b16 %v1525, %v1517
    %v1846 = vpack.c.b16 %v1526, %v1518
    %v1847 = vpack.c.b16 %v1527, %v1519
    %v1848 = vpack.c.b16 %v1528, %v1520
    %v1849 = vpack.c.b16 %v1537, %v1529
    %v1850 = vpack.c.b16 %v1538, %v1530
    %v1851 = vpack.c.b16 %v1539, %v1531
    %v1852 = vpack.c.b16 %v1540, %v1532
    %v1853 = vpack.c.b16 %v1541, %v1533
    %v1854 = vpack.c.b16 %v1542, %v1534
    %v1855 = vpack.c.b16 %v1543, %v1535
    %v1856 = vpack.c.b16 %v1544, %v1536
    %v1857 = vpack.c.b16 %v1553, %v1545
    %v1858 = vpack.c.b16 %v1554, %v1546
    %v1859 = vpack.c.b16 %v1555, %v1547
    %v1860 = vpack.c.b16 %v1556, %v1548
    %v1861 = vpack.c.b16 %v1557, %v1549
    %v1862 = vpack.c.b16 %v1558, %v1550
    %v1863 = vpack.c.b16 %v1559, %v1551
    %v1864 = vpack.c.b16 %v1560, %v1552
    %v1865 = vpack.c.b16 %v1569, %v1561
    %v1866 = vpack.c.b16 %v1570, %v1562
    %v1867 = vpack.c.b16 %v1571, %v1563
    %v1868 = vpack.c.b16 %v1572, %v1564
    %v1869 = vpack.c.b16 %v1573, %v1565
    %v1870 = vpack.c.b16 %v1574, %v1566
    %v1871 = vpack.c.b16 %v1575, %v1567
    %v1872 = vpack.c.b16 %v1576, %v1568
    %v1873 = vpack.c.b16 %v1585, %v1577
    %v1874 = vpack.c.b16 %v1586, %v1578
    %v1875 = vpack.c.b16 %v1587, %v1579
    %v1876 = vpack.c.b16 %v1588, %v1580
    %v1877 = vpack.c.b16 %v1589, %v1581
    %v1878 = vpack.c.b16 %v1590, %v1582
    %v1879 = vpack.c.b16 %v1591, %v1583
    %v1880 = vpack.c.b16 %v1592, %v1584
    %v1881 = vpack.c.b16 %v1601, %v1593
    %v1882 = vpack.c.b16 %v1602, %v1594
    %v1883 = vpack.c.b16 %v1603, %v1595
    %v1884 = vpack.c.b16 %v1604, %v1596
    %v1885 = vpack.c.b16 %v1605, %v1597
    %v1886 = vpack.c.b16 %v1606, %v1598
    %v1887 = vpack.c.b16 %v1607, %v1599
    %v1888 = vpack.c.b16 %v1608, %v1600
    %v1889 = vpack.c.b16 %v1617, %v1609
    %v1890 = vpack.c.b16 %v1618, %v1610
    %v1891 = vpack.c.b16 %v1619, %v1611
    %v1892 = vpack.c.b16 %v1620, %v1612
    %v1893 = vpack.c.b16 %v1621, %v1613
    %v1894 = vpack.c.b16 %v1622, %v1614
    %v1895 = vpack.c.b16 %v1623, %v1615
    %v1896 = vpack.c.b16 %v1624, %v1616
    %v1897 = vpack.c.b16 %v1633, %v1625
    %v1898 = vpack.c.b16 %v1634, %v1626
    %v1899 = vpack.c.b16 %v1635, %v1627
    %v1900 = vpack.c.b16 %v1636, %v1628
    %v1901 = vpack.c.b16 %v1637, %v1629
    %v1902 = vpack.c.b16 %v1638, %v1630
    %v1903 = vpack.c.b16 %v1639, %v1631
    %v1904 = vpack.c.b16 %v1640, %v1632
    %v1905 = vpack.c.b16 %v1649, %v1641
    %v1906 = vpack.c.b16 %v1650, %v1642
    %v1907 = vpack.c.b16 %v1651, %v1643
    %v1908 = vpack.c.b16 %v1652, %v1644
    %v1909 = vpack.c.b16 %v1653, %v1645
    %v1910 = vpack.c.b16 %v1654, %v1646
    %v1911 = vpack.c.b16 %v1655, %v1647
    %v1912 = vpack.c.b16 %v1656, %v1648
    %2169 = vmatpush.bf16.msra.mxu0 %v1713
    %2170 = vmatpush.bf16.msra.mxu0 %v1705
    %2171 = vmatpush.bf16.msra.mxu0 %v1697
    %2172 = vmatpush.bf16.msra.mxu0 %v1689
    %2173 = vmatpush.bf16.msra.mxu0 %v1681
    %2174 = vmatpush.bf16.msra.mxu0 %v1673
    %2175 = vmatpush.bf16.msra.mxu0 %v1665
    %2176 = vmatpush.bf16.msra.mxu0 %v1657
    %2177 = vmatmul.bf16.gmra.mxu0 %v868
    %v2178 = vpop.f32.mrf.mxu0
    %v2179 = vadd.f32 %v873, %v2178
    %v2180 = vpop.f32.mrf.mxu0
    %2181 = vdwg.mxu0
    %2182 = vmatpush.bf16.msra.mxu0 %v1777
    %2183 = vmatpush.bf16.msra.mxu0 %v1769
    %2184 = vmatpush.bf16.msra.mxu0 %v1761
    %2185 = vmatpush.bf16.msra.mxu0 %v1753
    %2186 = vmatpush.bf16.msra.mxu0 %v1745
    %2187 = vmatpush.bf16.msra.mxu0 %v1737
    %2188 = vmatpush.bf16.msra.mxu0 %v1729
    %2189 = vmatpush.bf16.msra.mxu0 %v1721
    %2190 = vmatmul.bf16.gmra.mxu0 %v869
    %v2191 = vpop.f32.mrf.mxu0
    %v2192 = vadd.f32 %v2179, %v2191
    %v2193 = vpop.f32.mrf.mxu0
    %2194 = vdwg.mxu0
    %2195 = vmatpush.bf16.msra.mxu0 %v1841
    %2196 = vmatpush.bf16.msra.mxu0 %v1833
    %2197 = vmatpush.bf16.msra.mxu0 %v1825
    %2198 = vmatpush.bf16.msra.mxu0 %v1817
    %2199 = vmatpush.bf16.msra.mxu0 %v1809
    %2200 = vmatpush.bf16.msra.mxu0 %v1801
    %2201 = vmatpush.bf16.msra.mxu0 %v1793
    %2202 = vmatpush.bf16.msra.mxu0 %v1785
    %2203 = vmatmul.bf16.gmra.mxu0 %v870
    %v2204 = vpop.f32.mrf.mxu0
    %v2205 = vadd.f32 %v2192, %v2204
    %v2206 = vpop.f32.mrf.mxu0
    %2207 = vdwg.mxu0
    %2208 = vmatpush.bf16.msra.mxu0 %v1905
    %2209 = vmatpush.bf16.msra.mxu0 %v1897
    %2210 = vmatpush.bf16.msra.mxu0 %v1889
    %2211 = vmatpush.bf16.msra.mxu0 %v1881
    %2212 = vmatpush.bf16.msra.mxu0 %v1873
    %2213 = vmatpush.bf16.msra.mxu0 %v1865
    %2214 = vmatpush.bf16.msra.mxu0 %v1857
    %2215 = vmatpush.bf16.msra.mxu0 %v1849
    %2216 = vmatmul.bf16.gmra.mxu0 %v871
    %v2217 = vpop.f32.mrf.mxu0
    %v2218 = vadd.f32 %v2205, %v2217
    %v2219 = vpop.f32.mrf.mxu0
    %2220 = vdwg.mxu0
    %2221 = vmatpush.bf16.msra.mxu0 %v1714
    %2222 = vmatpush.bf16.msra.mxu0 %v1706
    %2223 = vmatpush.bf16.msra.mxu0 %v1698
    %2224 = vmatpush.bf16.msra.mxu0 %v1690
    %2225 = vmatpush.bf16.msra.mxu0 %v1682
    %2226 = vmatpush.bf16.msra.mxu0 %v1674
    %2227 = vmatpush.bf16.msra.mxu0 %v1666
    %2228 = vmatpush.bf16.msra.mxu0 %v1658
    %2229 = vmatmul.bf16.gmra.mxu0 %v868
    %v2230 = vpop.f32.mrf.mxu0
    %v2231 = vadd.f32 %v874, %v2230
    %v2232 = vpop.f32.mrf.mxu0
    %2233 = vdwg.mxu0
    %2234 = vmatpush.bf16.msra.mxu0 %v1778
    %2235 = vmatpush.bf16.msra.mxu0 %v1770
    %2236 = vmatpush.bf16.msra.mxu0 %v1762
    %2237 = vmatpush.bf16.msra.mxu0 %v1754
    %2238 = vmatpush.bf16.msra.mxu0 %v1746
    %2239 = vmatpush.bf16.msra.mxu0 %v1738
    %2240 = vmatpush.bf16.msra.mxu0 %v1730
    %2241 = vmatpush.bf16.msra.mxu0 %v1722
    %2242 = vmatmul.bf16.gmra.mxu0 %v869
    %v2243 = vpop.f32.mrf.mxu0
    %v2244 = vadd.f32 %v2231, %v2243
    %v2245 = vpop.f32.mrf.mxu0
    %2246 = vdwg.mxu0
    %2247 = vmatpush.bf16.msra.mxu0 %v1842
    %2248 = vmatpush.bf16.msra.mxu0 %v1834
    %2249 = vmatpush.bf16.msra.mxu0 %v1826
    %2250 = vmatpush.bf16.msra.mxu0 %v1818
    %2251 = vmatpush.bf16.msra.mxu0 %v1810
    %2252 = vmatpush.bf16.msra.mxu0 %v1802
    %2253 = vmatpush.bf16.msra.mxu0 %v1794
    %2254 = vmatpush.bf16.msra.mxu0 %v1786
    %2255 = vmatmul.bf16.gmra.mxu0 %v870
    %v2256 = vpop.f32.mrf.mxu0
    %v2257 = vadd.f32 %v2244, %v2256
    %v2258 = vpop.f32.mrf.mxu0
    %2259 = vdwg.mxu0
    %2260 = vmatpush.bf16.msra.mxu0 %v1906
    %2261 = vmatpush.bf16.msra.mxu0 %v1898
    %2262 = vmatpush.bf16.msra.mxu0 %v1890
    %2263 = vmatpush.bf16.msra.mxu0 %v1882
    %2264 = vmatpush.bf16.msra.mxu0 %v1874
    %2265 = vmatpush.bf16.msra.mxu0 %v1866
    %2266 = vmatpush.bf16.msra.mxu0 %v1858
    %2267 = vmatpush.bf16.msra.mxu0 %v1850
    %2268 = vmatmul.bf16.gmra.mxu0 %v871
    %v2269 = vpop.f32.mrf.mxu0
    %v2270 = vadd.f32 %v2257, %v2269
    %v2271 = vpop.f32.mrf.mxu0
    %2272 = vdwg.mxu0
    %2273 = vmatpush.bf16.msra.mxu0 %v1715
    %2274 = vmatpush.bf16.msra.mxu0 %v1707
    %2275 = vmatpush.bf16.msra.mxu0 %v1699
    %2276 = vmatpush.bf16.msra.mxu0 %v1691
    %2277 = vmatpush.bf16.msra.mxu0 %v1683
    %2278 = vmatpush.bf16.msra.mxu0 %v1675
    %2279 = vmatpush.bf16.msra.mxu0 %v1667
    %2280 = vmatpush.bf16.msra.mxu0 %v1659
    %2281 = vmatmul.bf16.gmra.mxu0 %v868
    %v2282 = vpop.f32.mrf.mxu0
    %v2283 = vadd.f32 %v875, %v2282
    %v2284 = vpop.f32.mrf.mxu0
    %2285 = vdwg.mxu0
    %2286 = vmatpush.bf16.msra.mxu0 %v1779
    %2287 = vmatpush.bf16.msra.mxu0 %v1771
    %2288 = vmatpush.bf16.msra.mxu0 %v1763
    %2289 = vmatpush.bf16.msra.mxu0 %v1755
    %2290 = vmatpush.bf16.msra.mxu0 %v1747
    %2291 = vmatpush.bf16.msra.mxu0 %v1739
    %2292 = vmatpush.bf16.msra.mxu0 %v1731
    %2293 = vmatpush.bf16.msra.mxu0 %v1723
    %2294 = vmatmul.bf16.gmra.mxu0 %v869
    %v2295 = vpop.f32.mrf.mxu0
    %v2296 = vadd.f32 %v2283, %v2295
    %v2297 = vpop.f32.mrf.mxu0
    %2298 = vdwg.mxu0
    %2299 = vmatpush.bf16.msra.mxu0 %v1843
    %2300 = vmatpush.bf16.msra.mxu0 %v1835
    %2301 = vmatpush.bf16.msra.mxu0 %v1827
    %2302 = vmatpush.bf16.msra.mxu0 %v1819
    %2303 = vmatpush.bf16.msra.mxu0 %v1811
    %2304 = vmatpush.bf16.msra.mxu0 %v1803
    %2305 = vmatpush.bf16.msra.mxu0 %v1795
    %2306 = vmatpush.bf16.msra.mxu0 %v1787
    %2307 = vmatmul.bf16.gmra.mxu0 %v870
    %v2308 = vpop.f32.mrf.mxu0
    %v2309 = vadd.f32 %v2296, %v2308
    %v2310 = vpop.f32.mrf.mxu0
    %2311 = vdwg.mxu0
    %2312 = vmatpush.bf16.msra.mxu0 %v1907
    %2313 = vmatpush.bf16.msra.mxu0 %v1899
    %2314 = vmatpush.bf16.msra.mxu0 %v1891
    %2315 = vmatpush.bf16.msra.mxu0 %v1883
    %2316 = vmatpush.bf16.msra.mxu0 %v1875
    %2317 = vmatpush.bf16.msra.mxu0 %v1867
    %2318 = vmatpush.bf16.msra.mxu0 %v1859
    %2319 = vmatpush.bf16.msra.mxu0 %v1851
    %2320 = vmatmul.bf16.gmra.mxu0 %v871
    %v2321 = vpop.f32.mrf.mxu0
    %v2322 = vadd.f32 %v2309, %v2321
    %v2323 = vpop.f32.mrf.mxu0
    %2324 = vdwg.mxu0
    %2325 = vmatpush.bf16.msra.mxu0 %v1716
    %2326 = vmatpush.bf16.msra.mxu0 %v1708
    %2327 = vmatpush.bf16.msra.mxu0 %v1700
    %2328 = vmatpush.bf16.msra.mxu0 %v1692
    %2329 = vmatpush.bf16.msra.mxu0 %v1684
    %2330 = vmatpush.bf16.msra.mxu0 %v1676
    %2331 = vmatpush.bf16.msra.mxu0 %v1668
    %2332 = vmatpush.bf16.msra.mxu0 %v1660
    %2333 = vmatmul.bf16.gmra.mxu0 %v868
    %v2334 = vpop.f32.mrf.mxu0
    %v2335 = vadd.f32 %v876, %v2334
    %v2336 = vpop.f32.mrf.mxu0
    %2337 = vdwg.mxu0
    %2338 = vmatpush.bf16.msra.mxu0 %v1780
    %2339 = vmatpush.bf16.msra.mxu0 %v1772
    %2340 = vmatpush.bf16.msra.mxu0 %v1764
    %2341 = vmatpush.bf16.msra.mxu0 %v1756
    %2342 = vmatpush.bf16.msra.mxu0 %v1748
    %2343 = vmatpush.bf16.msra.mxu0 %v1740
    %2344 = vmatpush.bf16.msra.mxu0 %v1732
    %2345 = vmatpush.bf16.msra.mxu0 %v1724
    %2346 = vmatmul.bf16.gmra.mxu0 %v869
    %v2347 = vpop.f32.mrf.mxu0
    %v2348 = vadd.f32 %v2335, %v2347
    %v2349 = vpop.f32.mrf.mxu0
    %2350 = vdwg.mxu0
    %2351 = vmatpush.bf16.msra.mxu0 %v1844
    %2352 = vmatpush.bf16.msra.mxu0 %v1836
    %2353 = vmatpush.bf16.msra.mxu0 %v1828
    %2354 = vmatpush.bf16.msra.mxu0 %v1820
    %2355 = vmatpush.bf16.msra.mxu0 %v1812
    %2356 = vmatpush.bf16.msra.mxu0 %v1804
    %2357 = vmatpush.bf16.msra.mxu0 %v1796
    %2358 = vmatpush.bf16.msra.mxu0 %v1788
    %2359 = vmatmul.bf16.gmra.mxu0 %v870
    %v2360 = vpop.f32.mrf.mxu0
    %v2361 = vadd.f32 %v2348, %v2360
    %v2362 = vpop.f32.mrf.mxu0
    %2363 = vdwg.mxu0
    %2364 = vmatpush.bf16.msra.mxu0 %v1908
    %2365 = vmatpush.bf16.msra.mxu0 %v1900
    %2366 = vmatpush.bf16.msra.mxu0 %v1892
    %2367 = vmatpush.bf16.msra.mxu0 %v1884
    %2368 = vmatpush.bf16.msra.mxu0 %v1876
    %2369 = vmatpush.bf16.msra.mxu0 %v1868
    %2370 = vmatpush.bf16.msra.mxu0 %v1860
    %2371 = vmatpush.bf16.msra.mxu0 %v1852
    %2372 = vmatmul.bf16.gmra.mxu0 %v871
    %v2373 = vpop.f32.mrf.mxu0
    %v2374 = vadd.f32 %v2361, %v2373
    %v2375 = vpop.f32.mrf.mxu0
    %2376 = vdwg.mxu0
    %2377 = vmatpush.bf16.msra.mxu0 %v1717
    %2378 = vmatpush.bf16.msra.mxu0 %v1709
    %2379 = vmatpush.bf16.msra.mxu0 %v1701
    %2380 = vmatpush.bf16.msra.mxu0 %v1693
    %2381 = vmatpush.bf16.msra.mxu0 %v1685
    %2382 = vmatpush.bf16.msra.mxu0 %v1677
    %2383 = vmatpush.bf16.msra.mxu0 %v1669
    %2384 = vmatpush.bf16.msra.mxu0 %v1661
    %2385 = vmatmul.bf16.gmra.mxu0 %v868
    %v2386 = vpop.f32.mrf.mxu0
    %v2387 = vadd.f32 %v877, %v2386
    %v2388 = vpop.f32.mrf.mxu0
    %2389 = vdwg.mxu0
    %2390 = vmatpush.bf16.msra.mxu0 %v1781
    %2391 = vmatpush.bf16.msra.mxu0 %v1773
    %2392 = vmatpush.bf16.msra.mxu0 %v1765
    %2393 = vmatpush.bf16.msra.mxu0 %v1757
    %2394 = vmatpush.bf16.msra.mxu0 %v1749
    %2395 = vmatpush.bf16.msra.mxu0 %v1741
    %2396 = vmatpush.bf16.msra.mxu0 %v1733
    %2397 = vmatpush.bf16.msra.mxu0 %v1725
    %2398 = vmatmul.bf16.gmra.mxu0 %v869
    %v2399 = vpop.f32.mrf.mxu0
    %v2400 = vadd.f32 %v2387, %v2399
    %v2401 = vpop.f32.mrf.mxu0
    %2402 = vdwg.mxu0
    %2403 = vmatpush.bf16.msra.mxu0 %v1845
    %2404 = vmatpush.bf16.msra.mxu0 %v1837
    %2405 = vmatpush.bf16.msra.mxu0 %v1829
    %2406 = vmatpush.bf16.msra.mxu0 %v1821
    %2407 = vmatpush.bf16.msra.mxu0 %v1813
    %2408 = vmatpush.bf16.msra.mxu0 %v1805
    %2409 = vmatpush.bf16.msra.mxu0 %v1797
    %2410 = vmatpush.bf16.msra.mxu0 %v1789
    %2411 = vmatmul.bf16.gmra.mxu0 %v870
    %v2412 = vpop.f32.mrf.mxu0
    %v2413 = vadd.f32 %v2400, %v2412
    %v2414 = vpop.f32.mrf.mxu0
    %2415 = vdwg.mxu0
    %2416 = vmatpush.bf16.msra.mxu0 %v1909
    %2417 = vmatpush.bf16.msra.mxu0 %v1901
    %2418 = vmatpush.bf16.msra.mxu0 %v1893
    %2419 = vmatpush.bf16.msra.mxu0 %v1885
    %2420 = vmatpush.bf16.msra.mxu0 %v1877
    %2421 = vmatpush.bf16.msra.mxu0 %v1869
    %2422 = vmatpush.bf16.msra.mxu0 %v1861
    %2423 = vmatpush.bf16.msra.mxu0 %v1853
    %2424 = vmatmul.bf16.gmra.mxu0 %v871
    %v2425 = vpop.f32.mrf.mxu0
    %v2426 = vadd.f32 %v2413, %v2425
    %v2427 = vpop.f32.mrf.mxu0
    %2428 = vdwg.mxu0
    %2429 = vmatpush.bf16.msra.mxu0 %v1718
    %2430 = vmatpush.bf16.msra.mxu0 %v1710
    %2431 = vmatpush.bf16.msra.mxu0 %v1702
    %2432 = vmatpush.bf16.msra.mxu0 %v1694
    %2433 = vmatpush.bf16.msra.mxu0 %v1686
    %2434 = vmatpush.bf16.msra.mxu0 %v1678
    %2435 = vmatpush.bf16.msra.mxu0 %v1670
    %2436 = vmatpush.bf16.msra.mxu0 %v1662
    %2437 = vmatmul.bf16.gmra.mxu0 %v868
    %v2438 = vpop.f32.mrf.mxu0
    %v2439 = vadd.f32 %v878, %v2438
    %v2440 = vpop.f32.mrf.mxu0
    %2441 = vdwg.mxu0
    %2442 = vmatpush.bf16.msra.mxu0 %v1782
    %2443 = vmatpush.bf16.msra.mxu0 %v1774
    %2444 = vmatpush.bf16.msra.mxu0 %v1766
    %2445 = vmatpush.bf16.msra.mxu0 %v1758
    %2446 = vmatpush.bf16.msra.mxu0 %v1750
    %2447 = vmatpush.bf16.msra.mxu0 %v1742
    %2448 = vmatpush.bf16.msra.mxu0 %v1734
    %2449 = vmatpush.bf16.msra.mxu0 %v1726
    %2450 = vmatmul.bf16.gmra.mxu0 %v869
    %v2451 = vpop.f32.mrf.mxu0
    %v2452 = vadd.f32 %v2439, %v2451
    %v2453 = vpop.f32.mrf.mxu0
    %2454 = vdwg.mxu0
    %2455 = vmatpush.bf16.msra.mxu0 %v1846
    %2456 = vmatpush.bf16.msra.mxu0 %v1838
    %2457 = vmatpush.bf16.msra.mxu0 %v1830
    %2458 = vmatpush.bf16.msra.mxu0 %v1822
    %2459 = vmatpush.bf16.msra.mxu0 %v1814
    %2460 = vmatpush.bf16.msra.mxu0 %v1806
    %2461 = vmatpush.bf16.msra.mxu0 %v1798
    %2462 = vmatpush.bf16.msra.mxu0 %v1790
    %2463 = vmatmul.bf16.gmra.mxu0 %v870
    %v2464 = vpop.f32.mrf.mxu0
    %v2465 = vadd.f32 %v2452, %v2464
    %v2466 = vpop.f32.mrf.mxu0
    %2467 = vdwg.mxu0
    %2468 = vmatpush.bf16.msra.mxu0 %v1910
    %2469 = vmatpush.bf16.msra.mxu0 %v1902
    %2470 = vmatpush.bf16.msra.mxu0 %v1894
    %2471 = vmatpush.bf16.msra.mxu0 %v1886
    %2472 = vmatpush.bf16.msra.mxu0 %v1878
    %2473 = vmatpush.bf16.msra.mxu0 %v1870
    %2474 = vmatpush.bf16.msra.mxu0 %v1862
    %2475 = vmatpush.bf16.msra.mxu0 %v1854
    %2476 = vmatmul.bf16.gmra.mxu0 %v871
    %v2477 = vpop.f32.mrf.mxu0
    %v2478 = vadd.f32 %v2465, %v2477
    %v2479 = vpop.f32.mrf.mxu0
    %2480 = vdwg.mxu0
    %2481 = vmatpush.bf16.msra.mxu0 %v1719
    %2482 = vmatpush.bf16.msra.mxu0 %v1711
    %2483 = vmatpush.bf16.msra.mxu0 %v1703
    %2484 = vmatpush.bf16.msra.mxu0 %v1695
    %2485 = vmatpush.bf16.msra.mxu0 %v1687
    %2486 = vmatpush.bf16.msra.mxu0 %v1679
    %2487 = vmatpush.bf16.msra.mxu0 %v1671
    %2488 = vmatpush.bf16.msra.mxu0 %v1663
    %2489 = vmatmul.bf16.gmra.mxu0 %v868
    %v2490 = vpop.f32.mrf.mxu0
    %v2491 = vadd.f32 %v879, %v2490
    %v2492 = vpop.f32.mrf.mxu0
    %2493 = vdwg.mxu0
    %2494 = vmatpush.bf16.msra.mxu0 %v1783
    %2495 = vmatpush.bf16.msra.mxu0 %v1775
    %2496 = vmatpush.bf16.msra.mxu0 %v1767
    %2497 = vmatpush.bf16.msra.mxu0 %v1759
    %2498 = vmatpush.bf16.msra.mxu0 %v1751
    %2499 = vmatpush.bf16.msra.mxu0 %v1743
    %2500 = vmatpush.bf16.msra.mxu0 %v1735
    %2501 = vmatpush.bf16.msra.mxu0 %v1727
    %2502 = vmatmul.bf16.gmra.mxu0 %v869
    %v2503 = vpop.f32.mrf.mxu0
    %v2504 = vadd.f32 %v2491, %v2503
    %v2505 = vpop.f32.mrf.mxu0
    %2506 = vdwg.mxu0
    %2507 = vmatpush.bf16.msra.mxu0 %v1847
    %2508 = vmatpush.bf16.msra.mxu0 %v1839
    %2509 = vmatpush.bf16.msra.mxu0 %v1831
    %2510 = vmatpush.bf16.msra.mxu0 %v1823
    %2511 = vmatpush.bf16.msra.mxu0 %v1815
    %2512 = vmatpush.bf16.msra.mxu0 %v1807
    %2513 = vmatpush.bf16.msra.mxu0 %v1799
    %2514 = vmatpush.bf16.msra.mxu0 %v1791
    %2515 = vmatmul.bf16.gmra.mxu0 %v870
    %v2516 = vpop.f32.mrf.mxu0
    %v2517 = vadd.f32 %v2504, %v2516
    %v2518 = vpop.f32.mrf.mxu0
    %2519 = vdwg.mxu0
    %2520 = vmatpush.bf16.msra.mxu0 %v1911
    %2521 = vmatpush.bf16.msra.mxu0 %v1903
    %2522 = vmatpush.bf16.msra.mxu0 %v1895
    %2523 = vmatpush.bf16.msra.mxu0 %v1887
    %2524 = vmatpush.bf16.msra.mxu0 %v1879
    %2525 = vmatpush.bf16.msra.mxu0 %v1871
    %2526 = vmatpush.bf16.msra.mxu0 %v1863
    %2527 = vmatpush.bf16.msra.mxu0 %v1855
    %2528 = vmatmul.bf16.gmra.mxu0 %v871
    %v2529 = vpop.f32.mrf.mxu0
    %v2530 = vadd.f32 %v2517, %v2529
    %v2531 = vpop.f32.mrf.mxu0
    %2532 = vdwg.mxu0
    %2533 = vmatpush.bf16.msra.mxu0 %v1720
    %2534 = vmatpush.bf16.msra.mxu0 %v1712
    %2535 = vmatpush.bf16.msra.mxu0 %v1704
    %2536 = vmatpush.bf16.msra.mxu0 %v1696
    %2537 = vmatpush.bf16.msra.mxu0 %v1688
    %2538 = vmatpush.bf16.msra.mxu0 %v1680
    %2539 = vmatpush.bf16.msra.mxu0 %v1672
    %2540 = vmatpush.bf16.msra.mxu0 %v1664
    %2541 = vmatmul.bf16.gmra.mxu0 %v868
    %v2542 = vpop.f32.mrf.mxu0
    %v2543 = vadd.f32 %v880, %v2542
    %v2544 = vpop.f32.mrf.mxu0
    %2545 = vdwg.mxu0
    %2546 = vmatpush.bf16.msra.mxu0 %v1784
    %2547 = vmatpush.bf16.msra.mxu0 %v1776
    %2548 = vmatpush.bf16.msra.mxu0 %v1768
    %2549 = vmatpush.bf16.msra.mxu0 %v1760
    %2550 = vmatpush.bf16.msra.mxu0 %v1752
    %2551 = vmatpush.bf16.msra.mxu0 %v1744
    %2552 = vmatpush.bf16.msra.mxu0 %v1736
    %2553 = vmatpush.bf16.msra.mxu0 %v1728
    %2554 = vmatmul.bf16.gmra.mxu0 %v869
    %v2555 = vpop.f32.mrf.mxu0
    %v2556 = vadd.f32 %v2543, %v2555
    %v2557 = vpop.f32.mrf.mxu0
    %2558 = vdwg.mxu0
    %2559 = vmatpush.bf16.msra.mxu0 %v1848
    %2560 = vmatpush.bf16.msra.mxu0 %v1840
    %2561 = vmatpush.bf16.msra.mxu0 %v1832
    %2562 = vmatpush.bf16.msra.mxu0 %v1824
    %2563 = vmatpush.bf16.msra.mxu0 %v1816
    %2564 = vmatpush.bf16.msra.mxu0 %v1808
    %2565 = vmatpush.bf16.msra.mxu0 %v1800
    %2566 = vmatpush.bf16.msra.mxu0 %v1792
    %2567 = vmatmul.bf16.gmra.mxu0 %v870
    %v2568 = vpop.f32.mrf.mxu0
    %v2569 = vadd.f32 %v2556, %v2568
    %v2570 = vpop.f32.mrf.mxu0
    %2571 = vdwg.mxu0
    %2572 = vmatpush.bf16.msra.mxu0 %v1912
    %2573 = vmatpush.bf16.msra.mxu0 %v1904
    %2574 = vmatpush.bf16.msra.mxu0 %v1896
    %2575 = vmatpush.bf16.msra.mxu0 %v1888
    %2576 = vmatpush.bf16.msra.mxu0 %v1880
    %2577 = vmatpush.bf16.msra.mxu0 %v1872
    %2578 = vmatpush.bf16.msra.mxu0 %v1864
    %2579 = vmatpush.bf16.msra.mxu0 %v1856
    %2580 = vmatmul.bf16.gmra.mxu0 %v871
    %v2581 = vpop.f32.mrf.mxu0
    %v2582 = vadd.f32 %v2569, %v2581
    %v2583 = vpop.f32.mrf.mxu0
    %2584 = vdwg.mxu0
    %v2585 = vmax.f32 %v2218, 0.0
    %v2586 = vmax.f32 %v2270, 0.0
    %v2587 = vmax.f32 %v2322, 0.0
    %v2588 = vmax.f32 %v2374, 0.0
    %v2589 = vmax.f32 %v2426, 0.0
    %v2590 = vmax.f32 %v2478, 0.0
    %v2591 = vmax.f32 %v2530, 0.0
    %v2592 = vmax.f32 %v2582, 0.0
    %v2593 = vld [vmem:[#allocation16] sm:$0xff]
    %v2594 = vld [vmem:[#allocation16 + $0x8] sm:$0xff]
    %v2595 = vld [vmem:[#allocation16 + $0x10] sm:$0xff]
    %v2596 = vld [vmem:[#allocation16 + $0x18] sm:$0xf]
    %v2597 = vld [vmem:[#allocation16 + $0x1c] sm:$0xff]
    %v2598 = vld [vmem:[#allocation16 + $0x24] sm:$0xff]
    %v2599 = vld [vmem:[#allocation16 + $0x2c] sm:$0xff]
    %v2600 = vld [vmem:[#allocation16 + $0x34] sm:$0xf]
    %v2601 = vld [vmem:[#allocation16 + $0x38] sm:$0xff]
    %v2602 = vld [vmem:[#allocation16 + $0x40] sm:$0xff]
    %v2603 = vld [vmem:[#allocation16 + $0x48] sm:$0xff]
    %v2604 = vld [vmem:[#allocation16 + $0x50] sm:$0xf]
    %v2605 = vld [vmem:[#allocation16 + $0x54] sm:$0xff]
    %v2606 = vld [vmem:[#allocation16 + $0x5c] sm:$0xff]
    %v2607 = vld [vmem:[#allocation16 + $0x64] sm:$0xff]
    %v2608 = vld [vmem:[#allocation16 + $0x6c] sm:$0xf]
    %v2609 = vld [vmem:[#allocation16 + $0x70] sm:$0xff]
    %v2610 = vld [vmem:[#allocation16 + $0x78] sm:$0xff]
    %v2611 = vld [vmem:[#allocation16 + $0x80] sm:$0xff]
    %v2612 = vld [vmem:[#allocation16 + $0x88] sm:$0xf]
    %v2613 = vld [vmem:[#allocation16 + $0x8c] sm:$0xff]
    %v2614 = vld [vmem:[#allocation16 + $0x94] sm:$0xff]
    %v2615 = vld [vmem:[#allocation16 + $0x9c] sm:$0xff]
    %v2616 = vld [vmem:[#allocation16 + $0xa4] sm:$0xf]
    %v2617 = vld [vmem:[#allocation16 + $0xa8] sm:$0xff]
    %v2618 = vld [vmem:[#allocation16 + $0xb0] sm:$0xff]
    %v2619 = vld [vmem:[#allocation16 + $0xb8] sm:$0xff]
    %v2620 = vld [vmem:[#allocation16 + $0xc0] sm:$0xf]
    %v2621 = vld [vmem:[#allocation16 + $0xc4] sm:$0xff]
    %v2622 = vld [vmem:[#allocation16 + $0xcc] sm:$0xff]
    %v2623 = vld [vmem:[#allocation16 + $0xd4] sm:$0xff]
    %v2624 = vld [vmem:[#allocation16 + $0xdc] sm:$0xf]
    %v2625 = vld [vmem:[#allocation16 + $0xe0] sm:$0xff]
    %v2626 = vld [vmem:[#allocation16 + $0xe8] sm:$0xff]
    %v2627 = vld [vmem:[#allocation16 + $0xf0] sm:$0xff]
    %v2628 = vld [vmem:[#allocation16 + $0xf8] sm:$0xf]
    %v2629 = vld [vmem:[#allocation16 + $0xfc] sm:$0xff]
    %v2630 = vld [vmem:[#allocation16 + $0x104] sm:$0xff]
    %v2631 = vld [vmem:[#allocation16 + $0x10c] sm:$0xff]
    %v2632 = vld [vmem:[#allocation16 + $0x114] sm:$0xf]
    %v2633 = vld [vmem:[#allocation16 + $0x118] sm:$0xff]
    %v2634 = vld [vmem:[#allocation16 + $0x120] sm:$0xff]
    %v2635 = vld [vmem:[#allocation16 + $0x128] sm:$0xff]
    %v2636 = vld [vmem:[#allocation16 + $0x130] sm:$0xf]
    %v2637 = vld [vmem:[#allocation16 + $0x134] sm:$0xff]
    %v2638 = vld [vmem:[#allocation16 + $0x13c] sm:$0xff]
    %v2639 = vld [vmem:[#allocation16 + $0x144] sm:$0xff]
    %v2640 = vld [vmem:[#allocation16 + $0x14c] sm:$0xf]
    %v2641 = vld [vmem:[#allocation16 + $0x150] sm:$0xff]
    %v2642 = vld [vmem:[#allocation16 + $0x158] sm:$0xff]
    %v2643 = vld [vmem:[#allocation16 + $0x160] sm:$0xff]
    %v2644 = vld [vmem:[#allocation16 + $0x168] sm:$0xf]
    %v2645 = vld [vmem:[#allocation16 + $0x16c] sm:$0xff]
    %v2646 = vld [vmem:[#allocation16 + $0x174] sm:$0xff]
    %v2647 = vld [vmem:[#allocation16 + $0x17c] sm:$0xff]
    %v2648 = vld [vmem:[#allocation16 + $0x184] sm:$0xf]
    %v2649 = vld [vmem:[#allocation16 + $0x188] sm:$0xff]
    %v2650 = vld [vmem:[#allocation16 + $0x190] sm:$0xff]
    %v2651 = vld [vmem:[#allocation16 + $0x198] sm:$0xff]
    %v2652 = vld [vmem:[#allocation16 + $0x1a0] sm:$0xf]
    %v2653 = vld [vmem:[#allocation16 + $0x1a4] sm:$0xff]
    %v2654 = vld [vmem:[#allocation16 + $0x1ac] sm:$0xff]
    %v2655 = vld [vmem:[#allocation16 + $0x1b4] sm:$0xff]
    %v2656 = vld [vmem:[#allocation16 + $0x1bc] sm:$0xf]
    %v2657 = vld [vmem:[#allocation16 + $0x1c0] sm:$0xff]
    %v2658 = vld [vmem:[#allocation16 + $0x1c8] sm:$0xff]
    %v2659 = vld [vmem:[#allocation16 + $0x1d0] sm:$0xff]
    %v2660 = vld [vmem:[#allocation16 + $0x1d8] sm:$0xf]
    %v2661 = vld [vmem:[#allocation16 + $0x1dc] sm:$0xff]
    %v2662 = vld [vmem:[#allocation16 + $0x1e4] sm:$0xff]
    %v2663 = vld [vmem:[#allocation16 + $0x1ec] sm:$0xff]
    %v2664 = vld [vmem:[#allocation16 + $0x1f4] sm:$0xf]
    %v2665 = vld [vmem:[#allocation16 + $0x1f8] sm:$0xff]
    %v2666 = vld [vmem:[#allocation16 + $0x200] sm:$0xff]
    %v2667 = vld [vmem:[#allocation16 + $0x208] sm:$0xff]
    %v2668 = vld [vmem:[#allocation16 + $0x210] sm:$0xf]
    %v2669 = vld [vmem:[#allocation16 + $0x214] sm:$0xff]
    %v2670 = vld [vmem:[#allocation16 + $0x21c] sm:$0xff]
    %v2671 = vld [vmem:[#allocation16 + $0x224] sm:$0xff]
    %v2672 = vld [vmem:[#allocation16 + $0x22c] sm:$0xf]
    %v2673 = vld [vmem:[#allocation16 + $0x230] sm:$0xff]
    %v2674 = vld [vmem:[#allocation16 + $0x238] sm:$0xff]
    %v2675 = vld [vmem:[#allocation16 + $0x240] sm:$0xff]
    %v2676 = vld [vmem:[#allocation16 + $0x248] sm:$0xf]
    %v2677 = vld [vmem:[#allocation16 + $0x24c] sm:$0xff]
    %v2678 = vld [vmem:[#allocation16 + $0x254] sm:$0xff]
    %v2679 = vld [vmem:[#allocation16 + $0x25c] sm:$0xff]
    %v2680 = vld [vmem:[#allocation16 + $0x264] sm:$0xf]
    %v2681 = vld [vmem:[#allocation16 + $0x268] sm:$0xff]
    %v2682 = vld [vmem:[#allocation16 + $0x270] sm:$0xff]
    %v2683 = vld [vmem:[#allocation16 + $0x278] sm:$0xff]
    %v2684 = vld [vmem:[#allocation16 + $0x280] sm:$0xf]
    %v2685 = vld [vmem:[#allocation16 + $0x284] sm:$0xff]
    %v2686 = vld [vmem:[#allocation16 + $0x28c] sm:$0xff]
    %v2687 = vld [vmem:[#allocation16 + $0x294] sm:$0xff]
    %v2688 = vld [vmem:[#allocation16 + $0x29c] sm:$0xf]
    %v2689 = vld [vmem:[#allocation16 + $0x2a0] sm:$0xff]
    %v2690 = vld [vmem:[#allocation16 + $0x2a8] sm:$0xff]
    %v2691 = vld [vmem:[#allocation16 + $0x2b0] sm:$0xff]
    %v2692 = vld [vmem:[#allocation16 + $0x2b8] sm:$0xf]
    %v2693 = vld [vmem:[#allocation16 + $0x2bc] sm:$0xff]
    %v2694 = vld [vmem:[#allocation16 + $0x2c4] sm:$0xff]
    %v2695 = vld [vmem:[#allocation16 + $0x2cc] sm:$0xff]
    %v2696 = vld [vmem:[#allocation16 + $0x2d4] sm:$0xf]
    %v2697 = vld [vmem:[#allocation16 + $0x2d8] sm:$0xff]
    %v2698 = vld [vmem:[#allocation16 + $0x2e0] sm:$0xff]
    %v2699 = vld [vmem:[#allocation16 + $0x2e8] sm:$0xff]
    %v2700 = vld [vmem:[#allocation16 + $0x2f0] sm:$0xf]
    %v2701 = vld [vmem:[#allocation16 + $0x2f4] sm:$0xff]
    %v2702 = vld [vmem:[#allocation16 + $0x2fc] sm:$0xff]
    %v2703 = vld [vmem:[#allocation16 + $0x304] sm:$0xff]
    %v2704 = vld [vmem:[#allocation16 + $0x30c] sm:$0xf]
    %v2705 = vld [vmem:[#allocation16 + $0x310] sm:$0xff]
    %v2706 = vld [vmem:[#allocation16 + $0x318] sm:$0xff]
    %v2707 = vld [vmem:[#allocation16 + $0x320] sm:$0xff]
    %v2708 = vld [vmem:[#allocation16 + $0x328] sm:$0xf]
    %v2709 = vld [vmem:[#allocation16 + $0x32c] sm:$0xff]
    %v2710 = vld [vmem:[#allocation16 + $0x334] sm:$0xff]
    %v2711 = vld [vmem:[#allocation16 + $0x33c] sm:$0xff]
    %v2712 = vld [vmem:[#allocation16 + $0x344] sm:$0xf]
    %v2713 = vld [vmem:[#allocation16 + $0x348] sm:$0xff]
    %v2714 = vld [vmem:[#allocation16 + $0x350] sm:$0xff]
    %v2715 = vld [vmem:[#allocation16 + $0x358] sm:$0xff]
    %v2716 = vld [vmem:[#allocation16 + $0x360] sm:$0xf]
    %v2717 = vld [vmem:[#allocation16 + $0x364] sm:$0xff]
    %v2718 = vld [vmem:[#allocation16 + $0x36c] sm:$0xff]
    %v2719 = vld [vmem:[#allocation16 + $0x374] sm:$0xff]
    %v2720 = vld [vmem:[#allocation16 + $0x37c] sm:$0xf]
    %v2721 = vld [vmem:[#allocation16 + $0x380] sm:$0xff]
    %v2722 = vld [vmem:[#allocation16 + $0x388] sm:$0xff]
    %v2723 = vld [vmem:[#allocation16 + $0x390] sm:$0xff]
    %v2724 = vld [vmem:[#allocation16 + $0x398] sm:$0xf]
    %v2725 = vld [vmem:[#allocation16 + $0x39c] sm:$0xff]
    %v2726 = vld [vmem:[#allocation16 + $0x3a4] sm:$0xff]
    %v2727 = vld [vmem:[#allocation16 + $0x3ac] sm:$0xff]
    %v2728 = vld [vmem:[#allocation16 + $0x3b4] sm:$0xf]
    %v2729 = vld [vmem:[#allocation16 + $0x3b8] sm:$0xff]
    %v2730 = vld [vmem:[#allocation16 + $0x3c0] sm:$0xff]
    %v2731 = vld [vmem:[#allocation16 + $0x3c8] sm:$0xff]
    %v2732 = vld [vmem:[#allocation16 + $0x3d0] sm:$0xf]
    %v2733 = vld [vmem:[#allocation16 + $0x3d4] sm:$0xff]
    %v2734 = vld [vmem:[#allocation16 + $0x3dc] sm:$0xff]
    %v2735 = vld [vmem:[#allocation16 + $0x3e4] sm:$0xff]
    %v2736 = vld [vmem:[#allocation16 + $0x3ec] sm:$0xf]
    %v2737 = vld [vmem:[#allocation16 + $0x3f0] sm:$0xff]
    %v2738 = vld [vmem:[#allocation16 + $0x3f8] sm:$0xff]
    %v2739 = vld [vmem:[#allocation16 + $0x400] sm:$0xff]
    %v2740 = vld [vmem:[#allocation16 + $0x408] sm:$0xf]
    %v2741 = vld [vmem:[#allocation16 + $0x40c] sm:$0xff]
    %v2742 = vld [vmem:[#allocation16 + $0x414] sm:$0xff]
    %v2743 = vld [vmem:[#allocation16 + $0x41c] sm:$0xff]
    %v2744 = vld [vmem:[#allocation16 + $0x424] sm:$0xf]
    %v2745 = vld [vmem:[#allocation16 + $0x428] sm:$0xff]
    %v2746 = vld [vmem:[#allocation16 + $0x430] sm:$0xff]
    %v2747 = vld [vmem:[#allocation16 + $0x438] sm:$0xff]
    %v2748 = vld [vmem:[#allocation16 + $0x440] sm:$0xf]
    %v2749 = vld [vmem:[#allocation16 + $0x444] sm:$0xff]
    %v2750 = vld [vmem:[#allocation16 + $0x44c] sm:$0xff]
    %v2751 = vld [vmem:[#allocation16 + $0x454] sm:$0xff]
    %v2752 = vld [vmem:[#allocation16 + $0x45c] sm:$0xf]
    %v2753 = vld [vmem:[#allocation16 + $0x460] sm:$0xff]
    %v2754 = vld [vmem:[#allocation16 + $0x468] sm:$0xff]
    %v2755 = vld [vmem:[#allocation16 + $0x470] sm:$0xff]
    %v2756 = vld [vmem:[#allocation16 + $0x478] sm:$0xf]
    %v2757 = vld [vmem:[#allocation16 + $0x47c] sm:$0xff]
    %v2758 = vld [vmem:[#allocation16 + $0x484] sm:$0xff]
    %v2759 = vld [vmem:[#allocation16 + $0x48c] sm:$0xff]
    %v2760 = vld [vmem:[#allocation16 + $0x494] sm:$0xf]
    %v2761 = vld [vmem:[#allocation16 + $0x498] sm:$0xff]
    %v2762 = vld [vmem:[#allocation16 + $0x4a0] sm:$0xff]
    %v2763 = vld [vmem:[#allocation16 + $0x4a8] sm:$0xff]
    %v2764 = vld [vmem:[#allocation16 + $0x4b0] sm:$0xf]
    %v2765 = vld [vmem:[#allocation16 + $0x4b4] sm:$0xff]
    %v2766 = vld [vmem:[#allocation16 + $0x4bc] sm:$0xff]
    %v2767 = vld [vmem:[#allocation16 + $0x4c4] sm:$0xff]
    %v2768 = vld [vmem:[#allocation16 + $0x4cc] sm:$0xf]
    %v2769 = vld [vmem:[#allocation16 + $0x4d0] sm:$0xff]
    %v2770 = vld [vmem:[#allocation16 + $0x4d8] sm:$0xff]
    %v2771 = vld [vmem:[#allocation16 + $0x4e0] sm:$0xff]
    %v2772 = vld [vmem:[#allocation16 + $0x4e8] sm:$0xf]
    %v2773 = vld [vmem:[#allocation16 + $0x4ec] sm:$0xff]
    %v2774 = vld [vmem:[#allocation16 + $0x4f4] sm:$0xff]
    %v2775 = vld [vmem:[#allocation16 + $0x4fc] sm:$0xff]
    %v2776 = vld [vmem:[#allocation16 + $0x504] sm:$0xf]
    %v2777 = vld [vmem:[#allocation16 + $0x508] sm:$0xff]
    %v2778 = vld [vmem:[#allocation16 + $0x510] sm:$0xff]
    %v2779 = vld [vmem:[#allocation16 + $0x518] sm:$0xff]
    %v2780 = vld [vmem:[#allocation16 + $0x520] sm:$0xf]
    %v2781 = vld [vmem:[#allocation16 + $0x524] sm:$0xff]
    %v2782 = vld [vmem:[#allocation16 + $0x52c] sm:$0xff]
    %v2783 = vld [vmem:[#allocation16 + $0x534] sm:$0xff]
    %v2784 = vld [vmem:[#allocation16 + $0x53c] sm:$0xf]
    %v2785 = vld [vmem:[#allocation16 + $0x540] sm:$0xff]
    %v2786 = vld [vmem:[#allocation16 + $0x548] sm:$0xff]
    %v2787 = vld [vmem:[#allocation16 + $0x550] sm:$0xff]
    %v2788 = vld [vmem:[#allocation16 + $0x558] sm:$0xf]
    %v2789 = vld [vmem:[#allocation16 + $0x55c] sm:$0xff]
    %v2790 = vld [vmem:[#allocation16 + $0x564] sm:$0xff]
    %v2791 = vld [vmem:[#allocation16 + $0x56c] sm:$0xff]
    %v2792 = vld [vmem:[#allocation16 + $0x574] sm:$0xf]
    %v2793 = vld [vmem:[#allocation16 + $0x578] sm:$0xff]
    %v2794 = vld [vmem:[#allocation16 + $0x580] sm:$0xff]
    %v2795 = vld [vmem:[#allocation16 + $0x588] sm:$0xff]
    %v2796 = vld [vmem:[#allocation16 + $0x590] sm:$0xf]
    %v2797 = vld [vmem:[#allocation16 + $0x594] sm:$0xff]
    %v2798 = vld [vmem:[#allocation16 + $0x59c] sm:$0xff]
    %v2799 = vld [vmem:[#allocation16 + $0x5a4] sm:$0xff]
    %v2800 = vld [vmem:[#allocation16 + $0x5ac] sm:$0xf]
    %v2801 = vld [vmem:[#allocation16 + $0x5b0] sm:$0xff]
    %v2802 = vld [vmem:[#allocation16 + $0x5b8] sm:$0xff]
    %v2803 = vld [vmem:[#allocation16 + $0x5c0] sm:$0xff]
    %v2804 = vld [vmem:[#allocation16 + $0x5c8] sm:$0xf]
    %v2805 = vld [vmem:[#allocation16 + $0x5cc] sm:$0xff]
    %v2806 = vld [vmem:[#allocation16 + $0x5d4] sm:$0xff]
    %v2807 = vld [vmem:[#allocation16 + $0x5dc] sm:$0xff]
    %v2808 = vld [vmem:[#allocation16 + $0x5e4] sm:$0xf]
    %v2809 = vld [vmem:[#allocation16 + $0x5e8] sm:$0xff]
    %v2810 = vld [vmem:[#allocation16 + $0x5f0] sm:$0xff]
    %v2811 = vld [vmem:[#allocation16 + $0x5f8] sm:$0xff]
    %v2812 = vld [vmem:[#allocation16 + $0x600] sm:$0xf]
    %v2813 = vld [vmem:[#allocation16 + $0x604] sm:$0xff]
    %v2814 = vld [vmem:[#allocation16 + $0x60c] sm:$0xff]
    %v2815 = vld [vmem:[#allocation16 + $0x614] sm:$0xff]
    %v2816 = vld [vmem:[#allocation16 + $0x61c] sm:$0xf]
    %v2817 = vld [vmem:[#allocation16 + $0x620] sm:$0xff]
    %v2818 = vld [vmem:[#allocation16 + $0x628] sm:$0xff]
    %v2819 = vld [vmem:[#allocation16 + $0x630] sm:$0xff]
    %v2820 = vld [vmem:[#allocation16 + $0x638] sm:$0xf]
    %v2821 = vld [vmem:[#allocation16 + $0x63c] sm:$0xff]
    %v2822 = vld [vmem:[#allocation16 + $0x644] sm:$0xff]
    %v2823 = vld [vmem:[#allocation16 + $0x64c] sm:$0xff]
    %v2824 = vld [vmem:[#allocation16 + $0x654] sm:$0xf]
    %v2825 = vld [vmem:[#allocation16 + $0x658] sm:$0xff]
    %v2826 = vld [vmem:[#allocation16 + $0x660] sm:$0xff]
    %v2827 = vld [vmem:[#allocation16 + $0x668] sm:$0xff]
    %v2828 = vld [vmem:[#allocation16 + $0x670] sm:$0xf]
    %v2829 = vld [vmem:[#allocation16 + $0x674] sm:$0xff]
    %v2830 = vld [vmem:[#allocation16 + $0x67c] sm:$0xff]
    %v2831 = vld [vmem:[#allocation16 + $0x684] sm:$0xff]
    %v2832 = vld [vmem:[#allocation16 + $0x68c] sm:$0xf]
    %v2833 = vld [vmem:[#allocation16 + $0x690] sm:$0xff]
    %v2834 = vld [vmem:[#allocation16 + $0x698] sm:$0xff]
    %v2835 = vld [vmem:[#allocation16 + $0x6a0] sm:$0xff]
    %v2836 = vld [vmem:[#allocation16 + $0x6a8] sm:$0xf]
    %v2837 = vld [vmem:[#allocation16 + $0x6ac] sm:$0xff]
    %v2838 = vld [vmem:[#allocation16 + $0x6b4] sm:$0xff]
    %v2839 = vld [vmem:[#allocation16 + $0x6bc] sm:$0xff]
    %v2840 = vld [vmem:[#allocation16 + $0x6c4] sm:$0xf]
    %v2841 = vld [vmem:[#allocation16 + $0x6c8] sm:$0xff]
    %v2842 = vld [vmem:[#allocation16 + $0x6d0] sm:$0xff]
    %v2843 = vld [vmem:[#allocation16 + $0x6d8] sm:$0xff]
    %v2844 = vld [vmem:[#allocation16 + $0x6e0] sm:$0xf]
    %v2845 = vld [vmem:[#allocation16 + $0x6e4] sm:$0xff]
    %v2846 = vld [vmem:[#allocation16 + $0x6ec] sm:$0xff]
    %v2847 = vld [vmem:[#allocation16 + $0x6f4] sm:$0xff]
    %v2848 = vld [vmem:[#allocation16 + $0x6fc] sm:$0xf]
    %v2849 = vld [vmem:[#allocation16 + $0x700] sm:$0xff]
    %v2850 = vld [vmem:[#allocation16 + $0x708] sm:$0xff]
    %v2851 = vld [vmem:[#allocation16 + $0x710] sm:$0xff]
    %v2852 = vld [vmem:[#allocation16 + $0x718] sm:$0xf]
    %v2853 = vld [vmem:[#allocation16 + $0x71c] sm:$0xff]
    %v2854 = vld [vmem:[#allocation16 + $0x724] sm:$0xff]
    %v2855 = vld [vmem:[#allocation16 + $0x72c] sm:$0xff]
    %v2856 = vld [vmem:[#allocation16 + $0x734] sm:$0xf]
    %v2857 = vld [vmem:[#allocation16 + $0x738] sm:$0xff]
    %v2858 = vld [vmem:[#allocation16 + $0x740] sm:$0xff]
    %v2859 = vld [vmem:[#allocation16 + $0x748] sm:$0xff]
    %v2860 = vld [vmem:[#allocation16 + $0x750] sm:$0xf]
    %v2861 = vld [vmem:[#allocation16 + $0x754] sm:$0xff]
    %v2862 = vld [vmem:[#allocation16 + $0x75c] sm:$0xff]
    %v2863 = vld [vmem:[#allocation16 + $0x764] sm:$0xff]
    %v2864 = vld [vmem:[#allocation16 + $0x76c] sm:$0xf]
    %v2865 = vld [vmem:[#allocation16 + $0x770] sm:$0xff]
    %v2866 = vld [vmem:[#allocation16 + $0x778] sm:$0xff]
    %v2867 = vld [vmem:[#allocation16 + $0x780] sm:$0xff]
    %v2868 = vld [vmem:[#allocation16 + $0x788] sm:$0xf]
    %v2869 = vld [vmem:[#allocation16 + $0x78c] sm:$0xff]
    %v2870 = vld [vmem:[#allocation16 + $0x794] sm:$0xff]
    %v2871 = vld [vmem:[#allocation16 + $0x79c] sm:$0xff]
    %v2872 = vld [vmem:[#allocation16 + $0x7a4] sm:$0xf]
    %v2873 = vld [vmem:[#allocation16 + $0x7a8] sm:$0xff]
    %v2874 = vld [vmem:[#allocation16 + $0x7b0] sm:$0xff]
    %v2875 = vld [vmem:[#allocation16 + $0x7b8] sm:$0xff]
    %v2876 = vld [vmem:[#allocation16 + $0x7c0] sm:$0xf]
    %v2877 = vld [vmem:[#allocation16 + $0x7c4] sm:$0xff]
    %v2878 = vld [vmem:[#allocation16 + $0x7cc] sm:$0xff]
    %v2879 = vld [vmem:[#allocation16 + $0x7d4] sm:$0xff]
    %v2880 = vld [vmem:[#allocation16 + $0x7dc] sm:$0xf]
    %v2881 = vld [vmem:[#allocation16 + $0x7e0] sm:$0xff]
    %v2882 = vld [vmem:[#allocation16 + $0x7e8] sm:$0xff]
    %v2883 = vld [vmem:[#allocation16 + $0x7f0] sm:$0xff]
    %v2884 = vld [vmem:[#allocation16 + $0x7f8] sm:$0xf]
    %v2885 = vld [vmem:[#allocation16 + $0x7fc] sm:$0xff]
    %v2886 = vld [vmem:[#allocation16 + $0x804] sm:$0xff]
    %v2887 = vld [vmem:[#allocation16 + $0x80c] sm:$0xff]
    %v2888 = vld [vmem:[#allocation16 + $0x814] sm:$0xf]
    %v2889 = vld [vmem:[#allocation16 + $0x818] sm:$0xff]
    %v2890 = vld [vmem:[#allocation16 + $0x820] sm:$0xff]
    %v2891 = vld [vmem:[#allocation16 + $0x828] sm:$0xff]
    %v2892 = vld [vmem:[#allocation16 + $0x830] sm:$0xf]
    %v2893 = vld [vmem:[#allocation16 + $0x834] sm:$0xff]
    %v2894 = vld [vmem:[#allocation16 + $0x83c] sm:$0xff]
    %v2895 = vld [vmem:[#allocation16 + $0x844] sm:$0xff]
    %v2896 = vld [vmem:[#allocation16 + $0x84c] sm:$0xf]
    %v2897 = vld [vmem:[#allocation16 + $0x850] sm:$0xff]
    %v2898 = vld [vmem:[#allocation16 + $0x858] sm:$0xff]
    %v2899 = vld [vmem:[#allocation16 + $0x860] sm:$0xff]
    %v2900 = vld [vmem:[#allocation16 + $0x868] sm:$0xf]
    %v2901 = vld [vmem:[#allocation16 + $0x86c] sm:$0xff]
    %v2902 = vld [vmem:[#allocation16 + $0x874] sm:$0xff]
    %v2903 = vld [vmem:[#allocation16 + $0x87c] sm:$0xff]
    %v2904 = vld [vmem:[#allocation16 + $0x884] sm:$0xf]
    %v2905 = vld [vmem:[#allocation16 + $0x888] sm:$0xff]
    %v2906 = vld [vmem:[#allocation16 + $0x890] sm:$0xff]
    %v2907 = vld [vmem:[#allocation16 + $0x898] sm:$0xff]
    %v2908 = vld [vmem:[#allocation16 + $0x8a0] sm:$0xf]
    %v2909 = vld [vmem:[#allocation16 + $0x8a4] sm:$0xff]
    %v2910 = vld [vmem:[#allocation16 + $0x8ac] sm:$0xff]
    %v2911 = vld [vmem:[#allocation16 + $0x8b4] sm:$0xff]
    %v2912 = vld [vmem:[#allocation16 + $0x8bc] sm:$0xf]
    %v2913 = vld [vmem:[#allocation16 + $0x8c0] sm:$0xff]
    %v2914 = vld [vmem:[#allocation16 + $0x8c8] sm:$0xff]
    %v2915 = vld [vmem:[#allocation16 + $0x8d0] sm:$0xff]
    %v2916 = vld [vmem:[#allocation16 + $0x8d8] sm:$0xf]
    %v2917 = vld [vmem:[#allocation16 + $0x8dc] sm:$0xff]
    %v2918 = vld [vmem:[#allocation16 + $0x8e4] sm:$0xff]
    %v2919 = vld [vmem:[#allocation16 + $0x8ec] sm:$0xff]
    %v2920 = vld [vmem:[#allocation16 + $0x8f4] sm:$0xf]
    %v2921 = vld [vmem:[#allocation16 + $0x8f8] sm:$0xff]
    %v2922 = vld [vmem:[#allocation16 + $0x900] sm:$0xff]
    %v2923 = vld [vmem:[#allocation16 + $0x908] sm:$0xff]
    %v2924 = vld [vmem:[#allocation16 + $0x910] sm:$0xf]
    %v2925 = vld [vmem:[#allocation16 + $0x914] sm:$0xff]
    %v2926 = vld [vmem:[#allocation16 + $0x91c] sm:$0xff]
    %v2927 = vld [vmem:[#allocation16 + $0x924] sm:$0xff]
    %v2928 = vld [vmem:[#allocation16 + $0x92c] sm:$0xf]
    %v2929 = vld [vmem:[#allocation16 + $0x930] sm:$0xff]
    %v2930 = vld [vmem:[#allocation16 + $0x938] sm:$0xff]
    %v2931 = vld [vmem:[#allocation16 + $0x940] sm:$0xff]
    %v2932 = vld [vmem:[#allocation16 + $0x948] sm:$0xf]
    %v2933 = vld [vmem:[#allocation16 + $0x94c] sm:$0xff]
    %v2934 = vld [vmem:[#allocation16 + $0x954] sm:$0xff]
    %v2935 = vld [vmem:[#allocation16 + $0x95c] sm:$0xff]
    %v2936 = vld [vmem:[#allocation16 + $0x964] sm:$0xf]
    %v2937 = vld [vmem:[#allocation16 + $0x968] sm:$0xff]
    %v2938 = vld [vmem:[#allocation16 + $0x970] sm:$0xff]
    %v2939 = vld [vmem:[#allocation16 + $0x978] sm:$0xff]
    %v2940 = vld [vmem:[#allocation16 + $0x980] sm:$0xf]
    %v2941 = vld [vmem:[#allocation16 + $0x984] sm:$0xff]
    %v2942 = vld [vmem:[#allocation16 + $0x98c] sm:$0xff]
    %v2943 = vld [vmem:[#allocation16 + $0x994] sm:$0xff]
    %v2944 = vld [vmem:[#allocation16 + $0x99c] sm:$0xf]
    %v2945 = vld [vmem:[#allocation16 + $0x9a0] sm:$0xff]
    %v2946 = vld [vmem:[#allocation16 + $0x9a8] sm:$0xff]
    %v2947 = vld [vmem:[#allocation16 + $0x9b0] sm:$0xff]
    %v2948 = vld [vmem:[#allocation16 + $0x9b8] sm:$0xf]
    %v2949 = vld [vmem:[#allocation16 + $0x9bc] sm:$0xff]
    %v2950 = vld [vmem:[#allocation16 + $0x9c4] sm:$0xff]
    %v2951 = vld [vmem:[#allocation16 + $0x9cc] sm:$0xff]
    %v2952 = vld [vmem:[#allocation16 + $0x9d4] sm:$0xf]
    %v2953 = vld [vmem:[#allocation16 + $0x9d8] sm:$0xff]
    %v2954 = vld [vmem:[#allocation16 + $0x9e0] sm:$0xff]
    %v2955 = vld [vmem:[#allocation16 + $0x9e8] sm:$0xff]
    %v2956 = vld [vmem:[#allocation16 + $0x9f0] sm:$0xf]
    %v2957 = vld [vmem:[#allocation16 + $0x9f4] sm:$0xff]
    %v2958 = vld [vmem:[#allocation16 + $0x9fc] sm:$0xff]
    %v2959 = vld [vmem:[#allocation16 + $0xa04] sm:$0xff]
    %v2960 = vld [vmem:[#allocation16 + $0xa0c] sm:$0xf]
    %v2961 = vld [vmem:[#allocation16 + $0xa10] sm:$0xff]
    %v2962 = vld [vmem:[#allocation16 + $0xa18] sm:$0xff]
    %v2963 = vld [vmem:[#allocation16 + $0xa20] sm:$0xff]
    %v2964 = vld [vmem:[#allocation16 + $0xa28] sm:$0xf]
    %v2965 = vld [vmem:[#allocation16 + $0xa2c] sm:$0xff]
    %v2966 = vld [vmem:[#allocation16 + $0xa34] sm:$0xff]
    %v2967 = vld [vmem:[#allocation16 + $0xa3c] sm:$0xff]
    %v2968 = vld [vmem:[#allocation16 + $0xa44] sm:$0xf]
    %v2969 = vld [vmem:[#allocation16 + $0xa48] sm:$0xff]
    %v2970 = vld [vmem:[#allocation16 + $0xa50] sm:$0xff]
    %v2971 = vld [vmem:[#allocation16 + $0xa58] sm:$0xff]
    %v2972 = vld [vmem:[#allocation16 + $0xa60] sm:$0xf]
    %v2973 = vld [vmem:[#allocation16 + $0xa64] sm:$0xff]
    %v2974 = vld [vmem:[#allocation16 + $0xa6c] sm:$0xff]
    %v2975 = vld [vmem:[#allocation16 + $0xa74] sm:$0xff]
    %v2976 = vld [vmem:[#allocation16 + $0xa7c] sm:$0xf]
    %v2977 = vld [vmem:[#allocation16 + $0xa80] sm:$0xff]
    %v2978 = vld [vmem:[#allocation16 + $0xa88] sm:$0xff]
    %v2979 = vld [vmem:[#allocation16 + $0xa90] sm:$0xff]
    %v2980 = vld [vmem:[#allocation16 + $0xa98] sm:$0xf]
    %v2981 = vld [vmem:[#allocation16 + $0xa9c] sm:$0xff]
    %v2982 = vld [vmem:[#allocation16 + $0xaa4] sm:$0xff]
    %v2983 = vld [vmem:[#allocation16 + $0xaac] sm:$0xff]
    %v2984 = vld [vmem:[#allocation16 + $0xab4] sm:$0xf]
    %v2985 = vld [vmem:[#allocation16 + $0xab8] sm:$0xff]
    %v2986 = vld [vmem:[#allocation16 + $0xac0] sm:$0xff]
    %v2987 = vld [vmem:[#allocation16 + $0xac8] sm:$0xff]
    %v2988 = vld [vmem:[#allocation16 + $0xad0] sm:$0xf]
    %v2989 = vld [vmem:[#allocation16 + $0xad4] sm:$0xff]
    %v2990 = vld [vmem:[#allocation16 + $0xadc] sm:$0xff]
    %v2991 = vld [vmem:[#allocation16 + $0xae4] sm:$0xff]
    %v2992 = vld [vmem:[#allocation16 + $0xaec] sm:$0xf]
    %v2993 = vld [vmem:[#allocation16 + $0xaf0] sm:$0xff]
    %v2994 = vld [vmem:[#allocation16 + $0xaf8] sm:$0xff]
    %v2995 = vld [vmem:[#allocation16 + $0xb00] sm:$0xff]
    %v2996 = vld [vmem:[#allocation16 + $0xb08] sm:$0xf]
    %v2997 = vld [vmem:[#allocation16 + $0xb0c] sm:$0xff]
    %v2998 = vld [vmem:[#allocation16 + $0xb14] sm:$0xff]
    %v2999 = vld [vmem:[#allocation16 + $0xb1c] sm:$0xff]
    %v3000 = vld [vmem:[#allocation16 + $0xb24] sm:$0xf]
    %v3001 = vld [vmem:[#allocation16 + $0xb28] sm:$0xff]
    %v3002 = vld [vmem:[#allocation16 + $0xb30] sm:$0xff]
    %v3003 = vld [vmem:[#allocation16 + $0xb38] sm:$0xff]
    %v3004 = vld [vmem:[#allocation16 + $0xb40] sm:$0xf]
    %v3005 = vld [vmem:[#allocation16 + $0xb44] sm:$0xff]
    %v3006 = vld [vmem:[#allocation16 + $0xb4c] sm:$0xff]
    %v3007 = vld [vmem:[#allocation16 + $0xb54] sm:$0xff]
    %v3008 = vld [vmem:[#allocation16 + $0xb5c] sm:$0xf]
    %v3009 = vld [vmem:[#allocation16 + $0xb60] sm:$0xff]
    %v3010 = vld [vmem:[#allocation16 + $0xb68] sm:$0xff]
    %v3011 = vld [vmem:[#allocation16 + $0xb70] sm:$0xff]
    %v3012 = vld [vmem:[#allocation16 + $0xb78] sm:$0xf]
    %v3013 = vld [vmem:[#allocation16 + $0xb7c] sm:$0xff]
    %v3014 = vld [vmem:[#allocation16 + $0xb84] sm:$0xff]
    %v3015 = vld [vmem:[#allocation16 + $0xb8c] sm:$0xff]
    %v3016 = vld [vmem:[#allocation16 + $0xb94] sm:$0xf]
    %v3017 = vld [vmem:[#allocation16 + $0xb98] sm:$0xff]
    %v3018 = vld [vmem:[#allocation16 + $0xba0] sm:$0xff]
    %v3019 = vld [vmem:[#allocation16 + $0xba8] sm:$0xff]
    %v3020 = vld [vmem:[#allocation16 + $0xbb0] sm:$0xf]
    %v3021 = vld [vmem:[#allocation16 + $0xbb4] sm:$0xff]
    %v3022 = vld [vmem:[#allocation16 + $0xbbc] sm:$0xff]
    %v3023 = vld [vmem:[#allocation16 + $0xbc4] sm:$0xff]
    %v3024 = vld [vmem:[#allocation16 + $0xbcc] sm:$0xf]
    %v3025 = vld [vmem:[#allocation16 + $0xbd0] sm:$0xff]
    %v3026 = vld [vmem:[#allocation16 + $0xbd8] sm:$0xff]
    %v3027 = vld [vmem:[#allocation16 + $0xbe0] sm:$0xff]
    %v3028 = vld [vmem:[#allocation16 + $0xbe8] sm:$0xf]
    %v3029 = vld [vmem:[#allocation16 + $0xbec] sm:$0xff]
    %v3030 = vld [vmem:[#allocation16 + $0xbf4] sm:$0xff]
    %v3031 = vld [vmem:[#allocation16 + $0xbfc] sm:$0xff]
    %v3032 = vld [vmem:[#allocation16 + $0xc04] sm:$0xf]
    %v3033 = vld [vmem:[#allocation16 + $0xc08] sm:$0xff]
    %v3034 = vld [vmem:[#allocation16 + $0xc10] sm:$0xff]
    %v3035 = vld [vmem:[#allocation16 + $0xc18] sm:$0xff]
    %v3036 = vld [vmem:[#allocation16 + $0xc20] sm:$0xf]
    %v3037 = vld [vmem:[#allocation16 + $0xc24] sm:$0xff]
    %v3038 = vld [vmem:[#allocation16 + $0xc2c] sm:$0xff]
    %v3039 = vld [vmem:[#allocation16 + $0xc34] sm:$0xff]
    %v3040 = vld [vmem:[#allocation16 + $0xc3c] sm:$0xf]
    %v3041 = vld [vmem:[#allocation16 + $0xc40] sm:$0xff]
    %v3042 = vld [vmem:[#allocation16 + $0xc48] sm:$0xff]
    %v3043 = vld [vmem:[#allocation16 + $0xc50] sm:$0xff]
    %v3044 = vld [vmem:[#allocation16 + $0xc58] sm:$0xf]
    %v3045 = vld [vmem:[#allocation16 + $0xc5c] sm:$0xff]
    %v3046 = vld [vmem:[#allocation16 + $0xc64] sm:$0xff]
    %v3047 = vld [vmem:[#allocation16 + $0xc6c] sm:$0xff]
    %v3048 = vld [vmem:[#allocation16 + $0xc74] sm:$0xf]
    %v3049 = vld [vmem:[#allocation16 + $0xc78] sm:$0xff]
    %v3050 = vld [vmem:[#allocation16 + $0xc80] sm:$0xff]
    %v3051 = vld [vmem:[#allocation16 + $0xc88] sm:$0xff]
    %v3052 = vld [vmem:[#allocation16 + $0xc90] sm:$0xf]
    %v3053 = vld [vmem:[#allocation16 + $0xc94] sm:$0xff]
    %v3054 = vld [vmem:[#allocation16 + $0xc9c] sm:$0xff]
    %v3055 = vld [vmem:[#allocation16 + $0xca4] sm:$0xff]
    %v3056 = vld [vmem:[#allocation16 + $0xcac] sm:$0xf]
    %v3057 = vld [vmem:[#allocation16 + $0xcb0] sm:$0xff]
    %v3058 = vld [vmem:[#allocation16 + $0xcb8] sm:$0xff]
    %v3059 = vld [vmem:[#allocation16 + $0xcc0] sm:$0xff]
    %v3060 = vld [vmem:[#allocation16 + $0xcc8] sm:$0xf]
    %v3061 = vld [vmem:[#allocation16 + $0xccc] sm:$0xff]
    %v3062 = vld [vmem:[#allocation16 + $0xcd4] sm:$0xff]
    %v3063 = vld [vmem:[#allocation16 + $0xcdc] sm:$0xff]
    %v3064 = vld [vmem:[#allocation16 + $0xce4] sm:$0xf]
    %v3065 = vld [vmem:[#allocation16 + $0xce8] sm:$0xff]
    %v3066 = vld [vmem:[#allocation16 + $0xcf0] sm:$0xff]
    %v3067 = vld [vmem:[#allocation16 + $0xcf8] sm:$0xff]
    %v3068 = vld [vmem:[#allocation16 + $0xd00] sm:$0xf]
    %v3069 = vld [vmem:[#allocation16 + $0xd04] sm:$0xff]
    %v3070 = vld [vmem:[#allocation16 + $0xd0c] sm:$0xff]
    %v3071 = vld [vmem:[#allocation16 + $0xd14] sm:$0xff]
    %v3072 = vld [vmem:[#allocation16 + $0xd1c] sm:$0xf]
    %v3073 = vld [vmem:[#allocation16 + $0xd20] sm:$0xff]
    %v3074 = vld [vmem:[#allocation16 + $0xd28] sm:$0xff]
    %v3075 = vld [vmem:[#allocation16 + $0xd30] sm:$0xff]
    %v3076 = vld [vmem:[#allocation16 + $0xd38] sm:$0xf]
    %v3077 = vld [vmem:[#allocation16 + $0xd3c] sm:$0xff]
    %v3078 = vld [vmem:[#allocation16 + $0xd44] sm:$0xff]
    %v3079 = vld [vmem:[#allocation16 + $0xd4c] sm:$0xff]
    %v3080 = vld [vmem:[#allocation16 + $0xd54] sm:$0xf]
    %v3081 = vld [vmem:[#allocation16 + $0xd58] sm:$0xff]
    %v3082 = vld [vmem:[#allocation16 + $0xd60] sm:$0xff]
    %v3083 = vld [vmem:[#allocation16 + $0xd68] sm:$0xff]
    %v3084 = vld [vmem:[#allocation16 + $0xd70] sm:$0xf]
    %v3085 = vld [vmem:[#allocation16 + $0xd74] sm:$0xff]
    %v3086 = vld [vmem:[#allocation16 + $0xd7c] sm:$0xff]
    %v3087 = vld [vmem:[#allocation16 + $0xd84] sm:$0xff]
    %v3088 = vld [vmem:[#allocation16 + $0xd8c] sm:$0xf]
    %v3089 = vld [vmem:[#allocation16 + $0xd90] sm:$0xff]
    %v3090 = vld [vmem:[#allocation16 + $0xd98] sm:$0xff]
    %v3091 = vld [vmem:[#allocation16 + $0xda0] sm:$0xff]
    %v3092 = vld [vmem:[#allocation16 + $0xda8] sm:$0xf]
    %v3093 = vld [vmem:[#allocation16 + $0xdac] sm:$0xff]
    %v3094 = vld [vmem:[#allocation16 + $0xdb4] sm:$0xff]
    %v3095 = vld [vmem:[#allocation16 + $0xdbc] sm:$0xff]
    %v3096 = vld [vmem:[#allocation16 + $0xdc4] sm:$0xf]
    %v3097 = vld [vmem:[#allocation16 + $0xdc8] sm:$0xff]
    %v3098 = vld [vmem:[#allocation16 + $0xdd0] sm:$0xff]
    %v3099 = vld [vmem:[#allocation16 + $0xdd8] sm:$0xff]
    %v3100 = vld [vmem:[#allocation16 + $0xde0] sm:$0xf]
    %v3101 = vld [vmem:[#allocation16 + $0xde4] sm:$0xff]
    %v3102 = vld [vmem:[#allocation16 + $0xdec] sm:$0xff]
    %v3103 = vld [vmem:[#allocation16 + $0xdf4] sm:$0xff]
    %v3104 = vld [vmem:[#allocation16 + $0xdfc] sm:$0xf]
    %v3105 = vld [vmem:[#allocation17] sm:$0xff]
    %v3106 = vpack.c.bf16 %v2585, %v2585
    %v3107 = vpack.c.bf16 %v2586, %v2586
    %v3108 = vpack.c.bf16 %v2587, %v2587
    %v3109 = vpack.c.bf16 %v2588, %v2588
    %v3110 = vpack.c.bf16 %v2589, %v2589
    %v3111 = vpack.c.bf16 %v2590, %v2590
    %v3112 = vpack.c.bf16 %v2591, %v2591
    %v3113 = vpack.c.bf16 %v2592, %v2592
    %v3115 = vperm.slane %v3105, 0
    %v3116 = vperm.slane %v3105, 1
    %v3117 = vperm.slane %v3105, 2
    %v3118 = vperm.slane %v3105, 3
    %v3119 = vperm.slane %v3105, 4
    %v3120 = vperm.slane %v3105, 5
    %v3121 = vperm.slane %v3105, 6
    %v3641 = vunpack.c.l.b16 %v2593
    %v3642 = vunpack.c.h.b16 %v2593
    %v3643 = vunpack.c.l.b16 %v2594
    %v3644 = vunpack.c.h.b16 %v2594
    %v3645 = vunpack.c.l.b16 %v2595
    %v3646 = vunpack.c.h.b16 %v2595
    %v3647 = vunpack.c.l.b16 %v2596
    %v3648 = vunpack.c.l.b16 %v2597
    %v3649 = vunpack.c.h.b16 %v2597
    %v3650 = vunpack.c.l.b16 %v2598
    %v3651 = vunpack.c.h.b16 %v2598
    %v3652 = vunpack.c.l.b16 %v2599
    %v3653 = vunpack.c.h.b16 %v2599
    %v3654 = vunpack.c.l.b16 %v2600
    %v3655 = vunpack.c.l.b16 %v2601
    %v3656 = vunpack.c.h.b16 %v2601
    %v3657 = vunpack.c.l.b16 %v2602
    %v3658 = vunpack.c.h.b16 %v2602
    %v3659 = vunpack.c.l.b16 %v2603
    %v3660 = vunpack.c.h.b16 %v2603
    %v3661 = vunpack.c.l.b16 %v2604
    %v3662 = vunpack.c.l.b16 %v2605
    %v3663 = vunpack.c.h.b16 %v2605
    %v3664 = vunpack.c.l.b16 %v2606
    %v3665 = vunpack.c.h.b16 %v2606
    %v3666 = vunpack.c.l.b16 %v2607
    %v3667 = vunpack.c.h.b16 %v2607
    %v3668 = vunpack.c.l.b16 %v2608
    %v3669 = vunpack.c.l.b16 %v2609
    %v3670 = vunpack.c.h.b16 %v2609
    %v3671 = vunpack.c.l.b16 %v2610
    %v3672 = vunpack.c.h.b16 %v2610
    %v3673 = vunpack.c.l.b16 %v2611
    %v3674 = vunpack.c.h.b16 %v2611
    %v3675 = vunpack.c.l.b16 %v2612
    %v3676 = vunpack.c.l.b16 %v2613
    %v3677 = vunpack.c.h.b16 %v2613
    %v3678 = vunpack.c.l.b16 %v2614
    %v3679 = vunpack.c.h.b16 %v2614
    %v3680 = vunpack.c.l.b16 %v2615
    %v3681 = vunpack.c.h.b16 %v2615
    %v3682 = vunpack.c.l.b16 %v2616
    %v3683 = vunpack.c.l.b16 %v2617
    %v3684 = vunpack.c.h.b16 %v2617
    %v3685 = vunpack.c.l.b16 %v2618
    %v3686 = vunpack.c.h.b16 %v2618
    %v3687 = vunpack.c.l.b16 %v2619
    %v3688 = vunpack.c.h.b16 %v2619
    %v3689 = vunpack.c.l.b16 %v2620
    %v3690 = vunpack.c.l.b16 %v2621
    %v3691 = vunpack.c.h.b16 %v2621
    %v3692 = vunpack.c.l.b16 %v2622
    %v3693 = vunpack.c.h.b16 %v2622
    %v3694 = vunpack.c.l.b16 %v2623
    %v3695 = vunpack.c.h.b16 %v2623
    %v3696 = vunpack.c.l.b16 %v2624
    %v3697 = vunpack.c.l.b16 %v2625
    %v3698 = vunpack.c.h.b16 %v2625
    %v3699 = vunpack.c.l.b16 %v2626
    %v3700 = vunpack.c.h.b16 %v2626
    %v3701 = vunpack.c.l.b16 %v2627
    %v3702 = vunpack.c.h.b16 %v2627
    %v3703 = vunpack.c.l.b16 %v2628
    %v3704 = vunpack.c.l.b16 %v2629
    %v3705 = vunpack.c.h.b16 %v2629
    %v3706 = vunpack.c.l.b16 %v2630
    %v3707 = vunpack.c.h.b16 %v2630
    %v3708 = vunpack.c.l.b16 %v2631
    %v3709 = vunpack.c.h.b16 %v2631
    %v3710 = vunpack.c.l.b16 %v2632
    %v3711 = vunpack.c.l.b16 %v2633
    %v3712 = vunpack.c.h.b16 %v2633
    %v3713 = vunpack.c.l.b16 %v2634
    %v3714 = vunpack.c.h.b16 %v2634
    %v3715 = vunpack.c.l.b16 %v2635
    %v3716 = vunpack.c.h.b16 %v2635
    %v3717 = vunpack.c.l.b16 %v2636
    %v3718 = vunpack.c.l.b16 %v2637
    %v3719 = vunpack.c.h.b16 %v2637
    %v3720 = vunpack.c.l.b16 %v2638
    %v3721 = vunpack.c.h.b16 %v2638
    %v3722 = vunpack.c.l.b16 %v2639
    %v3723 = vunpack.c.h.b16 %v2639
    %v3724 = vunpack.c.l.b16 %v2640
    %v3725 = vunpack.c.l.b16 %v2641
    %v3726 = vunpack.c.h.b16 %v2641
    %v3727 = vunpack.c.l.b16 %v2642
    %v3728 = vunpack.c.h.b16 %v2642
    %v3729 = vunpack.c.l.b16 %v2643
    %v3730 = vunpack.c.h.b16 %v2643
    %v3731 = vunpack.c.l.b16 %v2644
    %v3732 = vunpack.c.l.b16 %v2645
    %v3733 = vunpack.c.h.b16 %v2645
    %v3734 = vunpack.c.l.b16 %v2646
    %v3735 = vunpack.c.h.b16 %v2646
    %v3736 = vunpack.c.l.b16 %v2647
    %v3737 = vunpack.c.h.b16 %v2647
    %v3738 = vunpack.c.l.b16 %v2648
    %v3739 = vunpack.c.l.b16 %v2649
    %v3740 = vunpack.c.h.b16 %v2649
    %v3741 = vunpack.c.l.b16 %v2650
    %v3742 = vunpack.c.h.b16 %v2650
    %v3743 = vunpack.c.l.b16 %v2651
    %v3744 = vunpack.c.h.b16 %v2651
    %v3745 = vunpack.c.l.b16 %v2652
    %v3746 = vunpack.c.l.b16 %v2653
    %v3747 = vunpack.c.h.b16 %v2653
    %v3748 = vunpack.c.l.b16 %v2654
    %v3749 = vunpack.c.h.b16 %v2654
    %v3750 = vunpack.c.l.b16 %v2655
    %v3751 = vunpack.c.h.b16 %v2655
    %v3752 = vunpack.c.l.b16 %v2656
    %v3753 = vunpack.c.l.b16 %v2657
    %v3754 = vunpack.c.h.b16 %v2657
    %v3755 = vunpack.c.l.b16 %v2658
    %v3756 = vunpack.c.h.b16 %v2658
    %v3757 = vunpack.c.l.b16 %v2659
    %v3758 = vunpack.c.h.b16 %v2659
    %v3759 = vunpack.c.l.b16 %v2660
    %v3760 = vunpack.c.l.b16 %v2661
    %v3761 = vunpack.c.h.b16 %v2661
    %v3762 = vunpack.c.l.b16 %v2662
    %v3763 = vunpack.c.h.b16 %v2662
    %v3764 = vunpack.c.l.b16 %v2663
    %v3765 = vunpack.c.h.b16 %v2663
    %v3766 = vunpack.c.l.b16 %v2664
    %v3767 = vunpack.c.l.b16 %v2665
    %v3768 = vunpack.c.h.b16 %v2665
    %v3769 = vunpack.c.l.b16 %v2666
    %v3770 = vunpack.c.h.b16 %v2666
    %v3771 = vunpack.c.l.b16 %v2667
    %v3772 = vunpack.c.h.b16 %v2667
    %v3773 = vunpack.c.l.b16 %v2668
    %v3774 = vunpack.c.l.b16 %v2669
    %v3775 = vunpack.c.h.b16 %v2669
    %v3776 = vunpack.c.l.b16 %v2670
    %v3777 = vunpack.c.h.b16 %v2670
    %v3778 = vunpack.c.l.b16 %v2671
    %v3779 = vunpack.c.h.b16 %v2671
    %v3780 = vunpack.c.l.b16 %v2672
    %v3781 = vunpack.c.l.b16 %v2673
    %v3782 = vunpack.c.h.b16 %v2673
    %v3783 = vunpack.c.l.b16 %v2674
    %v3784 = vunpack.c.h.b16 %v2674
    %v3785 = vunpack.c.l.b16 %v2675
    %v3786 = vunpack.c.h.b16 %v2675
    %v3787 = vunpack.c.l.b16 %v2676
    %v3788 = vunpack.c.l.b16 %v2677
    %v3789 = vunpack.c.h.b16 %v2677
    %v3790 = vunpack.c.l.b16 %v2678
    %v3791 = vunpack.c.h.b16 %v2678
    %v3792 = vunpack.c.l.b16 %v2679
    %v3793 = vunpack.c.h.b16 %v2679
    %v3794 = vunpack.c.l.b16 %v2680
    %v3795 = vunpack.c.l.b16 %v2681
    %v3796 = vunpack.c.h.b16 %v2681
    %v3797 = vunpack.c.l.b16 %v2682
    %v3798 = vunpack.c.h.b16 %v2682
    %v3799 = vunpack.c.l.b16 %v2683
    %v3800 = vunpack.c.h.b16 %v2683
    %v3801 = vunpack.c.l.b16 %v2684
    %v3802 = vunpack.c.l.b16 %v2685
    %v3803 = vunpack.c.h.b16 %v2685
    %v3804 = vunpack.c.l.b16 %v2686
    %v3805 = vunpack.c.h.b16 %v2686
    %v3806 = vunpack.c.l.b16 %v2687
    %v3807 = vunpack.c.h.b16 %v2687
    %v3808 = vunpack.c.l.b16 %v2688
    %v3809 = vunpack.c.l.b16 %v2689
    %v3810 = vunpack.c.h.b16 %v2689
    %v3811 = vunpack.c.l.b16 %v2690
    %v3812 = vunpack.c.h.b16 %v2690
    %v3813 = vunpack.c.l.b16 %v2691
    %v3814 = vunpack.c.h.b16 %v2691
    %v3815 = vunpack.c.l.b16 %v2692
    %v3816 = vunpack.c.l.b16 %v2693
    %v3817 = vunpack.c.h.b16 %v2693
    %v3818 = vunpack.c.l.b16 %v2694
    %v3819 = vunpack.c.h.b16 %v2694
    %v3820 = vunpack.c.l.b16 %v2695
    %v3821 = vunpack.c.h.b16 %v2695
    %v3822 = vunpack.c.l.b16 %v2696
    %v3823 = vunpack.c.l.b16 %v2697
    %v3824 = vunpack.c.h.b16 %v2697
    %v3825 = vunpack.c.l.b16 %v2698
    %v3826 = vunpack.c.h.b16 %v2698
    %v3827 = vunpack.c.l.b16 %v2699
    %v3828 = vunpack.c.h.b16 %v2699
    %v3829 = vunpack.c.l.b16 %v2700
    %v3830 = vunpack.c.l.b16 %v2701
    %v3831 = vunpack.c.h.b16 %v2701
    %v3832 = vunpack.c.l.b16 %v2702
    %v3833 = vunpack.c.h.b16 %v2702
    %v3834 = vunpack.c.l.b16 %v2703
    %v3835 = vunpack.c.h.b16 %v2703
    %v3836 = vunpack.c.l.b16 %v2704
    %v3837 = vunpack.c.l.b16 %v2705
    %v3838 = vunpack.c.h.b16 %v2705
    %v3839 = vunpack.c.l.b16 %v2706
    %v3840 = vunpack.c.h.b16 %v2706
    %v3841 = vunpack.c.l.b16 %v2707
    %v3842 = vunpack.c.h.b16 %v2707
    %v3843 = vunpack.c.l.b16 %v2708
    %v3844 = vunpack.c.l.b16 %v2709
    %v3845 = vunpack.c.h.b16 %v2709
    %v3846 = vunpack.c.l.b16 %v2710
    %v3847 = vunpack.c.h.b16 %v2710
    %v3848 = vunpack.c.l.b16 %v2711
    %v3849 = vunpack.c.h.b16 %v2711
    %v3850 = vunpack.c.l.b16 %v2712
    %v3851 = vunpack.c.l.b16 %v2713
    %v3852 = vunpack.c.h.b16 %v2713
    %v3853 = vunpack.c.l.b16 %v2714
    %v3854 = vunpack.c.h.b16 %v2714
    %v3855 = vunpack.c.l.b16 %v2715
    %v3856 = vunpack.c.h.b16 %v2715
    %v3857 = vunpack.c.l.b16 %v2716
    %v3858 = vunpack.c.l.b16 %v2717
    %v3859 = vunpack.c.h.b16 %v2717
    %v3860 = vunpack.c.l.b16 %v2718
    %v3861 = vunpack.c.h.b16 %v2718
    %v3862 = vunpack.c.l.b16 %v2719
    %v3863 = vunpack.c.h.b16 %v2719
    %v3864 = vunpack.c.l.b16 %v2720
    %v3865 = vunpack.c.l.b16 %v2721
    %v3866 = vunpack.c.h.b16 %v2721
    %v3867 = vunpack.c.l.b16 %v2722
    %v3868 = vunpack.c.h.b16 %v2722
    %v3869 = vunpack.c.l.b16 %v2723
    %v3870 = vunpack.c.h.b16 %v2723
    %v3871 = vunpack.c.l.b16 %v2724
    %v3872 = vunpack.c.l.b16 %v2725
    %v3873 = vunpack.c.h.b16 %v2725
    %v3874 = vunpack.c.l.b16 %v2726
    %v3875 = vunpack.c.h.b16 %v2726
    %v3876 = vunpack.c.l.b16 %v2727
    %v3877 = vunpack.c.h.b16 %v2727
    %v3878 = vunpack.c.l.b16 %v2728
    %v3879 = vunpack.c.l.b16 %v2729
    %v3880 = vunpack.c.h.b16 %v2729
    %v3881 = vunpack.c.l.b16 %v2730
    %v3882 = vunpack.c.h.b16 %v2730
    %v3883 = vunpack.c.l.b16 %v2731
    %v3884 = vunpack.c.h.b16 %v2731
    %v3885 = vunpack.c.l.b16 %v2732
    %v3886 = vunpack.c.l.b16 %v2733
    %v3887 = vunpack.c.h.b16 %v2733
    %v3888 = vunpack.c.l.b16 %v2734
    %v3889 = vunpack.c.h.b16 %v2734
    %v3890 = vunpack.c.l.b16 %v2735
    %v3891 = vunpack.c.h.b16 %v2735
    %v3892 = vunpack.c.l.b16 %v2736
    %v3893 = vunpack.c.l.b16 %v2737
    %v3894 = vunpack.c.h.b16 %v2737
    %v3895 = vunpack.c.l.b16 %v2738
    %v3896 = vunpack.c.h.b16 %v2738
    %v3897 = vunpack.c.l.b16 %v2739
    %v3898 = vunpack.c.h.b16 %v2739
    %v3899 = vunpack.c.l.b16 %v2740
    %v3900 = vunpack.c.l.b16 %v2741
    %v3901 = vunpack.c.h.b16 %v2741
    %v3902 = vunpack.c.l.b16 %v2742
    %v3903 = vunpack.c.h.b16 %v2742
    %v3904 = vunpack.c.l.b16 %v2743
    %v3905 = vunpack.c.h.b16 %v2743
    %v3906 = vunpack.c.l.b16 %v2744
    %v3907 = vunpack.c.l.b16 %v2745
    %v3908 = vunpack.c.h.b16 %v2745
    %v3909 = vunpack.c.l.b16 %v2746
    %v3910 = vunpack.c.h.b16 %v2746
    %v3911 = vunpack.c.l.b16 %v2747
    %v3912 = vunpack.c.h.b16 %v2747
    %v3913 = vunpack.c.l.b16 %v2748
    %v3914 = vunpack.c.l.b16 %v2749
    %v3915 = vunpack.c.h.b16 %v2749
    %v3916 = vunpack.c.l.b16 %v2750
    %v3917 = vunpack.c.h.b16 %v2750
    %v3918 = vunpack.c.l.b16 %v2751
    %v3919 = vunpack.c.h.b16 %v2751
    %v3920 = vunpack.c.l.b16 %v2752
    %v3921 = vunpack.c.l.b16 %v2753
    %v3922 = vunpack.c.h.b16 %v2753
    %v3923 = vunpack.c.l.b16 %v2754
    %v3924 = vunpack.c.h.b16 %v2754
    %v3925 = vunpack.c.l.b16 %v2755
    %v3926 = vunpack.c.h.b16 %v2755
    %v3927 = vunpack.c.l.b16 %v2756
    %v3928 = vunpack.c.l.b16 %v2757
    %v3929 = vunpack.c.h.b16 %v2757
    %v3930 = vunpack.c.l.b16 %v2758
    %v3931 = vunpack.c.h.b16 %v2758
    %v3932 = vunpack.c.l.b16 %v2759
    %v3933 = vunpack.c.h.b16 %v2759
    %v3934 = vunpack.c.l.b16 %v2760
    %v3935 = vunpack.c.l.b16 %v2761
    %v3936 = vunpack.c.h.b16 %v2761
    %v3937 = vunpack.c.l.b16 %v2762
    %v3938 = vunpack.c.h.b16 %v2762
    %v3939 = vunpack.c.l.b16 %v2763
    %v3940 = vunpack.c.h.b16 %v2763
    %v3941 = vunpack.c.l.b16 %v2764
    %v3942 = vunpack.c.l.b16 %v2765
    %v3943 = vunpack.c.h.b16 %v2765
    %v3944 = vunpack.c.l.b16 %v2766
    %v3945 = vunpack.c.h.b16 %v2766
    %v3946 = vunpack.c.l.b16 %v2767
    %v3947 = vunpack.c.h.b16 %v2767
    %v3948 = vunpack.c.l.b16 %v2768
    %v3949 = vunpack.c.l.b16 %v2769
    %v3950 = vunpack.c.h.b16 %v2769
    %v3951 = vunpack.c.l.b16 %v2770
    %v3952 = vunpack.c.h.b16 %v2770
    %v3953 = vunpack.c.l.b16 %v2771
    %v3954 = vunpack.c.h.b16 %v2771
    %v3955 = vunpack.c.l.b16 %v2772
    %v3956 = vunpack.c.l.b16 %v2773
    %v3957 = vunpack.c.h.b16 %v2773
    %v3958 = vunpack.c.l.b16 %v2774
    %v3959 = vunpack.c.h.b16 %v2774
    %v3960 = vunpack.c.l.b16 %v2775
    %v3961 = vunpack.c.h.b16 %v2775
    %v3962 = vunpack.c.l.b16 %v2776
    %v3963 = vunpack.c.l.b16 %v2777
    %v3964 = vunpack.c.h.b16 %v2777
    %v3965 = vunpack.c.l.b16 %v2778
    %v3966 = vunpack.c.h.b16 %v2778
    %v3967 = vunpack.c.l.b16 %v2779
    %v3968 = vunpack.c.h.b16 %v2779
    %v3969 = vunpack.c.l.b16 %v2780
    %v3970 = vunpack.c.l.b16 %v2781
    %v3971 = vunpack.c.h.b16 %v2781
    %v3972 = vunpack.c.l.b16 %v2782
    %v3973 = vunpack.c.h.b16 %v2782
    %v3974 = vunpack.c.l.b16 %v2783
    %v3975 = vunpack.c.h.b16 %v2783
    %v3976 = vunpack.c.l.b16 %v2784
    %v3977 = vunpack.c.l.b16 %v2785
    %v3978 = vunpack.c.h.b16 %v2785
    %v3979 = vunpack.c.l.b16 %v2786
    %v3980 = vunpack.c.h.b16 %v2786
    %v3981 = vunpack.c.l.b16 %v2787
    %v3982 = vunpack.c.h.b16 %v2787
    %v3983 = vunpack.c.l.b16 %v2788
    %v3984 = vunpack.c.l.b16 %v2789
    %v3985 = vunpack.c.h.b16 %v2789
    %v3986 = vunpack.c.l.b16 %v2790
    %v3987 = vunpack.c.h.b16 %v2790
    %v3988 = vunpack.c.l.b16 %v2791
    %v3989 = vunpack.c.h.b16 %v2791
    %v3990 = vunpack.c.l.b16 %v2792
    %v3991 = vunpack.c.l.b16 %v2793
    %v3992 = vunpack.c.h.b16 %v2793
    %v3993 = vunpack.c.l.b16 %v2794
    %v3994 = vunpack.c.h.b16 %v2794
    %v3995 = vunpack.c.l.b16 %v2795
    %v3996 = vunpack.c.h.b16 %v2795
    %v3997 = vunpack.c.l.b16 %v2796
    %v3998 = vunpack.c.l.b16 %v2797
    %v3999 = vunpack.c.h.b16 %v2797
    %v4000 = vunpack.c.l.b16 %v2798
    %v4001 = vunpack.c.h.b16 %v2798
    %v4002 = vunpack.c.l.b16 %v2799
    %v4003 = vunpack.c.h.b16 %v2799
    %v4004 = vunpack.c.l.b16 %v2800
    %v4005 = vunpack.c.l.b16 %v2801
    %v4006 = vunpack.c.h.b16 %v2801
    %v4007 = vunpack.c.l.b16 %v2802
    %v4008 = vunpack.c.h.b16 %v2802
    %v4009 = vunpack.c.l.b16 %v2803
    %v4010 = vunpack.c.h.b16 %v2803
    %v4011 = vunpack.c.l.b16 %v2804
    %v4012 = vunpack.c.l.b16 %v2805
    %v4013 = vunpack.c.h.b16 %v2805
    %v4014 = vunpack.c.l.b16 %v2806
    %v4015 = vunpack.c.h.b16 %v2806
    %v4016 = vunpack.c.l.b16 %v2807
    %v4017 = vunpack.c.h.b16 %v2807
    %v4018 = vunpack.c.l.b16 %v2808
    %v4019 = vunpack.c.l.b16 %v2809
    %v4020 = vunpack.c.h.b16 %v2809
    %v4021 = vunpack.c.l.b16 %v2810
    %v4022 = vunpack.c.h.b16 %v2810
    %v4023 = vunpack.c.l.b16 %v2811
    %v4024 = vunpack.c.h.b16 %v2811
    %v4025 = vunpack.c.l.b16 %v2812
    %v4026 = vunpack.c.l.b16 %v2813
    %v4027 = vunpack.c.h.b16 %v2813
    %v4028 = vunpack.c.l.b16 %v2814
    %v4029 = vunpack.c.h.b16 %v2814
    %v4030 = vunpack.c.l.b16 %v2815
    %v4031 = vunpack.c.h.b16 %v2815
    %v4032 = vunpack.c.l.b16 %v2816
    %v4033 = vunpack.c.l.b16 %v2817
    %v4034 = vunpack.c.h.b16 %v2817
    %v4035 = vunpack.c.l.b16 %v2818
    %v4036 = vunpack.c.h.b16 %v2818
    %v4037 = vunpack.c.l.b16 %v2819
    %v4038 = vunpack.c.h.b16 %v2819
    %v4039 = vunpack.c.l.b16 %v2820
    %v4040 = vunpack.c.l.b16 %v2821
    %v4041 = vunpack.c.h.b16 %v2821
    %v4042 = vunpack.c.l.b16 %v2822
    %v4043 = vunpack.c.h.b16 %v2822
    %v4044 = vunpack.c.l.b16 %v2823
    %v4045 = vunpack.c.h.b16 %v2823
    %v4046 = vunpack.c.l.b16 %v2824
    %v4047 = vunpack.c.l.b16 %v2825
    %v4048 = vunpack.c.h.b16 %v2825
    %v4049 = vunpack.c.l.b16 %v2826
    %v4050 = vunpack.c.h.b16 %v2826
    %v4051 = vunpack.c.l.b16 %v2827
    %v4052 = vunpack.c.h.b16 %v2827
    %v4053 = vunpack.c.l.b16 %v2828
    %v4054 = vunpack.c.l.b16 %v2829
    %v4055 = vunpack.c.h.b16 %v2829
    %v4056 = vunpack.c.l.b16 %v2830
    %v4057 = vunpack.c.h.b16 %v2830
    %v4058 = vunpack.c.l.b16 %v2831
    %v4059 = vunpack.c.h.b16 %v2831
    %v4060 = vunpack.c.l.b16 %v2832
    %v4061 = vunpack.c.l.b16 %v2833
    %v4062 = vunpack.c.h.b16 %v2833
    %v4063 = vunpack.c.l.b16 %v2834
    %v4064 = vunpack.c.h.b16 %v2834
    %v4065 = vunpack.c.l.b16 %v2835
    %v4066 = vunpack.c.h.b16 %v2835
    %v4067 = vunpack.c.l.b16 %v2836
    %v4068 = vunpack.c.l.b16 %v2837
    %v4069 = vunpack.c.h.b16 %v2837
    %v4070 = vunpack.c.l.b16 %v2838
    %v4071 = vunpack.c.h.b16 %v2838
    %v4072 = vunpack.c.l.b16 %v2839
    %v4073 = vunpack.c.h.b16 %v2839
    %v4074 = vunpack.c.l.b16 %v2840
    %v4075 = vunpack.c.l.b16 %v2841
    %v4076 = vunpack.c.h.b16 %v2841
    %v4077 = vunpack.c.l.b16 %v2842
    %v4078 = vunpack.c.h.b16 %v2842
    %v4079 = vunpack.c.l.b16 %v2843
    %v4080 = vunpack.c.h.b16 %v2843
    %v4081 = vunpack.c.l.b16 %v2844
    %v4082 = vunpack.c.l.b16 %v2845
    %v4083 = vunpack.c.h.b16 %v2845
    %v4084 = vunpack.c.l.b16 %v2846
    %v4085 = vunpack.c.h.b16 %v2846
    %v4086 = vunpack.c.l.b16 %v2847
    %v4087 = vunpack.c.h.b16 %v2847
    %v4088 = vunpack.c.l.b16 %v2848
    %v4089 = vunpack.c.l.b16 %v2849
    %v4090 = vunpack.c.h.b16 %v2849
    %v4091 = vunpack.c.l.b16 %v2850
    %v4092 = vunpack.c.h.b16 %v2850
    %v4093 = vunpack.c.l.b16 %v2851
    %v4094 = vunpack.c.h.b16 %v2851
    %v4095 = vunpack.c.l.b16 %v2852
    %v4096 = vunpack.c.l.b16 %v2853
    %v4097 = vunpack.c.h.b16 %v2853
    %v4098 = vunpack.c.l.b16 %v2854
    %v4099 = vunpack.c.h.b16 %v2854
    %v4100 = vunpack.c.l.b16 %v2855
    %v4101 = vunpack.c.h.b16 %v2855
    %v4102 = vunpack.c.l.b16 %v2856
    %v4103 = vunpack.c.l.b16 %v2857
    %v4104 = vunpack.c.h.b16 %v2857
    %v4105 = vunpack.c.l.b16 %v2858
    %v4106 = vunpack.c.h.b16 %v2858
    %v4107 = vunpack.c.l.b16 %v2859
    %v4108 = vunpack.c.h.b16 %v2859
    %v4109 = vunpack.c.l.b16 %v2860
    %v4110 = vunpack.c.l.b16 %v2861
    %v4111 = vunpack.c.h.b16 %v2861
    %v4112 = vunpack.c.l.b16 %v2862
    %v4113 = vunpack.c.h.b16 %v2862
    %v4114 = vunpack.c.l.b16 %v2863
    %v4115 = vunpack.c.h.b16 %v2863
    %v4116 = vunpack.c.l.b16 %v2864
    %v4117 = vunpack.c.l.b16 %v2865
    %v4118 = vunpack.c.h.b16 %v2865
    %v4119 = vunpack.c.l.b16 %v2866
    %v4120 = vunpack.c.h.b16 %v2866
    %v4121 = vunpack.c.l.b16 %v2867
    %v4122 = vunpack.c.h.b16 %v2867
    %v4123 = vunpack.c.l.b16 %v2868
    %v4124 = vunpack.c.l.b16 %v2869
    %v4125 = vunpack.c.h.b16 %v2869
    %v4126 = vunpack.c.l.b16 %v2870
    %v4127 = vunpack.c.h.b16 %v2870
    %v4128 = vunpack.c.l.b16 %v2871
    %v4129 = vunpack.c.h.b16 %v2871
    %v4130 = vunpack.c.l.b16 %v2872
    %v4131 = vunpack.c.l.b16 %v2873
    %v4132 = vunpack.c.h.b16 %v2873
    %v4133 = vunpack.c.l.b16 %v2874
    %v4134 = vunpack.c.h.b16 %v2874
    %v4135 = vunpack.c.l.b16 %v2875
    %v4136 = vunpack.c.h.b16 %v2875
    %v4137 = vunpack.c.l.b16 %v2876
    %v4138 = vunpack.c.l.b16 %v2877
    %v4139 = vunpack.c.h.b16 %v2877
    %v4140 = vunpack.c.l.b16 %v2878
    %v4141 = vunpack.c.h.b16 %v2878
    %v4142 = vunpack.c.l.b16 %v2879
    %v4143 = vunpack.c.h.b16 %v2879
    %v4144 = vunpack.c.l.b16 %v2880
    %v4145 = vunpack.c.l.b16 %v2881
    %v4146 = vunpack.c.h.b16 %v2881
    %v4147 = vunpack.c.l.b16 %v2882
    %v4148 = vunpack.c.h.b16 %v2882
    %v4149 = vunpack.c.l.b16 %v2883
    %v4150 = vunpack.c.h.b16 %v2883
    %v4151 = vunpack.c.l.b16 %v2884
    %v4152 = vunpack.c.l.b16 %v2885
    %v4153 = vunpack.c.h.b16 %v2885
    %v4154 = vunpack.c.l.b16 %v2886
    %v4155 = vunpack.c.h.b16 %v2886
    %v4156 = vunpack.c.l.b16 %v2887
    %v4157 = vunpack.c.h.b16 %v2887
    %v4158 = vunpack.c.l.b16 %v2888
    %v4159 = vunpack.c.l.b16 %v2889
    %v4160 = vunpack.c.h.b16 %v2889
    %v4161 = vunpack.c.l.b16 %v2890
    %v4162 = vunpack.c.h.b16 %v2890
    %v4163 = vunpack.c.l.b16 %v2891
    %v4164 = vunpack.c.h.b16 %v2891
    %v4165 = vunpack.c.l.b16 %v2892
    %v4166 = vunpack.c.l.b16 %v2893
    %v4167 = vunpack.c.h.b16 %v2893
    %v4168 = vunpack.c.l.b16 %v2894
    %v4169 = vunpack.c.h.b16 %v2894
    %v4170 = vunpack.c.l.b16 %v2895
    %v4171 = vunpack.c.h.b16 %v2895
    %v4172 = vunpack.c.l.b16 %v2896
    %v4173 = vunpack.c.l.b16 %v2897
    %v4174 = vunpack.c.h.b16 %v2897
    %v4175 = vunpack.c.l.b16 %v2898
    %v4176 = vunpack.c.h.b16 %v2898
    %v4177 = vunpack.c.l.b16 %v2899
    %v4178 = vunpack.c.h.b16 %v2899
    %v4179 = vunpack.c.l.b16 %v2900
    %v4180 = vunpack.c.l.b16 %v2901
    %v4181 = vunpack.c.h.b16 %v2901
    %v4182 = vunpack.c.l.b16 %v2902
    %v4183 = vunpack.c.h.b16 %v2902
    %v4184 = vunpack.c.l.b16 %v2903
    %v4185 = vunpack.c.h.b16 %v2903
    %v4186 = vunpack.c.l.b16 %v2904
    %v4187 = vunpack.c.l.b16 %v2905
    %v4188 = vunpack.c.h.b16 %v2905
    %v4189 = vunpack.c.l.b16 %v2906
    %v4190 = vunpack.c.h.b16 %v2906
    %v4191 = vunpack.c.l.b16 %v2907
    %v4192 = vunpack.c.h.b16 %v2907
    %v4193 = vunpack.c.l.b16 %v2908
    %v4194 = vunpack.c.l.b16 %v2909
    %v4195 = vunpack.c.h.b16 %v2909
    %v4196 = vunpack.c.l.b16 %v2910
    %v4197 = vunpack.c.h.b16 %v2910
    %v4198 = vunpack.c.l.b16 %v2911
    %v4199 = vunpack.c.h.b16 %v2911
    %v4200 = vunpack.c.l.b16 %v2912
    %v4201 = vunpack.c.l.b16 %v2913
    %v4202 = vunpack.c.h.b16 %v2913
    %v4203 = vunpack.c.l.b16 %v2914
    %v4204 = vunpack.c.h.b16 %v2914
    %v4205 = vunpack.c.l.b16 %v2915
    %v4206 = vunpack.c.h.b16 %v2915
    %v4207 = vunpack.c.l.b16 %v2916
    %v4208 = vunpack.c.l.b16 %v2917
    %v4209 = vunpack.c.h.b16 %v2917
    %v4210 = vunpack.c.l.b16 %v2918
    %v4211 = vunpack.c.h.b16 %v2918
    %v4212 = vunpack.c.l.b16 %v2919
    %v4213 = vunpack.c.h.b16 %v2919
    %v4214 = vunpack.c.l.b16 %v2920
    %v4215 = vunpack.c.l.b16 %v2921
    %v4216 = vunpack.c.h.b16 %v2921
    %v4217 = vunpack.c.l.b16 %v2922
    %v4218 = vunpack.c.h.b16 %v2922
    %v4219 = vunpack.c.l.b16 %v2923
    %v4220 = vunpack.c.h.b16 %v2923
    %v4221 = vunpack.c.l.b16 %v2924
    %v4222 = vunpack.c.l.b16 %v2925
    %v4223 = vunpack.c.h.b16 %v2925
    %v4224 = vunpack.c.l.b16 %v2926
    %v4225 = vunpack.c.h.b16 %v2926
    %v4226 = vunpack.c.l.b16 %v2927
    %v4227 = vunpack.c.h.b16 %v2927
    %v4228 = vunpack.c.l.b16 %v2928
    %v4229 = vunpack.c.l.b16 %v2929
    %v4230 = vunpack.c.h.b16 %v2929
    %v4231 = vunpack.c.l.b16 %v2930
    %v4232 = vunpack.c.h.b16 %v2930
    %v4233 = vunpack.c.l.b16 %v2931
    %v4234 = vunpack.c.h.b16 %v2931
    %v4235 = vunpack.c.l.b16 %v2932
    %v4236 = vunpack.c.l.b16 %v2933
    %v4237 = vunpack.c.h.b16 %v2933
    %v4238 = vunpack.c.l.b16 %v2934
    %v4239 = vunpack.c.h.b16 %v2934
    %v4240 = vunpack.c.l.b16 %v2935
    %v4241 = vunpack.c.h.b16 %v2935
    %v4242 = vunpack.c.l.b16 %v2936
    %v4243 = vunpack.c.l.b16 %v2937
    %v4244 = vunpack.c.h.b16 %v2937
    %v4245 = vunpack.c.l.b16 %v2938
    %v4246 = vunpack.c.h.b16 %v2938
    %v4247 = vunpack.c.l.b16 %v2939
    %v4248 = vunpack.c.h.b16 %v2939
    %v4249 = vunpack.c.l.b16 %v2940
    %v4250 = vunpack.c.l.b16 %v2941
    %v4251 = vunpack.c.h.b16 %v2941
    %v4252 = vunpack.c.l.b16 %v2942
    %v4253 = vunpack.c.h.b16 %v2942
    %v4254 = vunpack.c.l.b16 %v2943
    %v4255 = vunpack.c.h.b16 %v2943
    %v4256 = vunpack.c.l.b16 %v2944
    %v4257 = vunpack.c.l.b16 %v2945
    %v4258 = vunpack.c.h.b16 %v2945
    %v4259 = vunpack.c.l.b16 %v2946
    %v4260 = vunpack.c.h.b16 %v2946
    %v4261 = vunpack.c.l.b16 %v2947
    %v4262 = vunpack.c.h.b16 %v2947
    %v4263 = vunpack.c.l.b16 %v2948
    %v4264 = vunpack.c.l.b16 %v2949
    %v4265 = vunpack.c.h.b16 %v2949
    %v4266 = vunpack.c.l.b16 %v2950
    %v4267 = vunpack.c.h.b16 %v2950
    %v4268 = vunpack.c.l.b16 %v2951
    %v4269 = vunpack.c.h.b16 %v2951
    %v4270 = vunpack.c.l.b16 %v2952
    %v4271 = vunpack.c.l.b16 %v2953
    %v4272 = vunpack.c.h.b16 %v2953
    %v4273 = vunpack.c.l.b16 %v2954
    %v4274 = vunpack.c.h.b16 %v2954
    %v4275 = vunpack.c.l.b16 %v2955
    %v4276 = vunpack.c.h.b16 %v2955
    %v4277 = vunpack.c.l.b16 %v2956
    %v4278 = vunpack.c.l.b16 %v2957
    %v4279 = vunpack.c.h.b16 %v2957
    %v4280 = vunpack.c.l.b16 %v2958
    %v4281 = vunpack.c.h.b16 %v2958
    %v4282 = vunpack.c.l.b16 %v2959
    %v4283 = vunpack.c.h.b16 %v2959
    %v4284 = vunpack.c.l.b16 %v2960
    %v4285 = vunpack.c.l.b16 %v2961
    %v4286 = vunpack.c.h.b16 %v2961
    %v4287 = vunpack.c.l.b16 %v2962
    %v4288 = vunpack.c.h.b16 %v2962
    %v4289 = vunpack.c.l.b16 %v2963
    %v4290 = vunpack.c.h.b16 %v2963
    %v4291 = vunpack.c.l.b16 %v2964
    %v4292 = vunpack.c.l.b16 %v2965
    %v4293 = vunpack.c.h.b16 %v2965
    %v4294 = vunpack.c.l.b16 %v2966
    %v4295 = vunpack.c.h.b16 %v2966
    %v4296 = vunpack.c.l.b16 %v2967
    %v4297 = vunpack.c.h.b16 %v2967
    %v4298 = vunpack.c.l.b16 %v2968
    %v4299 = vunpack.c.l.b16 %v2969
    %v4300 = vunpack.c.h.b16 %v2969
    %v4301 = vunpack.c.l.b16 %v2970
    %v4302 = vunpack.c.h.b16 %v2970
    %v4303 = vunpack.c.l.b16 %v2971
    %v4304 = vunpack.c.h.b16 %v2971
    %v4305 = vunpack.c.l.b16 %v2972
    %v4306 = vunpack.c.l.b16 %v2973
    %v4307 = vunpack.c.h.b16 %v2973
    %v4308 = vunpack.c.l.b16 %v2974
    %v4309 = vunpack.c.h.b16 %v2974
    %v4310 = vunpack.c.l.b16 %v2975
    %v4311 = vunpack.c.h.b16 %v2975
    %v4312 = vunpack.c.l.b16 %v2976
    %v4313 = vunpack.c.l.b16 %v2977
    %v4314 = vunpack.c.h.b16 %v2977
    %v4315 = vunpack.c.l.b16 %v2978
    %v4316 = vunpack.c.h.b16 %v2978
    %v4317 = vunpack.c.l.b16 %v2979
    %v4318 = vunpack.c.h.b16 %v2979
    %v4319 = vunpack.c.l.b16 %v2980
    %v4320 = vunpack.c.l.b16 %v2981
    %v4321 = vunpack.c.h.b16 %v2981
    %v4322 = vunpack.c.l.b16 %v2982
    %v4323 = vunpack.c.h.b16 %v2982
    %v4324 = vunpack.c.l.b16 %v2983
    %v4325 = vunpack.c.h.b16 %v2983
    %v4326 = vunpack.c.l.b16 %v2984
    %v4327 = vunpack.c.l.b16 %v2985
    %v4328 = vunpack.c.h.b16 %v2985
    %v4329 = vunpack.c.l.b16 %v2986
    %v4330 = vunpack.c.h.b16 %v2986
    %v4331 = vunpack.c.l.b16 %v2987
    %v4332 = vunpack.c.h.b16 %v2987
    %v4333 = vunpack.c.l.b16 %v2988
    %v4334 = vunpack.c.l.b16 %v2989
    %v4335 = vunpack.c.h.b16 %v2989
    %v4336 = vunpack.c.l.b16 %v2990
    %v4337 = vunpack.c.h.b16 %v2990
    %v4338 = vunpack.c.l.b16 %v2991
    %v4339 = vunpack.c.h.b16 %v2991
    %v4340 = vunpack.c.l.b16 %v2992
    %v4341 = vunpack.c.l.b16 %v2993
    %v4342 = vunpack.c.h.b16 %v2993
    %v4343 = vunpack.c.l.b16 %v2994
    %v4344 = vunpack.c.h.b16 %v2994
    %v4345 = vunpack.c.l.b16 %v2995
    %v4346 = vunpack.c.h.b16 %v2995
    %v4347 = vunpack.c.l.b16 %v2996
    %v4348 = vunpack.c.l.b16 %v2997
    %v4349 = vunpack.c.h.b16 %v2997
    %v4350 = vunpack.c.l.b16 %v2998
    %v4351 = vunpack.c.h.b16 %v2998
    %v4352 = vunpack.c.l.b16 %v2999
    %v4353 = vunpack.c.h.b16 %v2999
    %v4354 = vunpack.c.l.b16 %v3000
    %v4355 = vunpack.c.l.b16 %v3001
    %v4356 = vunpack.c.h.b16 %v3001
    %v4357 = vunpack.c.l.b16 %v3002
    %v4358 = vunpack.c.h.b16 %v3002
    %v4359 = vunpack.c.l.b16 %v3003
    %v4360 = vunpack.c.h.b16 %v3003
    %v4361 = vunpack.c.l.b16 %v3004
    %v4362 = vunpack.c.l.b16 %v3005
    %v4363 = vunpack.c.h.b16 %v3005
    %v4364 = vunpack.c.l.b16 %v3006
    %v4365 = vunpack.c.h.b16 %v3006
    %v4366 = vunpack.c.l.b16 %v3007
    %v4367 = vunpack.c.h.b16 %v3007
    %v4368 = vunpack.c.l.b16 %v3008
    %v4369 = vunpack.c.l.b16 %v3009
    %v4370 = vunpack.c.h.b16 %v3009
    %v4371 = vunpack.c.l.b16 %v3010
    %v4372 = vunpack.c.h.b16 %v3010
    %v4373 = vunpack.c.l.b16 %v3011
    %v4374 = vunpack.c.h.b16 %v3011
    %v4375 = vunpack.c.l.b16 %v3012
    %v4376 = vunpack.c.l.b16 %v3013
    %v4377 = vunpack.c.h.b16 %v3013
    %v4378 = vunpack.c.l.b16 %v3014
    %v4379 = vunpack.c.h.b16 %v3014
    %v4380 = vunpack.c.l.b16 %v3015
    %v4381 = vunpack.c.h.b16 %v3015
    %v4382 = vunpack.c.l.b16 %v3016
    %v4383 = vunpack.c.l.b16 %v3017
    %v4384 = vunpack.c.h.b16 %v3017
    %v4385 = vunpack.c.l.b16 %v3018
    %v4386 = vunpack.c.h.b16 %v3018
    %v4387 = vunpack.c.l.b16 %v3019
    %v4388 = vunpack.c.h.b16 %v3019
    %v4389 = vunpack.c.l.b16 %v3020
    %v4390 = vunpack.c.l.b16 %v3021
    %v4391 = vunpack.c.h.b16 %v3021
    %v4392 = vunpack.c.l.b16 %v3022
    %v4393 = vunpack.c.h.b16 %v3022
    %v4394 = vunpack.c.l.b16 %v3023
    %v4395 = vunpack.c.h.b16 %v3023
    %v4396 = vunpack.c.l.b16 %v3024
    %v4397 = vunpack.c.l.b16 %v3025
    %v4398 = vunpack.c.h.b16 %v3025
    %v4399 = vunpack.c.l.b16 %v3026
    %v4400 = vunpack.c.h.b16 %v3026
    %v4401 = vunpack.c.l.b16 %v3027
    %v4402 = vunpack.c.h.b16 %v3027
    %v4403 = vunpack.c.l.b16 %v3028
    %v4404 = vunpack.c.l.b16 %v3029
    %v4405 = vunpack.c.h.b16 %v3029
    %v4406 = vunpack.c.l.b16 %v3030
    %v4407 = vunpack.c.h.b16 %v3030
    %v4408 = vunpack.c.l.b16 %v3031
    %v4409 = vunpack.c.h.b16 %v3031
    %v4410 = vunpack.c.l.b16 %v3032
    %v4411 = vunpack.c.l.b16 %v3033
    %v4412 = vunpack.c.h.b16 %v3033
    %v4413 = vunpack.c.l.b16 %v3034
    %v4414 = vunpack.c.h.b16 %v3034
    %v4415 = vunpack.c.l.b16 %v3035
    %v4416 = vunpack.c.h.b16 %v3035
    %v4417 = vunpack.c.l.b16 %v3036
    %v4418 = vunpack.c.l.b16 %v3037
    %v4419 = vunpack.c.h.b16 %v3037
    %v4420 = vunpack.c.l.b16 %v3038
    %v4421 = vunpack.c.h.b16 %v3038
    %v4422 = vunpack.c.l.b16 %v3039
    %v4423 = vunpack.c.h.b16 %v3039
    %v4424 = vunpack.c.l.b16 %v3040
    %v4425 = vunpack.c.l.b16 %v3041
    %v4426 = vunpack.c.h.b16 %v3041
    %v4427 = vunpack.c.l.b16 %v3042
    %v4428 = vunpack.c.h.b16 %v3042
    %v4429 = vunpack.c.l.b16 %v3043
    %v4430 = vunpack.c.h.b16 %v3043
    %v4431 = vunpack.c.l.b16 %v3044
    %v4432 = vunpack.c.l.b16 %v3045
    %v4433 = vunpack.c.h.b16 %v3045
    %v4434 = vunpack.c.l.b16 %v3046
    %v4435 = vunpack.c.h.b16 %v3046
    %v4436 = vunpack.c.l.b16 %v3047
    %v4437 = vunpack.c.h.b16 %v3047
    %v4438 = vunpack.c.l.b16 %v3048
    %v4439 = vunpack.c.l.b16 %v3049
    %v4440 = vunpack.c.h.b16 %v3049
    %v4441 = vunpack.c.l.b16 %v3050
    %v4442 = vunpack.c.h.b16 %v3050
    %v4443 = vunpack.c.l.b16 %v3051
    %v4444 = vunpack.c.h.b16 %v3051
    %v4445 = vunpack.c.l.b16 %v3052
    %v4446 = vunpack.c.l.b16 %v3053
    %v4447 = vunpack.c.h.b16 %v3053
    %v4448 = vunpack.c.l.b16 %v3054
    %v4449 = vunpack.c.h.b16 %v3054
    %v4450 = vunpack.c.l.b16 %v3055
    %v4451 = vunpack.c.h.b16 %v3055
    %v4452 = vunpack.c.l.b16 %v3056
    %v4453 = vunpack.c.l.b16 %v3057
    %v4454 = vunpack.c.h.b16 %v3057
    %v4455 = vunpack.c.l.b16 %v3058
    %v4456 = vunpack.c.h.b16 %v3058
    %v4457 = vunpack.c.l.b16 %v3059
    %v4458 = vunpack.c.h.b16 %v3059
    %v4459 = vunpack.c.l.b16 %v3060
    %v4460 = vunpack.c.l.b16 %v3061
    %v4461 = vunpack.c.h.b16 %v3061
    %v4462 = vunpack.c.l.b16 %v3062
    %v4463 = vunpack.c.h.b16 %v3062
    %v4464 = vunpack.c.l.b16 %v3063
    %v4465 = vunpack.c.h.b16 %v3063
    %v4466 = vunpack.c.l.b16 %v3064
    %v4467 = vunpack.c.l.b16 %v3065
    %v4468 = vunpack.c.h.b16 %v3065
    %v4469 = vunpack.c.l.b16 %v3066
    %v4470 = vunpack.c.h.b16 %v3066
    %v4471 = vunpack.c.l.b16 %v3067
    %v4472 = vunpack.c.h.b16 %v3067
    %v4473 = vunpack.c.l.b16 %v3068
    %v4474 = vunpack.c.l.b16 %v3069
    %v4475 = vunpack.c.h.b16 %v3069
    %v4476 = vunpack.c.l.b16 %v3070
    %v4477 = vunpack.c.h.b16 %v3070
    %v4478 = vunpack.c.l.b16 %v3071
    %v4479 = vunpack.c.h.b16 %v3071
    %v4480 = vunpack.c.l.b16 %v3072
    %v4481 = vunpack.c.l.b16 %v3073
    %v4482 = vunpack.c.h.b16 %v3073
    %v4483 = vunpack.c.l.b16 %v3074
    %v4484 = vunpack.c.h.b16 %v3074
    %v4485 = vunpack.c.l.b16 %v3075
    %v4486 = vunpack.c.h.b16 %v3075
    %v4487 = vunpack.c.l.b16 %v3076
    %v4488 = vunpack.c.l.b16 %v3077
    %v4489 = vunpack.c.h.b16 %v3077
    %v4490 = vunpack.c.l.b16 %v3078
    %v4491 = vunpack.c.h.b16 %v3078
    %v4492 = vunpack.c.l.b16 %v3079
    %v4493 = vunpack.c.h.b16 %v3079
    %v4494 = vunpack.c.l.b16 %v3080
    %v4495 = vunpack.c.l.b16 %v3081
    %v4496 = vunpack.c.h.b16 %v3081
    %v4497 = vunpack.c.l.b16 %v3082
    %v4498 = vunpack.c.h.b16 %v3082
    %v4499 = vunpack.c.l.b16 %v3083
    %v4500 = vunpack.c.h.b16 %v3083
    %v4501 = vunpack.c.l.b16 %v3084
    %v4502 = vunpack.c.l.b16 %v3085
    %v4503 = vunpack.c.h.b16 %v3085
    %v4504 = vunpack.c.l.b16 %v3086
    %v4505 = vunpack.c.h.b16 %v3086
    %v4506 = vunpack.c.l.b16 %v3087
    %v4507 = vunpack.c.h.b16 %v3087
    %v4508 = vunpack.c.l.b16 %v3088
    %v4509 = vunpack.c.l.b16 %v3089
    %v4510 = vunpack.c.h.b16 %v3089
    %v4511 = vunpack.c.l.b16 %v3090
    %v4512 = vunpack.c.h.b16 %v3090
    %v4513 = vunpack.c.l.b16 %v3091
    %v4514 = vunpack.c.h.b16 %v3091
    %v4515 = vunpack.c.l.b16 %v3092
    %v4516 = vunpack.c.l.b16 %v3093
    %v4517 = vunpack.c.h.b16 %v3093
    %v4518 = vunpack.c.l.b16 %v3094
    %v4519 = vunpack.c.h.b16 %v3094
    %v4520 = vunpack.c.l.b16 %v3095
    %v4521 = vunpack.c.h.b16 %v3095
    %v4522 = vunpack.c.l.b16 %v3096
    %v4523 = vunpack.c.l.b16 %v3097
    %v4524 = vunpack.c.h.b16 %v3097
    %v4525 = vunpack.c.l.b16 %v3098
    %v4526 = vunpack.c.h.b16 %v3098
    %v4527 = vunpack.c.l.b16 %v3099
    %v4528 = vunpack.c.h.b16 %v3099
    %v4529 = vunpack.c.l.b16 %v3100
    %v4530 = vunpack.c.l.b16 %v3101
    %v4531 = vunpack.c.h.b16 %v3101
    %v4532 = vunpack.c.l.b16 %v3102
    %v4533 = vunpack.c.h.b16 %v3102
    %v4534 = vunpack.c.l.b16 %v3103
    %v4535 = vunpack.c.h.b16 %v3103
    %v4536 = vunpack.c.l.b16 %v3104
    %v4537 = vpack.c.b16 %v3648, %v3641
    %v4538 = vpack.c.b16 %v3649, %v3642
    %v4539 = vpack.c.b16 %v3650, %v3643
    %v4540 = vpack.c.b16 %v3651, %v3644
    %v4541 = vpack.c.b16 %v3652, %v3645
    %v4542 = vpack.c.b16 %v3653, %v3646
    %v4543 = vpack.c.b16 %v3654, %v3647
    %v4544 = vpack.c.b16 %v3662, %v3655
    %v4545 = vpack.c.b16 %v3663, %v3656
    %v4546 = vpack.c.b16 %v3664, %v3657
    %v4547 = vpack.c.b16 %v3665, %v3658
    %v4548 = vpack.c.b16 %v3666, %v3659
    %v4549 = vpack.c.b16 %v3667, %v3660
    %v4550 = vpack.c.b16 %v3668, %v3661
    %v4551 = vpack.c.b16 %v3676, %v3669
    %v4552 = vpack.c.b16 %v3677, %v3670
    %v4553 = vpack.c.b16 %v3678, %v3671
    %v4554 = vpack.c.b16 %v3679, %v3672
    %v4555 = vpack.c.b16 %v3680, %v3673
    %v4556 = vpack.c.b16 %v3681, %v3674
    %v4557 = vpack.c.b16 %v3682, %v3675
    %v4558 = vpack.c.b16 %v3690, %v3683
    %v4559 = vpack.c.b16 %v3691, %v3684
    %v4560 = vpack.c.b16 %v3692, %v3685
    %v4561 = vpack.c.b16 %v3693, %v3686
    %v4562 = vpack.c.b16 %v3694, %v3687
    %v4563 = vpack.c.b16 %v3695, %v3688
    %v4564 = vpack.c.b16 %v3696, %v3689
    %v4565 = vpack.c.b16 %v3704, %v3697
    %v4566 = vpack.c.b16 %v3705, %v3698
    %v4567 = vpack.c.b16 %v3706, %v3699
    %v4568 = vpack.c.b16 %v3707, %v3700
    %v4569 = vpack.c.b16 %v3708, %v3701
    %v4570 = vpack.c.b16 %v3709, %v3702
    %v4571 = vpack.c.b16 %v3710, %v3703
    %v4572 = vpack.c.b16 %v3718, %v3711
    %v4573 = vpack.c.b16 %v3719, %v3712
    %v4574 = vpack.c.b16 %v3720, %v3713
    %v4575 = vpack.c.b16 %v3721, %v3714
    %v4576 = vpack.c.b16 %v3722, %v3715
    %v4577 = vpack.c.b16 %v3723, %v3716
    %v4578 = vpack.c.b16 %v3724, %v3717
    %v4579 = vpack.c.b16 %v3732, %v3725
    %v4580 = vpack.c.b16 %v3733, %v3726
    %v4581 = vpack.c.b16 %v3734, %v3727
    %v4582 = vpack.c.b16 %v3735, %v3728
    %v4583 = vpack.c.b16 %v3736, %v3729
    %v4584 = vpack.c.b16 %v3737, %v3730
    %v4585 = vpack.c.b16 %v3738, %v3731
    %v4586 = vpack.c.b16 %v3746, %v3739
    %v4587 = vpack.c.b16 %v3747, %v3740
    %v4588 = vpack.c.b16 %v3748, %v3741
    %v4589 = vpack.c.b16 %v3749, %v3742
    %v4590 = vpack.c.b16 %v3750, %v3743
    %v4591 = vpack.c.b16 %v3751, %v3744
    %v4592 = vpack.c.b16 %v3752, %v3745
    %v4593 = vpack.c.b16 %v3760, %v3753
    %v4594 = vpack.c.b16 %v3761, %v3754
    %v4595 = vpack.c.b16 %v3762, %v3755
    %v4596 = vpack.c.b16 %v3763, %v3756
    %v4597 = vpack.c.b16 %v3764, %v3757
    %v4598 = vpack.c.b16 %v3765, %v3758
    %v4599 = vpack.c.b16 %v3766, %v3759
    %v4600 = vpack.c.b16 %v3774, %v3767
    %v4601 = vpack.c.b16 %v3775, %v3768
    %v4602 = vpack.c.b16 %v3776, %v3769
    %v4603 = vpack.c.b16 %v3777, %v3770
    %v4604 = vpack.c.b16 %v3778, %v3771
    %v4605 = vpack.c.b16 %v3779, %v3772
    %v4606 = vpack.c.b16 %v3780, %v3773
    %v4607 = vpack.c.b16 %v3788, %v3781
    %v4608 = vpack.c.b16 %v3789, %v3782
    %v4609 = vpack.c.b16 %v3790, %v3783
    %v4610 = vpack.c.b16 %v3791, %v3784
    %v4611 = vpack.c.b16 %v3792, %v3785
    %v4612 = vpack.c.b16 %v3793, %v3786
    %v4613 = vpack.c.b16 %v3794, %v3787
    %v4614 = vpack.c.b16 %v3802, %v3795
    %v4615 = vpack.c.b16 %v3803, %v3796
    %v4616 = vpack.c.b16 %v3804, %v3797
    %v4617 = vpack.c.b16 %v3805, %v3798
    %v4618 = vpack.c.b16 %v3806, %v3799
    %v4619 = vpack.c.b16 %v3807, %v3800
    %v4620 = vpack.c.b16 %v3808, %v3801
    %v4621 = vpack.c.b16 %v3816, %v3809
    %v4622 = vpack.c.b16 %v3817, %v3810
    %v4623 = vpack.c.b16 %v3818, %v3811
    %v4624 = vpack.c.b16 %v3819, %v3812
    %v4625 = vpack.c.b16 %v3820, %v3813
    %v4626 = vpack.c.b16 %v3821, %v3814
    %v4627 = vpack.c.b16 %v3822, %v3815
    %v4628 = vpack.c.b16 %v3830, %v3823
    %v4629 = vpack.c.b16 %v3831, %v3824
    %v4630 = vpack.c.b16 %v3832, %v3825
    %v4631 = vpack.c.b16 %v3833, %v3826
    %v4632 = vpack.c.b16 %v3834, %v3827
    %v4633 = vpack.c.b16 %v3835, %v3828
    %v4634 = vpack.c.b16 %v3836, %v3829
    %v4635 = vpack.c.b16 %v3844, %v3837
    %v4636 = vpack.c.b16 %v3845, %v3838
    %v4637 = vpack.c.b16 %v3846, %v3839
    %v4638 = vpack.c.b16 %v3847, %v3840
    %v4639 = vpack.c.b16 %v3848, %v3841
    %v4640 = vpack.c.b16 %v3849, %v3842
    %v4641 = vpack.c.b16 %v3850, %v3843
    %v4642 = vpack.c.b16 %v3858, %v3851
    %v4643 = vpack.c.b16 %v3859, %v3852
    %v4644 = vpack.c.b16 %v3860, %v3853
    %v4645 = vpack.c.b16 %v3861, %v3854
    %v4646 = vpack.c.b16 %v3862, %v3855
    %v4647 = vpack.c.b16 %v3863, %v3856
    %v4648 = vpack.c.b16 %v3864, %v3857
    %v4649 = vpack.c.b16 %v3872, %v3865
    %v4650 = vpack.c.b16 %v3873, %v3866
    %v4651 = vpack.c.b16 %v3874, %v3867
    %v4652 = vpack.c.b16 %v3875, %v3868
    %v4653 = vpack.c.b16 %v3876, %v3869
    %v4654 = vpack.c.b16 %v3877, %v3870
    %v4655 = vpack.c.b16 %v3878, %v3871
    %v4656 = vpack.c.b16 %v3886, %v3879
    %v4657 = vpack.c.b16 %v3887, %v3880
    %v4658 = vpack.c.b16 %v3888, %v3881
    %v4659 = vpack.c.b16 %v3889, %v3882
    %v4660 = vpack.c.b16 %v3890, %v3883
    %v4661 = vpack.c.b16 %v3891, %v3884
    %v4662 = vpack.c.b16 %v3892, %v3885
    %v4663 = vpack.c.b16 %v3900, %v3893
    %v4664 = vpack.c.b16 %v3901, %v3894
    %v4665 = vpack.c.b16 %v3902, %v3895
    %v4666 = vpack.c.b16 %v3903, %v3896
    %v4667 = vpack.c.b16 %v3904, %v3897
    %v4668 = vpack.c.b16 %v3905, %v3898
    %v4669 = vpack.c.b16 %v3906, %v3899
    %v4670 = vpack.c.b16 %v3914, %v3907
    %v4671 = vpack.c.b16 %v3915, %v3908
    %v4672 = vpack.c.b16 %v3916, %v3909
    %v4673 = vpack.c.b16 %v3917, %v3910
    %v4674 = vpack.c.b16 %v3918, %v3911
    %v4675 = vpack.c.b16 %v3919, %v3912
    %v4676 = vpack.c.b16 %v3920, %v3913
    %v4677 = vpack.c.b16 %v3928, %v3921
    %v4678 = vpack.c.b16 %v3929, %v3922
    %v4679 = vpack.c.b16 %v3930, %v3923
    %v4680 = vpack.c.b16 %v3931, %v3924
    %v4681 = vpack.c.b16 %v3932, %v3925
    %v4682 = vpack.c.b16 %v3933, %v3926
    %v4683 = vpack.c.b16 %v3934, %v3927
    %v4684 = vpack.c.b16 %v3942, %v3935
    %v4685 = vpack.c.b16 %v3943, %v3936
    %v4686 = vpack.c.b16 %v3944, %v3937
    %v4687 = vpack.c.b16 %v3945, %v3938
    %v4688 = vpack.c.b16 %v3946, %v3939
    %v4689 = vpack.c.b16 %v3947, %v3940
    %v4690 = vpack.c.b16 %v3948, %v3941
    %v4691 = vpack.c.b16 %v3956, %v3949
    %v4692 = vpack.c.b16 %v3957, %v3950
    %v4693 = vpack.c.b16 %v3958, %v3951
    %v4694 = vpack.c.b16 %v3959, %v3952
    %v4695 = vpack.c.b16 %v3960, %v3953
    %v4696 = vpack.c.b16 %v3961, %v3954
    %v4697 = vpack.c.b16 %v3962, %v3955
    %v4698 = vpack.c.b16 %v3970, %v3963
    %v4699 = vpack.c.b16 %v3971, %v3964
    %v4700 = vpack.c.b16 %v3972, %v3965
    %v4701 = vpack.c.b16 %v3973, %v3966
    %v4702 = vpack.c.b16 %v3974, %v3967
    %v4703 = vpack.c.b16 %v3975, %v3968
    %v4704 = vpack.c.b16 %v3976, %v3969
    %v4705 = vpack.c.b16 %v3984, %v3977
    %v4706 = vpack.c.b16 %v3985, %v3978
    %v4707 = vpack.c.b16 %v3986, %v3979
    %v4708 = vpack.c.b16 %v3987, %v3980
    %v4709 = vpack.c.b16 %v3988, %v3981
    %v4710 = vpack.c.b16 %v3989, %v3982
    %v4711 = vpack.c.b16 %v3990, %v3983
    %v4712 = vpack.c.b16 %v3998, %v3991
    %v4713 = vpack.c.b16 %v3999, %v3992
    %v4714 = vpack.c.b16 %v4000, %v3993
    %v4715 = vpack.c.b16 %v4001, %v3994
    %v4716 = vpack.c.b16 %v4002, %v3995
    %v4717 = vpack.c.b16 %v4003, %v3996
    %v4718 = vpack.c.b16 %v4004, %v3997
    %v4719 = vpack.c.b16 %v4012, %v4005
    %v4720 = vpack.c.b16 %v4013, %v4006
    %v4721 = vpack.c.b16 %v4014, %v4007
    %v4722 = vpack.c.b16 %v4015, %v4008
    %v4723 = vpack.c.b16 %v4016, %v4009
    %v4724 = vpack.c.b16 %v4017, %v4010
    %v4725 = vpack.c.b16 %v4018, %v4011
    %v4726 = vpack.c.b16 %v4026, %v4019
    %v4727 = vpack.c.b16 %v4027, %v4020
    %v4728 = vpack.c.b16 %v4028, %v4021
    %v4729 = vpack.c.b16 %v4029, %v4022
    %v4730 = vpack.c.b16 %v4030, %v4023
    %v4731 = vpack.c.b16 %v4031, %v4024
    %v4732 = vpack.c.b16 %v4032, %v4025
    %v4733 = vpack.c.b16 %v4040, %v4033
    %v4734 = vpack.c.b16 %v4041, %v4034
    %v4735 = vpack.c.b16 %v4042, %v4035
    %v4736 = vpack.c.b16 %v4043, %v4036
    %v4737 = vpack.c.b16 %v4044, %v4037
    %v4738 = vpack.c.b16 %v4045, %v4038
    %v4739 = vpack.c.b16 %v4046, %v4039
    %v4740 = vpack.c.b16 %v4054, %v4047
    %v4741 = vpack.c.b16 %v4055, %v4048
    %v4742 = vpack.c.b16 %v4056, %v4049
    %v4743 = vpack.c.b16 %v4057, %v4050
    %v4744 = vpack.c.b16 %v4058, %v4051
    %v4745 = vpack.c.b16 %v4059, %v4052
    %v4746 = vpack.c.b16 %v4060, %v4053
    %v4747 = vpack.c.b16 %v4068, %v4061
    %v4748 = vpack.c.b16 %v4069, %v4062
    %v4749 = vpack.c.b16 %v4070, %v4063
    %v4750 = vpack.c.b16 %v4071, %v4064
    %v4751 = vpack.c.b16 %v4072, %v4065
    %v4752 = vpack.c.b16 %v4073, %v4066
    %v4753 = vpack.c.b16 %v4074, %v4067
    %v4754 = vpack.c.b16 %v4082, %v4075
    %v4755 = vpack.c.b16 %v4083, %v4076
    %v4756 = vpack.c.b16 %v4084, %v4077
    %v4757 = vpack.c.b16 %v4085, %v4078
    %v4758 = vpack.c.b16 %v4086, %v4079
    %v4759 = vpack.c.b16 %v4087, %v4080
    %v4760 = vpack.c.b16 %v4088, %v4081
    %v4761 = vpack.c.b16 %v4096, %v4089
    %v4762 = vpack.c.b16 %v4097, %v4090
    %v4763 = vpack.c.b16 %v4098, %v4091
    %v4764 = vpack.c.b16 %v4099, %v4092
    %v4765 = vpack.c.b16 %v4100, %v4093
    %v4766 = vpack.c.b16 %v4101, %v4094
    %v4767 = vpack.c.b16 %v4102, %v4095
    %v4768 = vpack.c.b16 %v4110, %v4103
    %v4769 = vpack.c.b16 %v4111, %v4104
    %v4770 = vpack.c.b16 %v4112, %v4105
    %v4771 = vpack.c.b16 %v4113, %v4106
    %v4772 = vpack.c.b16 %v4114, %v4107
    %v4773 = vpack.c.b16 %v4115, %v4108
    %v4774 = vpack.c.b16 %v4116, %v4109
    %v4775 = vpack.c.b16 %v4124, %v4117
    %v4776 = vpack.c.b16 %v4125, %v4118
    %v4777 = vpack.c.b16 %v4126, %v4119
    %v4778 = vpack.c.b16 %v4127, %v4120
    %v4779 = vpack.c.b16 %v4128, %v4121
    %v4780 = vpack.c.b16 %v4129, %v4122
    %v4781 = vpack.c.b16 %v4130, %v4123
    %v4782 = vpack.c.b16 %v4138, %v4131
    %v4783 = vpack.c.b16 %v4139, %v4132
    %v4784 = vpack.c.b16 %v4140, %v4133
    %v4785 = vpack.c.b16 %v4141, %v4134
    %v4786 = vpack.c.b16 %v4142, %v4135
    %v4787 = vpack.c.b16 %v4143, %v4136
    %v4788 = vpack.c.b16 %v4144, %v4137
    %v4789 = vpack.c.b16 %v4152, %v4145
    %v4790 = vpack.c.b16 %v4153, %v4146
    %v4791 = vpack.c.b16 %v4154, %v4147
    %v4792 = vpack.c.b16 %v4155, %v4148
    %v4793 = vpack.c.b16 %v4156, %v4149
    %v4794 = vpack.c.b16 %v4157, %v4150
    %v4795 = vpack.c.b16 %v4158, %v4151
    %v4796 = vpack.c.b16 %v4166, %v4159
    %v4797 = vpack.c.b16 %v4167, %v4160
    %v4798 = vpack.c.b16 %v4168, %v4161
    %v4799 = vpack.c.b16 %v4169, %v4162
    %v4800 = vpack.c.b16 %v4170, %v4163
    %v4801 = vpack.c.b16 %v4171, %v4164
    %v4802 = vpack.c.b16 %v4172, %v4165
    %v4803 = vpack.c.b16 %v4180, %v4173
    %v4804 = vpack.c.b16 %v4181, %v4174
    %v4805 = vpack.c.b16 %v4182, %v4175
    %v4806 = vpack.c.b16 %v4183, %v4176
    %v4807 = vpack.c.b16 %v4184, %v4177
    %v4808 = vpack.c.b16 %v4185, %v4178
    %v4809 = vpack.c.b16 %v4186, %v4179
    %v4810 = vpack.c.b16 %v4194, %v4187
    %v4811 = vpack.c.b16 %v4195, %v4188
    %v4812 = vpack.c.b16 %v4196, %v4189
    %v4813 = vpack.c.b16 %v4197, %v4190
    %v4814 = vpack.c.b16 %v4198, %v4191
    %v4815 = vpack.c.b16 %v4199, %v4192
    %v4816 = vpack.c.b16 %v4200, %v4193
    %v4817 = vpack.c.b16 %v4208, %v4201
    %v4818 = vpack.c.b16 %v4209, %v4202
    %v4819 = vpack.c.b16 %v4210, %v4203
    %v4820 = vpack.c.b16 %v4211, %v4204
    %v4821 = vpack.c.b16 %v4212, %v4205
    %v4822 = vpack.c.b16 %v4213, %v4206
    %v4823 = vpack.c.b16 %v4214, %v4207
    %v4824 = vpack.c.b16 %v4222, %v4215
    %v4825 = vpack.c.b16 %v4223, %v4216
    %v4826 = vpack.c.b16 %v4224, %v4217
    %v4827 = vpack.c.b16 %v4225, %v4218
    %v4828 = vpack.c.b16 %v4226, %v4219
    %v4829 = vpack.c.b16 %v4227, %v4220
    %v4830 = vpack.c.b16 %v4228, %v4221
    %v4831 = vpack.c.b16 %v4236, %v4229
    %v4832 = vpack.c.b16 %v4237, %v4230
    %v4833 = vpack.c.b16 %v4238, %v4231
    %v4834 = vpack.c.b16 %v4239, %v4232
    %v4835 = vpack.c.b16 %v4240, %v4233
    %v4836 = vpack.c.b16 %v4241, %v4234
    %v4837 = vpack.c.b16 %v4242, %v4235
    %v4838 = vpack.c.b16 %v4250, %v4243
    %v4839 = vpack.c.b16 %v4251, %v4244
    %v4840 = vpack.c.b16 %v4252, %v4245
    %v4841 = vpack.c.b16 %v4253, %v4246
    %v4842 = vpack.c.b16 %v4254, %v4247
    %v4843 = vpack.c.b16 %v4255, %v4248
    %v4844 = vpack.c.b16 %v4256, %v4249
    %v4845 = vpack.c.b16 %v4264, %v4257
    %v4846 = vpack.c.b16 %v4265, %v4258
    %v4847 = vpack.c.b16 %v4266, %v4259
    %v4848 = vpack.c.b16 %v4267, %v4260
    %v4849 = vpack.c.b16 %v4268, %v4261
    %v4850 = vpack.c.b16 %v4269, %v4262
    %v4851 = vpack.c.b16 %v4270, %v4263
    %v4852 = vpack.c.b16 %v4278, %v4271
    %v4853 = vpack.c.b16 %v4279, %v4272
    %v4854 = vpack.c.b16 %v4280, %v4273
    %v4855 = vpack.c.b16 %v4281, %v4274
    %v4856 = vpack.c.b16 %v4282, %v4275
    %v4857 = vpack.c.b16 %v4283, %v4276
    %v4858 = vpack.c.b16 %v4284, %v4277
    %v4859 = vpack.c.b16 %v4292, %v4285
    %v4860 = vpack.c.b16 %v4293, %v4286
    %v4861 = vpack.c.b16 %v4294, %v4287
    %v4862 = vpack.c.b16 %v4295, %v4288
    %v4863 = vpack.c.b16 %v4296, %v4289
    %v4864 = vpack.c.b16 %v4297, %v4290
    %v4865 = vpack.c.b16 %v4298, %v4291
    %v4866 = vpack.c.b16 %v4306, %v4299
    %v4867 = vpack.c.b16 %v4307, %v4300
    %v4868 = vpack.c.b16 %v4308, %v4301
    %v4869 = vpack.c.b16 %v4309, %v4302
    %v4870 = vpack.c.b16 %v4310, %v4303
    %v4871 = vpack.c.b16 %v4311, %v4304
    %v4872 = vpack.c.b16 %v4312, %v4305
    %v4873 = vpack.c.b16 %v4320, %v4313
    %v4874 = vpack.c.b16 %v4321, %v4314
    %v4875 = vpack.c.b16 %v4322, %v4315
    %v4876 = vpack.c.b16 %v4323, %v4316
    %v4877 = vpack.c.b16 %v4324, %v4317
    %v4878 = vpack.c.b16 %v4325, %v4318
    %v4879 = vpack.c.b16 %v4326, %v4319
    %v4880 = vpack.c.b16 %v4334, %v4327
    %v4881 = vpack.c.b16 %v4335, %v4328
    %v4882 = vpack.c.b16 %v4336, %v4329
    %v4883 = vpack.c.b16 %v4337, %v4330
    %v4884 = vpack.c.b16 %v4338, %v4331
    %v4885 = vpack.c.b16 %v4339, %v4332
    %v4886 = vpack.c.b16 %v4340, %v4333
    %v4887 = vpack.c.b16 %v4348, %v4341
    %v4888 = vpack.c.b16 %v4349, %v4342
    %v4889 = vpack.c.b16 %v4350, %v4343
    %v4890 = vpack.c.b16 %v4351, %v4344
    %v4891 = vpack.c.b16 %v4352, %v4345
    %v4892 = vpack.c.b16 %v4353, %v4346
    %v4893 = vpack.c.b16 %v4354, %v4347
    %v4894 = vpack.c.b16 %v4362, %v4355
    %v4895 = vpack.c.b16 %v4363, %v4356
    %v4896 = vpack.c.b16 %v4364, %v4357
    %v4897 = vpack.c.b16 %v4365, %v4358
    %v4898 = vpack.c.b16 %v4366, %v4359
    %v4899 = vpack.c.b16 %v4367, %v4360
    %v4900 = vpack.c.b16 %v4368, %v4361
    %v4901 = vpack.c.b16 %v4376, %v4369
    %v4902 = vpack.c.b16 %v4377, %v4370
    %v4903 = vpack.c.b16 %v4378, %v4371
    %v4904 = vpack.c.b16 %v4379, %v4372
    %v4905 = vpack.c.b16 %v4380, %v4373
    %v4906 = vpack.c.b16 %v4381, %v4374
    %v4907 = vpack.c.b16 %v4382, %v4375
    %v4908 = vpack.c.b16 %v4390, %v4383
    %v4909 = vpack.c.b16 %v4391, %v4384
    %v4910 = vpack.c.b16 %v4392, %v4385
    %v4911 = vpack.c.b16 %v4393, %v4386
    %v4912 = vpack.c.b16 %v4394, %v4387
    %v4913 = vpack.c.b16 %v4395, %v4388
    %v4914 = vpack.c.b16 %v4396, %v4389
    %v4915 = vpack.c.b16 %v4404, %v4397
    %v4916 = vpack.c.b16 %v4405, %v4398
    %v4917 = vpack.c.b16 %v4406, %v4399
    %v4918 = vpack.c.b16 %v4407, %v4400
    %v4919 = vpack.c.b16 %v4408, %v4401
    %v4920 = vpack.c.b16 %v4409, %v4402
    %v4921 = vpack.c.b16 %v4410, %v4403
    %v4922 = vpack.c.b16 %v4418, %v4411
    %v4923 = vpack.c.b16 %v4419, %v4412
    %v4924 = vpack.c.b16 %v4420, %v4413
    %v4925 = vpack.c.b16 %v4421, %v4414
    %v4926 = vpack.c.b16 %v4422, %v4415
    %v4927 = vpack.c.b16 %v4423, %v4416
    %v4928 = vpack.c.b16 %v4424, %v4417
    %v4929 = vpack.c.b16 %v4432, %v4425
    %v4930 = vpack.c.b16 %v4433, %v4426
    %v4931 = vpack.c.b16 %v4434, %v4427
    %v4932 = vpack.c.b16 %v4435, %v4428
    %v4933 = vpack.c.b16 %v4436, %v4429
    %v4934 = vpack.c.b16 %v4437, %v4430
    %v4935 = vpack.c.b16 %v4438, %v4431
    %v4936 = vpack.c.b16 %v4446, %v4439
    %v4937 = vpack.c.b16 %v4447, %v4440
    %v4938 = vpack.c.b16 %v4448, %v4441
    %v4939 = vpack.c.b16 %v4449, %v4442
    %v4940 = vpack.c.b16 %v4450, %v4443
    %v4941 = vpack.c.b16 %v4451, %v4444
    %v4942 = vpack.c.b16 %v4452, %v4445
    %v4943 = vpack.c.b16 %v4460, %v4453
    %v4944 = vpack.c.b16 %v4461, %v4454
    %v4945 = vpack.c.b16 %v4462, %v4455
    %v4946 = vpack.c.b16 %v4463, %v4456
    %v4947 = vpack.c.b16 %v4464, %v4457
    %v4948 = vpack.c.b16 %v4465, %v4458
    %v4949 = vpack.c.b16 %v4466, %v4459
    %v4950 = vpack.c.b16 %v4474, %v4467
    %v4951 = vpack.c.b16 %v4475, %v4468
    %v4952 = vpack.c.b16 %v4476, %v4469
    %v4953 = vpack.c.b16 %v4477, %v4470
    %v4954 = vpack.c.b16 %v4478, %v4471
    %v4955 = vpack.c.b16 %v4479, %v4472
    %v4956 = vpack.c.b16 %v4480, %v4473
    %v4957 = vpack.c.b16 %v4488, %v4481
    %v4958 = vpack.c.b16 %v4489, %v4482
    %v4959 = vpack.c.b16 %v4490, %v4483
    %v4960 = vpack.c.b16 %v4491, %v4484
    %v4961 = vpack.c.b16 %v4492, %v4485
    %v4962 = vpack.c.b16 %v4493, %v4486
    %v4963 = vpack.c.b16 %v4494, %v4487
    %v4964 = vpack.c.b16 %v4502, %v4495
    %v4965 = vpack.c.b16 %v4503, %v4496
    %v4966 = vpack.c.b16 %v4504, %v4497
    %v4967 = vpack.c.b16 %v4505, %v4498
    %v4968 = vpack.c.b16 %v4506, %v4499
    %v4969 = vpack.c.b16 %v4507, %v4500
    %v4970 = vpack.c.b16 %v4508, %v4501
    %v4971 = vpack.c.b16 %v4516, %v4509
    %v4972 = vpack.c.b16 %v4517, %v4510
    %v4973 = vpack.c.b16 %v4518, %v4511
    %v4974 = vpack.c.b16 %v4519, %v4512
    %v4975 = vpack.c.b16 %v4520, %v4513
    %v4976 = vpack.c.b16 %v4521, %v4514
    %v4977 = vpack.c.b16 %v4522, %v4515
    %v4978 = vpack.c.b16 %v4530, %v4523
    %v4979 = vpack.c.b16 %v4531, %v4524
    %v4980 = vpack.c.b16 %v4532, %v4525
    %v4981 = vpack.c.b16 %v4533, %v4526
    %v4982 = vpack.c.b16 %v4534, %v4527
    %v4983 = vpack.c.b16 %v4535, %v4528
    %v4984 = vpack.c.b16 %v4536, %v4529
    %5433 = vmatpush.bf16.msra.mxu0 %v4586
    %5434 = vmatpush.bf16.msra.mxu0 %v4579
    %5435 = vmatpush.bf16.msra.mxu0 %v4572
    %5436 = vmatpush.bf16.msra.mxu0 %v4565
    %5437 = vmatpush.bf16.msra.mxu0 %v4558
    %5438 = vmatpush.bf16.msra.mxu0 %v4551
    %5439 = vmatpush.bf16.msra.mxu0 %v4544
    %5440 = vmatpush.bf16.msra.mxu0 %v4537
    %5441 = vmatmul.bf16.gmra.mxu0 %v3106
    %v5442 = vpop.f32.mrf.mxu0
    %v5443 = vadd.f32 %v3115, %v5442
    %v5444 = vpop.f32.mrf.mxu0
    %5445 = vdwg.mxu0
    %5446 = vmatpush.bf16.msra.mxu0 %v4642
    %5447 = vmatpush.bf16.msra.mxu0 %v4635
    %5448 = vmatpush.bf16.msra.mxu0 %v4628
    %5449 = vmatpush.bf16.msra.mxu0 %v4621
    %5450 = vmatpush.bf16.msra.mxu0 %v4614
    %5451 = vmatpush.bf16.msra.mxu0 %v4607
    %5452 = vmatpush.bf16.msra.mxu0 %v4600
    %5453 = vmatpush.bf16.msra.mxu0 %v4593
    %5454 = vmatmul.bf16.gmra.mxu0 %v3107
    %v5455 = vpop.f32.mrf.mxu0
    %v5456 = vadd.f32 %v5443, %v5455
    %v5457 = vpop.f32.mrf.mxu0
    %5458 = vdwg.mxu0
    %5459 = vmatpush.bf16.msra.mxu0 %v4698
    %5460 = vmatpush.bf16.msra.mxu0 %v4691
    %5461 = vmatpush.bf16.msra.mxu0 %v4684
    %5462 = vmatpush.bf16.msra.mxu0 %v4677
    %5463 = vmatpush.bf16.msra.mxu0 %v4670
    %5464 = vmatpush.bf16.msra.mxu0 %v4663
    %5465 = vmatpush.bf16.msra.mxu0 %v4656
    %5466 = vmatpush.bf16.msra.mxu0 %v4649
    %5467 = vmatmul.bf16.gmra.mxu0 %v3108
    %v5468 = vpop.f32.mrf.mxu0
    %v5469 = vadd.f32 %v5456, %v5468
    %v5470 = vpop.f32.mrf.mxu0
    %5471 = vdwg.mxu0
    %5472 = vmatpush.bf16.msra.mxu0 %v4754
    %5473 = vmatpush.bf16.msra.mxu0 %v4747
    %5474 = vmatpush.bf16.msra.mxu0 %v4740
    %5475 = vmatpush.bf16.msra.mxu0 %v4733
    %5476 = vmatpush.bf16.msra.mxu0 %v4726
    %5477 = vmatpush.bf16.msra.mxu0 %v4719
    %5478 = vmatpush.bf16.msra.mxu0 %v4712
    %5479 = vmatpush.bf16.msra.mxu0 %v4705
    %5480 = vmatmul.bf16.gmra.mxu0 %v3109
    %v5481 = vpop.f32.mrf.mxu0
    %v5482 = vadd.f32 %v5469, %v5481
    %v5483 = vpop.f32.mrf.mxu0
    %5484 = vdwg.mxu0
    %5485 = vmatpush.bf16.msra.mxu0 %v4810
    %5486 = vmatpush.bf16.msra.mxu0 %v4803
    %5487 = vmatpush.bf16.msra.mxu0 %v4796
    %5488 = vmatpush.bf16.msra.mxu0 %v4789
    %5489 = vmatpush.bf16.msra.mxu0 %v4782
    %5490 = vmatpush.bf16.msra.mxu0 %v4775
    %5491 = vmatpush.bf16.msra.mxu0 %v4768
    %5492 = vmatpush.bf16.msra.mxu0 %v4761
    %5493 = vmatmul.bf16.gmra.mxu0 %v3110
    %v5494 = vpop.f32.mrf.mxu0
    %v5495 = vadd.f32 %v5482, %v5494
    %v5496 = vpop.f32.mrf.mxu0
    %5497 = vdwg.mxu0
    %5498 = vmatpush.bf16.msra.mxu0 %v4866
    %5499 = vmatpush.bf16.msra.mxu0 %v4859
    %5500 = vmatpush.bf16.msra.mxu0 %v4852
    %5501 = vmatpush.bf16.msra.mxu0 %v4845
    %5502 = vmatpush.bf16.msra.mxu0 %v4838
    %5503 = vmatpush.bf16.msra.mxu0 %v4831
    %5504 = vmatpush.bf16.msra.mxu0 %v4824
    %5505 = vmatpush.bf16.msra.mxu0 %v4817
    %5506 = vmatmul.bf16.gmra.mxu0 %v3111
    %v5507 = vpop.f32.mrf.mxu0
    %v5508 = vadd.f32 %v5495, %v5507
    %v5509 = vpop.f32.mrf.mxu0
    %5510 = vdwg.mxu0
    %5511 = vmatpush.bf16.msra.mxu0 %v4922
    %5512 = vmatpush.bf16.msra.mxu0 %v4915
    %5513 = vmatpush.bf16.msra.mxu0 %v4908
    %5514 = vmatpush.bf16.msra.mxu0 %v4901
    %5515 = vmatpush.bf16.msra.mxu0 %v4894
    %5516 = vmatpush.bf16.msra.mxu0 %v4887
    %5517 = vmatpush.bf16.msra.mxu0 %v4880
    %5518 = vmatpush.bf16.msra.mxu0 %v4873
    %5519 = vmatmul.bf16.gmra.mxu0 %v3112
    %v5520 = vpop.f32.mrf.mxu0
    %v5521 = vadd.f32 %v5508, %v5520
    %v5522 = vpop.f32.mrf.mxu0
    %5523 = vdwg.mxu0
    %5524 = vmatpush.bf16.msra.mxu0 %v4978
    %5525 = vmatpush.bf16.msra.mxu0 %v4971
    %5526 = vmatpush.bf16.msra.mxu0 %v4964
    %5527 = vmatpush.bf16.msra.mxu0 %v4957
    %5528 = vmatpush.bf16.msra.mxu0 %v4950
    %5529 = vmatpush.bf16.msra.mxu0 %v4943
    %5530 = vmatpush.bf16.msra.mxu0 %v4936
    %5531 = vmatpush.bf16.msra.mxu0 %v4929
    %5532 = vmatmul.bf16.gmra.mxu0 %v3113
    %v5533 = vpop.f32.mrf.mxu0
    %v5534 = vadd.f32 %v5521, %v5533
    %v5535 = vpop.f32.mrf.mxu0
    %5536 = vdwg.mxu0
    %5537 = vmatpush.bf16.msra.mxu0 %v4587
    %5538 = vmatpush.bf16.msra.mxu0 %v4580
    %5539 = vmatpush.bf16.msra.mxu0 %v4573
    %5540 = vmatpush.bf16.msra.mxu0 %v4566
    %5541 = vmatpush.bf16.msra.mxu0 %v4559
    %5542 = vmatpush.bf16.msra.mxu0 %v4552
    %5543 = vmatpush.bf16.msra.mxu0 %v4545
    %5544 = vmatpush.bf16.msra.mxu0 %v4538
    %5545 = vmatmul.bf16.gmra.mxu0 %v3106
    %v5546 = vpop.f32.mrf.mxu0
    %v5547 = vadd.f32 %v3116, %v5546
    %v5548 = vpop.f32.mrf.mxu0
    %5549 = vdwg.mxu0
    %5550 = vmatpush.bf16.msra.mxu0 %v4643
    %5551 = vmatpush.bf16.msra.mxu0 %v4636
    %5552 = vmatpush.bf16.msra.mxu0 %v4629
    %5553 = vmatpush.bf16.msra.mxu0 %v4622
    %5554 = vmatpush.bf16.msra.mxu0 %v4615
    %5555 = vmatpush.bf16.msra.mxu0 %v4608
    %5556 = vmatpush.bf16.msra.mxu0 %v4601
    %5557 = vmatpush.bf16.msra.mxu0 %v4594
    %5558 = vmatmul.bf16.gmra.mxu0 %v3107
    %v5559 = vpop.f32.mrf.mxu0
    %v5560 = vadd.f32 %v5547, %v5559
    %v5561 = vpop.f32.mrf.mxu0
    %5562 = vdwg.mxu0
    %5563 = vmatpush.bf16.msra.mxu0 %v4699
    %5564 = vmatpush.bf16.msra.mxu0 %v4692
    %5565 = vmatpush.bf16.msra.mxu0 %v4685
    %5566 = vmatpush.bf16.msra.mxu0 %v4678
    %5567 = vmatpush.bf16.msra.mxu0 %v4671
    %5568 = vmatpush.bf16.msra.mxu0 %v4664
    %5569 = vmatpush.bf16.msra.mxu0 %v4657
    %5570 = vmatpush.bf16.msra.mxu0 %v4650
    %5571 = vmatmul.bf16.gmra.mxu0 %v3108
    %v5572 = vpop.f32.mrf.mxu0
    %v5573 = vadd.f32 %v5560, %v5572
    %v5574 = vpop.f32.mrf.mxu0
    %5575 = vdwg.mxu0
    %5576 = vmatpush.bf16.msra.mxu0 %v4755
    %5577 = vmatpush.bf16.msra.mxu0 %v4748
    %5578 = vmatpush.bf16.msra.mxu0 %v4741
    %5579 = vmatpush.bf16.msra.mxu0 %v4734
    %5580 = vmatpush.bf16.msra.mxu0 %v4727
    %5581 = vmatpush.bf16.msra.mxu0 %v4720
    %5582 = vmatpush.bf16.msra.mxu0 %v4713
    %5583 = vmatpush.bf16.msra.mxu0 %v4706
    %5584 = vmatmul.bf16.gmra.mxu0 %v3109
    %v5585 = vpop.f32.mrf.mxu0
    %v5586 = vadd.f32 %v5573, %v5585
    %v5587 = vpop.f32.mrf.mxu0
    %5588 = vdwg.mxu0
    %5589 = vmatpush.bf16.msra.mxu0 %v4811
    %5590 = vmatpush.bf16.msra.mxu0 %v4804
    %5591 = vmatpush.bf16.msra.mxu0 %v4797
    %5592 = vmatpush.bf16.msra.mxu0 %v4790
    %5593 = vmatpush.bf16.msra.mxu0 %v4783
    %5594 = vmatpush.bf16.msra.mxu0 %v4776
    %5595 = vmatpush.bf16.msra.mxu0 %v4769
    %5596 = vmatpush.bf16.msra.mxu0 %v4762
    %5597 = vmatmul.bf16.gmra.mxu0 %v3110
    %v5598 = vpop.f32.mrf.mxu0
    %v5599 = vadd.f32 %v5586, %v5598
    %v5600 = vpop.f32.mrf.mxu0
    %5601 = vdwg.mxu0
    %5602 = vmatpush.bf16.msra.mxu0 %v4867
    %5603 = vmatpush.bf16.msra.mxu0 %v4860
    %5604 = vmatpush.bf16.msra.mxu0 %v4853
    %5605 = vmatpush.bf16.msra.mxu0 %v4846
    %5606 = vmatpush.bf16.msra.mxu0 %v4839
    %5607 = vmatpush.bf16.msra.mxu0 %v4832
    %5608 = vmatpush.bf16.msra.mxu0 %v4825
    %5609 = vmatpush.bf16.msra.mxu0 %v4818
    %5610 = vmatmul.bf16.gmra.mxu0 %v3111
    %v5611 = vpop.f32.mrf.mxu0
    %v5612 = vadd.f32 %v5599, %v5611
    %v5613 = vpop.f32.mrf.mxu0
    %5614 = vdwg.mxu0
    %5615 = vmatpush.bf16.msra.mxu0 %v4923
    %5616 = vmatpush.bf16.msra.mxu0 %v4916
    %5617 = vmatpush.bf16.msra.mxu0 %v4909
    %5618 = vmatpush.bf16.msra.mxu0 %v4902
    %5619 = vmatpush.bf16.msra.mxu0 %v4895
    %5620 = vmatpush.bf16.msra.mxu0 %v4888
    %5621 = vmatpush.bf16.msra.mxu0 %v4881
    %5622 = vmatpush.bf16.msra.mxu0 %v4874
    %5623 = vmatmul.bf16.gmra.mxu0 %v3112
    %v5624 = vpop.f32.mrf.mxu0
    %v5625 = vadd.f32 %v5612, %v5624
    %v5626 = vpop.f32.mrf.mxu0
    %5627 = vdwg.mxu0
    %5628 = vmatpush.bf16.msra.mxu0 %v4979
    %5629 = vmatpush.bf16.msra.mxu0 %v4972
    %5630 = vmatpush.bf16.msra.mxu0 %v4965
    %5631 = vmatpush.bf16.msra.mxu0 %v4958
    %5632 = vmatpush.bf16.msra.mxu0 %v4951
    %5633 = vmatpush.bf16.msra.mxu0 %v4944
    %5634 = vmatpush.bf16.msra.mxu0 %v4937
    %5635 = vmatpush.bf16.msra.mxu0 %v4930
    %5636 = vmatmul.bf16.gmra.mxu0 %v3113
    %v5637 = vpop.f32.mrf.mxu0
    %v5638 = vadd.f32 %v5625, %v5637
    %v5639 = vpop.f32.mrf.mxu0
    %5640 = vdwg.mxu0
    %5641 = vmatpush.bf16.msra.mxu0 %v4588
    %5642 = vmatpush.bf16.msra.mxu0 %v4581
    %5643 = vmatpush.bf16.msra.mxu0 %v4574
    %5644 = vmatpush.bf16.msra.mxu0 %v4567
    %5645 = vmatpush.bf16.msra.mxu0 %v4560
    %5646 = vmatpush.bf16.msra.mxu0 %v4553
    %5647 = vmatpush.bf16.msra.mxu0 %v4546
    %5648 = vmatpush.bf16.msra.mxu0 %v4539
    %5649 = vmatmul.bf16.gmra.mxu0 %v3106
    %v5650 = vpop.f32.mrf.mxu0
    %v5651 = vadd.f32 %v3117, %v5650
    %v5652 = vpop.f32.mrf.mxu0
    %5653 = vdwg.mxu0
    %5654 = vmatpush.bf16.msra.mxu0 %v4644
    %5655 = vmatpush.bf16.msra.mxu0 %v4637
    %5656 = vmatpush.bf16.msra.mxu0 %v4630
    %5657 = vmatpush.bf16.msra.mxu0 %v4623
    %5658 = vmatpush.bf16.msra.mxu0 %v4616
    %5659 = vmatpush.bf16.msra.mxu0 %v4609
    %5660 = vmatpush.bf16.msra.mxu0 %v4602
    %5661 = vmatpush.bf16.msra.mxu0 %v4595
    %5662 = vmatmul.bf16.gmra.mxu0 %v3107
    %v5663 = vpop.f32.mrf.mxu0
    %v5664 = vadd.f32 %v5651, %v5663
    %v5665 = vpop.f32.mrf.mxu0
    %5666 = vdwg.mxu0
    %5667 = vmatpush.bf16.msra.mxu0 %v4700
    %5668 = vmatpush.bf16.msra.mxu0 %v4693
    %5669 = vmatpush.bf16.msra.mxu0 %v4686
    %5670 = vmatpush.bf16.msra.mxu0 %v4679
    %5671 = vmatpush.bf16.msra.mxu0 %v4672
    %5672 = vmatpush.bf16.msra.mxu0 %v4665
    %5673 = vmatpush.bf16.msra.mxu0 %v4658
    %5674 = vmatpush.bf16.msra.mxu0 %v4651
    %5675 = vmatmul.bf16.gmra.mxu0 %v3108
    %v5676 = vpop.f32.mrf.mxu0
    %v5677 = vadd.f32 %v5664, %v5676
    %v5678 = vpop.f32.mrf.mxu0
    %5679 = vdwg.mxu0
    %5680 = vmatpush.bf16.msra.mxu0 %v4756
    %5681 = vmatpush.bf16.msra.mxu0 %v4749
    %5682 = vmatpush.bf16.msra.mxu0 %v4742
    %5683 = vmatpush.bf16.msra.mxu0 %v4735
    %5684 = vmatpush.bf16.msra.mxu0 %v4728
    %5685 = vmatpush.bf16.msra.mxu0 %v4721
    %5686 = vmatpush.bf16.msra.mxu0 %v4714
    %5687 = vmatpush.bf16.msra.mxu0 %v4707
    %5688 = vmatmul.bf16.gmra.mxu0 %v3109
    %v5689 = vpop.f32.mrf.mxu0
    %v5690 = vadd.f32 %v5677, %v5689
    %v5691 = vpop.f32.mrf.mxu0
    %5692 = vdwg.mxu0
    %5693 = vmatpush.bf16.msra.mxu0 %v4812
    %5694 = vmatpush.bf16.msra.mxu0 %v4805
    %5695 = vmatpush.bf16.msra.mxu0 %v4798
    %5696 = vmatpush.bf16.msra.mxu0 %v4791
    %5697 = vmatpush.bf16.msra.mxu0 %v4784
    %5698 = vmatpush.bf16.msra.mxu0 %v4777
    %5699 = vmatpush.bf16.msra.mxu0 %v4770
    %5700 = vmatpush.bf16.msra.mxu0 %v4763
    %5701 = vmatmul.bf16.gmra.mxu0 %v3110
    %v5702 = vpop.f32.mrf.mxu0
    %v5703 = vadd.f32 %v5690, %v5702
    %v5704 = vpop.f32.mrf.mxu0
    %5705 = vdwg.mxu0
    %5706 = vmatpush.bf16.msra.mxu0 %v4868
    %5707 = vmatpush.bf16.msra.mxu0 %v4861
    %5708 = vmatpush.bf16.msra.mxu0 %v4854
    %5709 = vmatpush.bf16.msra.mxu0 %v4847
    %5710 = vmatpush.bf16.msra.mxu0 %v4840
    %5711 = vmatpush.bf16.msra.mxu0 %v4833
    %5712 = vmatpush.bf16.msra.mxu0 %v4826
    %5713 = vmatpush.bf16.msra.mxu0 %v4819
    %5714 = vmatmul.bf16.gmra.mxu0 %v3111
    %v5715 = vpop.f32.mrf.mxu0
    %v5716 = vadd.f32 %v5703, %v5715
    %v5717 = vpop.f32.mrf.mxu0
    %5718 = vdwg.mxu0
    %5719 = vmatpush.bf16.msra.mxu0 %v4924
    %5720 = vmatpush.bf16.msra.mxu0 %v4917
    %5721 = vmatpush.bf16.msra.mxu0 %v4910
    %5722 = vmatpush.bf16.msra.mxu0 %v4903
    %5723 = vmatpush.bf16.msra.mxu0 %v4896
    %5724 = vmatpush.bf16.msra.mxu0 %v4889
    %5725 = vmatpush.bf16.msra.mxu0 %v4882
    %5726 = vmatpush.bf16.msra.mxu0 %v4875
    %5727 = vmatmul.bf16.gmra.mxu0 %v3112
    %v5728 = vpop.f32.mrf.mxu0
    %v5729 = vadd.f32 %v5716, %v5728
    %v5730 = vpop.f32.mrf.mxu0
    %5731 = vdwg.mxu0
    %5732 = vmatpush.bf16.msra.mxu0 %v4980
    %5733 = vmatpush.bf16.msra.mxu0 %v4973
    %5734 = vmatpush.bf16.msra.mxu0 %v4966
    %5735 = vmatpush.bf16.msra.mxu0 %v4959
    %5736 = vmatpush.bf16.msra.mxu0 %v4952
    %5737 = vmatpush.bf16.msra.mxu0 %v4945
    %5738 = vmatpush.bf16.msra.mxu0 %v4938
    %5739 = vmatpush.bf16.msra.mxu0 %v4931
    %5740 = vmatmul.bf16.gmra.mxu0 %v3113
    %v5741 = vpop.f32.mrf.mxu0
    %v5742 = vadd.f32 %v5729, %v5741
    %v5743 = vpop.f32.mrf.mxu0
    %5744 = vdwg.mxu0
    %5745 = vmatpush.bf16.msra.mxu0 %v4589
    %5746 = vmatpush.bf16.msra.mxu0 %v4582
    %5747 = vmatpush.bf16.msra.mxu0 %v4575
    %5748 = vmatpush.bf16.msra.mxu0 %v4568
    %5749 = vmatpush.bf16.msra.mxu0 %v4561
    %5750 = vmatpush.bf16.msra.mxu0 %v4554
    %5751 = vmatpush.bf16.msra.mxu0 %v4547
    %5752 = vmatpush.bf16.msra.mxu0 %v4540
    %5753 = vmatmul.bf16.gmra.mxu0 %v3106
    %v5754 = vpop.f32.mrf.mxu0
    %v5755 = vadd.f32 %v3118, %v5754
    %v5756 = vpop.f32.mrf.mxu0
    %5757 = vdwg.mxu0
    %5758 = vmatpush.bf16.msra.mxu0 %v4645
    %5759 = vmatpush.bf16.msra.mxu0 %v4638
    %5760 = vmatpush.bf16.msra.mxu0 %v4631
    %5761 = vmatpush.bf16.msra.mxu0 %v4624
    %5762 = vmatpush.bf16.msra.mxu0 %v4617
    %5763 = vmatpush.bf16.msra.mxu0 %v4610
    %5764 = vmatpush.bf16.msra.mxu0 %v4603
    %5765 = vmatpush.bf16.msra.mxu0 %v4596
    %5766 = vmatmul.bf16.gmra.mxu0 %v3107
    %v5767 = vpop.f32.mrf.mxu0
    %v5768 = vadd.f32 %v5755, %v5767
    %v5769 = vpop.f32.mrf.mxu0
    %5770 = vdwg.mxu0
    %5771 = vmatpush.bf16.msra.mxu0 %v4701
    %5772 = vmatpush.bf16.msra.mxu0 %v4694
    %5773 = vmatpush.bf16.msra.mxu0 %v4687
    %5774 = vmatpush.bf16.msra.mxu0 %v4680
    %5775 = vmatpush.bf16.msra.mxu0 %v4673
    %5776 = vmatpush.bf16.msra.mxu0 %v4666
    %5777 = vmatpush.bf16.msra.mxu0 %v4659
    %5778 = vmatpush.bf16.msra.mxu0 %v4652
    %5779 = vmatmul.bf16.gmra.mxu0 %v3108
    %v5780 = vpop.f32.mrf.mxu0
    %v5781 = vadd.f32 %v5768, %v5780
    %v5782 = vpop.f32.mrf.mxu0
    %5783 = vdwg.mxu0
    %5784 = vmatpush.bf16.msra.mxu0 %v4757
    %5785 = vmatpush.bf16.msra.mxu0 %v4750
    %5786 = vmatpush.bf16.msra.mxu0 %v4743
    %5787 = vmatpush.bf16.msra.mxu0 %v4736
    %5788 = vmatpush.bf16.msra.mxu0 %v4729
    %5789 = vmatpush.bf16.msra.mxu0 %v4722
    %5790 = vmatpush.bf16.msra.mxu0 %v4715
    %5791 = vmatpush.bf16.msra.mxu0 %v4708
    %5792 = vmatmul.bf16.gmra.mxu0 %v3109
    %v5793 = vpop.f32.mrf.mxu0
    %v5794 = vadd.f32 %v5781, %v5793
    %v5795 = vpop.f32.mrf.mxu0
    %5796 = vdwg.mxu0
    %5797 = vmatpush.bf16.msra.mxu0 %v4813
    %5798 = vmatpush.bf16.msra.mxu0 %v4806
    %5799 = vmatpush.bf16.msra.mxu0 %v4799
    %5800 = vmatpush.bf16.msra.mxu0 %v4792
    %5801 = vmatpush.bf16.msra.mxu0 %v4785
    %5802 = vmatpush.bf16.msra.mxu0 %v4778
    %5803 = vmatpush.bf16.msra.mxu0 %v4771
    %5804 = vmatpush.bf16.msra.mxu0 %v4764
    %5805 = vmatmul.bf16.gmra.mxu0 %v3110
    %v5806 = vpop.f32.mrf.mxu0
    %v5807 = vadd.f32 %v5794, %v5806
    %v5808 = vpop.f32.mrf.mxu0
    %5809 = vdwg.mxu0
    %5810 = vmatpush.bf16.msra.mxu0 %v4869
    %5811 = vmatpush.bf16.msra.mxu0 %v4862
    %5812 = vmatpush.bf16.msra.mxu0 %v4855
    %5813 = vmatpush.bf16.msra.mxu0 %v4848
    %5814 = vmatpush.bf16.msra.mxu0 %v4841
    %5815 = vmatpush.bf16.msra.mxu0 %v4834
    %5816 = vmatpush.bf16.msra.mxu0 %v4827
    %5817 = vmatpush.bf16.msra.mxu0 %v4820
    %5818 = vmatmul.bf16.gmra.mxu0 %v3111
    %v5819 = vpop.f32.mrf.mxu0
    %v5820 = vadd.f32 %v5807, %v5819
    %v5821 = vpop.f32.mrf.mxu0
    %5822 = vdwg.mxu0
    %5823 = vmatpush.bf16.msra.mxu0 %v4925
    %5824 = vmatpush.bf16.msra.mxu0 %v4918
    %5825 = vmatpush.bf16.msra.mxu0 %v4911
    %5826 = vmatpush.bf16.msra.mxu0 %v4904
    %5827 = vmatpush.bf16.msra.mxu0 %v4897
    %5828 = vmatpush.bf16.msra.mxu0 %v4890
    %5829 = vmatpush.bf16.msra.mxu0 %v4883
    %5830 = vmatpush.bf16.msra.mxu0 %v4876
    %5831 = vmatmul.bf16.gmra.mxu0 %v3112
    %v5832 = vpop.f32.mrf.mxu0
    %v5833 = vadd.f32 %v5820, %v5832
    %v5834 = vpop.f32.mrf.mxu0
    %5835 = vdwg.mxu0
    %5836 = vmatpush.bf16.msra.mxu0 %v4981
    %5837 = vmatpush.bf16.msra.mxu0 %v4974
    %5838 = vmatpush.bf16.msra.mxu0 %v4967
    %5839 = vmatpush.bf16.msra.mxu0 %v4960
    %5840 = vmatpush.bf16.msra.mxu0 %v4953
    %5841 = vmatpush.bf16.msra.mxu0 %v4946
    %5842 = vmatpush.bf16.msra.mxu0 %v4939
    %5843 = vmatpush.bf16.msra.mxu0 %v4932
    %5844 = vmatmul.bf16.gmra.mxu0 %v3113
    %v5845 = vpop.f32.mrf.mxu0
    %v5846 = vadd.f32 %v5833, %v5845
    %v5847 = vpop.f32.mrf.mxu0
    %5848 = vdwg.mxu0
    %5849 = vmatpush.bf16.msra.mxu0 %v4590
    %5850 = vmatpush.bf16.msra.mxu0 %v4583
    %5851 = vmatpush.bf16.msra.mxu0 %v4576
    %5852 = vmatpush.bf16.msra.mxu0 %v4569
    %5853 = vmatpush.bf16.msra.mxu0 %v4562
    %5854 = vmatpush.bf16.msra.mxu0 %v4555
    %5855 = vmatpush.bf16.msra.mxu0 %v4548
    %5856 = vmatpush.bf16.msra.mxu0 %v4541
    %5857 = vmatmul.bf16.gmra.mxu0 %v3106
    %v5858 = vpop.f32.mrf.mxu0
    %v5859 = vadd.f32 %v3119, %v5858
    %v5860 = vpop.f32.mrf.mxu0
    %5861 = vdwg.mxu0
    %5862 = vmatpush.bf16.msra.mxu0 %v4646
    %5863 = vmatpush.bf16.msra.mxu0 %v4639
    %5864 = vmatpush.bf16.msra.mxu0 %v4632
    %5865 = vmatpush.bf16.msra.mxu0 %v4625
    %5866 = vmatpush.bf16.msra.mxu0 %v4618
    %5867 = vmatpush.bf16.msra.mxu0 %v4611
    %5868 = vmatpush.bf16.msra.mxu0 %v4604
    %5869 = vmatpush.bf16.msra.mxu0 %v4597
    %5870 = vmatmul.bf16.gmra.mxu0 %v3107
    %v5871 = vpop.f32.mrf.mxu0
    %v5872 = vadd.f32 %v5859, %v5871
    %v5873 = vpop.f32.mrf.mxu0
    %5874 = vdwg.mxu0
    %5875 = vmatpush.bf16.msra.mxu0 %v4702
    %5876 = vmatpush.bf16.msra.mxu0 %v4695
    %5877 = vmatpush.bf16.msra.mxu0 %v4688
    %5878 = vmatpush.bf16.msra.mxu0 %v4681
    %5879 = vmatpush.bf16.msra.mxu0 %v4674
    %5880 = vmatpush.bf16.msra.mxu0 %v4667
    %5881 = vmatpush.bf16.msra.mxu0 %v4660
    %5882 = vmatpush.bf16.msra.mxu0 %v4653
    %5883 = vmatmul.bf16.gmra.mxu0 %v3108
    %v5884 = vpop.f32.mrf.mxu0
    %v5885 = vadd.f32 %v5872, %v5884
    %v5886 = vpop.f32.mrf.mxu0
    %5887 = vdwg.mxu0
    %5888 = vmatpush.bf16.msra.mxu0 %v4758
    %5889 = vmatpush.bf16.msra.mxu0 %v4751
    %5890 = vmatpush.bf16.msra.mxu0 %v4744
    %5891 = vmatpush.bf16.msra.mxu0 %v4737
    %5892 = vmatpush.bf16.msra.mxu0 %v4730
    %5893 = vmatpush.bf16.msra.mxu0 %v4723
    %5894 = vmatpush.bf16.msra.mxu0 %v4716
    %5895 = vmatpush.bf16.msra.mxu0 %v4709
    %5896 = vmatmul.bf16.gmra.mxu0 %v3109
    %v5897 = vpop.f32.mrf.mxu0
    %v5898 = vadd.f32 %v5885, %v5897
    %v5899 = vpop.f32.mrf.mxu0
    %5900 = vdwg.mxu0
    %5901 = vmatpush.bf16.msra.mxu0 %v4814
    %5902 = vmatpush.bf16.msra.mxu0 %v4807
    %5903 = vmatpush.bf16.msra.mxu0 %v4800
    %5904 = vmatpush.bf16.msra.mxu0 %v4793
    %5905 = vmatpush.bf16.msra.mxu0 %v4786
    %5906 = vmatpush.bf16.msra.mxu0 %v4779
    %5907 = vmatpush.bf16.msra.mxu0 %v4772
    %5908 = vmatpush.bf16.msra.mxu0 %v4765
    %5909 = vmatmul.bf16.gmra.mxu0 %v3110
    %v5910 = vpop.f32.mrf.mxu0
    %v5911 = vadd.f32 %v5898, %v5910
    %v5912 = vpop.f32.mrf.mxu0
    %5913 = vdwg.mxu0
    %5914 = vmatpush.bf16.msra.mxu0 %v4870
    %5915 = vmatpush.bf16.msra.mxu0 %v4863
    %5916 = vmatpush.bf16.msra.mxu0 %v4856
    %5917 = vmatpush.bf16.msra.mxu0 %v4849
    %5918 = vmatpush.bf16.msra.mxu0 %v4842
    %5919 = vmatpush.bf16.msra.mxu0 %v4835
    %5920 = vmatpush.bf16.msra.mxu0 %v4828
    %5921 = vmatpush.bf16.msra.mxu0 %v4821
    %5922 = vmatmul.bf16.gmra.mxu0 %v3111
    %v5923 = vpop.f32.mrf.mxu0
    %v5924 = vadd.f32 %v5911, %v5923
    %v5925 = vpop.f32.mrf.mxu0
    %5926 = vdwg.mxu0
    %5927 = vmatpush.bf16.msra.mxu0 %v4926
    %5928 = vmatpush.bf16.msra.mxu0 %v4919
    %5929 = vmatpush.bf16.msra.mxu0 %v4912
    %5930 = vmatpush.bf16.msra.mxu0 %v4905
    %5931 = vmatpush.bf16.msra.mxu0 %v4898
    %5932 = vmatpush.bf16.msra.mxu0 %v4891
    %5933 = vmatpush.bf16.msra.mxu0 %v4884
    %5934 = vmatpush.bf16.msra.mxu0 %v4877
    %5935 = vmatmul.bf16.gmra.mxu0 %v3112
    %v5936 = vpop.f32.mrf.mxu0
    %v5937 = vadd.f32 %v5924, %v5936
    %v5938 = vpop.f32.mrf.mxu0
    %5939 = vdwg.mxu0
    %5940 = vmatpush.bf16.msra.mxu0 %v4982
    %5941 = vmatpush.bf16.msra.mxu0 %v4975
    %5942 = vmatpush.bf16.msra.mxu0 %v4968
    %5943 = vmatpush.bf16.msra.mxu0 %v4961
    %5944 = vmatpush.bf16.msra.mxu0 %v4954
    %5945 = vmatpush.bf16.msra.mxu0 %v4947
    %5946 = vmatpush.bf16.msra.mxu0 %v4940
    %5947 = vmatpush.bf16.msra.mxu0 %v4933
    %5948 = vmatmul.bf16.gmra.mxu0 %v3113
    %v5949 = vpop.f32.mrf.mxu0
    %v5950 = vadd.f32 %v5937, %v5949
    %v5951 = vpop.f32.mrf.mxu0
    %5952 = vdwg.mxu0
    %5953 = vmatpush.bf16.msra.mxu0 %v4591
    %5954 = vmatpush.bf16.msra.mxu0 %v4584
    %5955 = vmatpush.bf16.msra.mxu0 %v4577
    %5956 = vmatpush.bf16.msra.mxu0 %v4570
    %5957 = vmatpush.bf16.msra.mxu0 %v4563
    %5958 = vmatpush.bf16.msra.mxu0 %v4556
    %5959 = vmatpush.bf16.msra.mxu0 %v4549
    %5960 = vmatpush.bf16.msra.mxu0 %v4542
    %5961 = vmatmul.bf16.gmra.mxu0 %v3106
    %v5962 = vpop.f32.mrf.mxu0
    %v5963 = vadd.f32 %v3120, %v5962
    %v5964 = vpop.f32.mrf.mxu0
    %5965 = vdwg.mxu0
    %5966 = vmatpush.bf16.msra.mxu0 %v4647
    %5967 = vmatpush.bf16.msra.mxu0 %v4640
    %5968 = vmatpush.bf16.msra.mxu0 %v4633
    %5969 = vmatpush.bf16.msra.mxu0 %v4626
    %5970 = vmatpush.bf16.msra.mxu0 %v4619
    %5971 = vmatpush.bf16.msra.mxu0 %v4612
    %5972 = vmatpush.bf16.msra.mxu0 %v4605
    %5973 = vmatpush.bf16.msra.mxu0 %v4598
    %5974 = vmatmul.bf16.gmra.mxu0 %v3107
    %v5975 = vpop.f32.mrf.mxu0
    %v5976 = vadd.f32 %v5963, %v5975
    %v5977 = vpop.f32.mrf.mxu0
    %5978 = vdwg.mxu0
    %5979 = vmatpush.bf16.msra.mxu0 %v4703
    %5980 = vmatpush.bf16.msra.mxu0 %v4696
    %5981 = vmatpush.bf16.msra.mxu0 %v4689
    %5982 = vmatpush.bf16.msra.mxu0 %v4682
    %5983 = vmatpush.bf16.msra.mxu0 %v4675
    %5984 = vmatpush.bf16.msra.mxu0 %v4668
    %5985 = vmatpush.bf16.msra.mxu0 %v4661
    %5986 = vmatpush.bf16.msra.mxu0 %v4654
    %5987 = vmatmul.bf16.gmra.mxu0 %v3108
    %v5988 = vpop.f32.mrf.mxu0
    %v5989 = vadd.f32 %v5976, %v5988
    %v5990 = vpop.f32.mrf.mxu0
    %5991 = vdwg.mxu0
    %5992 = vmatpush.bf16.msra.mxu0 %v4759
    %5993 = vmatpush.bf16.msra.mxu0 %v4752
    %5994 = vmatpush.bf16.msra.mxu0 %v4745
    %5995 = vmatpush.bf16.msra.mxu0 %v4738
    %5996 = vmatpush.bf16.msra.mxu0 %v4731
    %5997 = vmatpush.bf16.msra.mxu0 %v4724
    %5998 = vmatpush.bf16.msra.mxu0 %v4717
    %5999 = vmatpush.bf16.msra.mxu0 %v4710
    %6000 = vmatmul.bf16.gmra.mxu0 %v3109
    %v6001 = vpop.f32.mrf.mxu0
    %v6002 = vadd.f32 %v5989, %v6001
    %v6003 = vpop.f32.mrf.mxu0
    %6004 = vdwg.mxu0
    %6005 = vmatpush.bf16.msra.mxu0 %v4815
    %6006 = vmatpush.bf16.msra.mxu0 %v4808
    %6007 = vmatpush.bf16.msra.mxu0 %v4801
    %6008 = vmatpush.bf16.msra.mxu0 %v4794
    %6009 = vmatpush.bf16.msra.mxu0 %v4787
    %6010 = vmatpush.bf16.msra.mxu0 %v4780
    %6011 = vmatpush.bf16.msra.mxu0 %v4773
    %6012 = vmatpush.bf16.msra.mxu0 %v4766
    %6013 = vmatmul.bf16.gmra.mxu0 %v3110
    %v6014 = vpop.f32.mrf.mxu0
    %v6015 = vadd.f32 %v6002, %v6014
    %v6016 = vpop.f32.mrf.mxu0
    %6017 = vdwg.mxu0
    %6018 = vmatpush.bf16.msra.mxu0 %v4871
    %6019 = vmatpush.bf16.msra.mxu0 %v4864
    %6020 = vmatpush.bf16.msra.mxu0 %v4857
    %6021 = vmatpush.bf16.msra.mxu0 %v4850
    %6022 = vmatpush.bf16.msra.mxu0 %v4843
    %6023 = vmatpush.bf16.msra.mxu0 %v4836
    %6024 = vmatpush.bf16.msra.mxu0 %v4829
    %6025 = vmatpush.bf16.msra.mxu0 %v4822
    %6026 = vmatmul.bf16.gmra.mxu0 %v3111
    %v6027 = vpop.f32.mrf.mxu0
    %v6028 = vadd.f32 %v6015, %v6027
    %v6029 = vpop.f32.mrf.mxu0
    %6030 = vdwg.mxu0
    %6031 = vmatpush.bf16.msra.mxu0 %v4927
    %6032 = vmatpush.bf16.msra.mxu0 %v4920
    %6033 = vmatpush.bf16.msra.mxu0 %v4913
    %6034 = vmatpush.bf16.msra.mxu0 %v4906
    %6035 = vmatpush.bf16.msra.mxu0 %v4899
    %6036 = vmatpush.bf16.msra.mxu0 %v4892
    %6037 = vmatpush.bf16.msra.mxu0 %v4885
    %6038 = vmatpush.bf16.msra.mxu0 %v4878
    %6039 = vmatmul.bf16.gmra.mxu0 %v3112
    %v6040 = vpop.f32.mrf.mxu0
    %v6041 = vadd.f32 %v6028, %v6040
    %v6042 = vpop.f32.mrf.mxu0
    %6043 = vdwg.mxu0
    %6044 = vmatpush.bf16.msra.mxu0 %v4983
    %6045 = vmatpush.bf16.msra.mxu0 %v4976
    %6046 = vmatpush.bf16.msra.mxu0 %v4969
    %6047 = vmatpush.bf16.msra.mxu0 %v4962
    %6048 = vmatpush.bf16.msra.mxu0 %v4955
    %6049 = vmatpush.bf16.msra.mxu0 %v4948
    %6050 = vmatpush.bf16.msra.mxu0 %v4941
    %6051 = vmatpush.bf16.msra.mxu0 %v4934
    %6052 = vmatmul.bf16.gmra.mxu0 %v3113
    %v6053 = vpop.f32.mrf.mxu0
    %v6054 = vadd.f32 %v6041, %v6053
    %v6055 = vpop.f32.mrf.mxu0
    %6056 = vdwg.mxu0
    %6057 = vmatpush.bf16.msra.mxu0 %v4592
    %6058 = vmatpush.bf16.msra.mxu0 %v4585
    %6059 = vmatpush.bf16.msra.mxu0 %v4578
    %6060 = vmatpush.bf16.msra.mxu0 %v4571
    %6061 = vmatpush.bf16.msra.mxu0 %v4564
    %6062 = vmatpush.bf16.msra.mxu0 %v4557
    %6063 = vmatpush.bf16.msra.mxu0 %v4550
    %6064 = vmatpush.bf16.msra.mxu0 %v4543
    %6065 = vmatmul.bf16.gmra.mxu0 %v3106
    %v6066 = vpop.f32.mrf.mxu0
    %v6067 = vadd.f32 %v3121, %v6066
    %v6068 = vpop.f32.mrf.mxu0
    %6069 = vdwg.mxu0
    %6070 = vmatpush.bf16.msra.mxu0 %v4648
    %6071 = vmatpush.bf16.msra.mxu0 %v4641
    %6072 = vmatpush.bf16.msra.mxu0 %v4634
    %6073 = vmatpush.bf16.msra.mxu0 %v4627
    %6074 = vmatpush.bf16.msra.mxu0 %v4620
    %6075 = vmatpush.bf16.msra.mxu0 %v4613
    %6076 = vmatpush.bf16.msra.mxu0 %v4606
    %6077 = vmatpush.bf16.msra.mxu0 %v4599
    %6078 = vmatmul.bf16.gmra.mxu0 %v3107
    %v6079 = vpop.f32.mrf.mxu0
    %v6080 = vadd.f32 %v6067, %v6079
    %v6081 = vpop.f32.mrf.mxu0
    %6082 = vdwg.mxu0
    %6083 = vmatpush.bf16.msra.mxu0 %v4704
    %6084 = vmatpush.bf16.msra.mxu0 %v4697
    %6085 = vmatpush.bf16.msra.mxu0 %v4690
    %6086 = vmatpush.bf16.msra.mxu0 %v4683
    %6087 = vmatpush.bf16.msra.mxu0 %v4676
    %6088 = vmatpush.bf16.msra.mxu0 %v4669
    %6089 = vmatpush.bf16.msra.mxu0 %v4662
    %6090 = vmatpush.bf16.msra.mxu0 %v4655
    %6091 = vmatmul.bf16.gmra.mxu0 %v3108
    %v6092 = vpop.f32.mrf.mxu0
    %v6093 = vadd.f32 %v6080, %v6092
    %v6094 = vpop.f32.mrf.mxu0
    %6095 = vdwg.mxu0
    %6096 = vmatpush.bf16.msra.mxu0 %v4760
    %6097 = vmatpush.bf16.msra.mxu0 %v4753
    %6098 = vmatpush.bf16.msra.mxu0 %v4746
    %6099 = vmatpush.bf16.msra.mxu0 %v4739
    %6100 = vmatpush.bf16.msra.mxu0 %v4732
    %6101 = vmatpush.bf16.msra.mxu0 %v4725
    %6102 = vmatpush.bf16.msra.mxu0 %v4718
    %6103 = vmatpush.bf16.msra.mxu0 %v4711
    %6104 = vmatmul.bf16.gmra.mxu0 %v3109
    %v6105 = vpop.f32.mrf.mxu0
    %v6106 = vadd.f32 %v6093, %v6105
    %v6107 = vpop.f32.mrf.mxu0
    %6108 = vdwg.mxu0
    %6109 = vmatpush.bf16.msra.mxu0 %v4816
    %6110 = vmatpush.bf16.msra.mxu0 %v4809
    %6111 = vmatpush.bf16.msra.mxu0 %v4802
    %6112 = vmatpush.bf16.msra.mxu0 %v4795
    %6113 = vmatpush.bf16.msra.mxu0 %v4788
    %6114 = vmatpush.bf16.msra.mxu0 %v4781
    %6115 = vmatpush.bf16.msra.mxu0 %v4774
    %6116 = vmatpush.bf16.msra.mxu0 %v4767
    %6117 = vmatmul.bf16.gmra.mxu0 %v3110
    %v6118 = vpop.f32.mrf.mxu0
    %v6119 = vadd.f32 %v6106, %v6118
    %v6120 = vpop.f32.mrf.mxu0
    %6121 = vdwg.mxu0
    %6122 = vmatpush.bf16.msra.mxu0 %v4872
    %6123 = vmatpush.bf16.msra.mxu0 %v4865
    %6124 = vmatpush.bf16.msra.mxu0 %v4858
    %6125 = vmatpush.bf16.msra.mxu0 %v4851
    %6126 = vmatpush.bf16.msra.mxu0 %v4844
    %6127 = vmatpush.bf16.msra.mxu0 %v4837
    %6128 = vmatpush.bf16.msra.mxu0 %v4830
    %6129 = vmatpush.bf16.msra.mxu0 %v4823
    %6130 = vmatmul.bf16.gmra.mxu0 %v3111
    %v6131 = vpop.f32.mrf.mxu0
    %v6132 = vadd.f32 %v6119, %v6131
    %v6133 = vpop.f32.mrf.mxu0
    %6134 = vdwg.mxu0
    %6135 = vmatpush.bf16.msra.mxu0 %v4928
    %6136 = vmatpush.bf16.msra.mxu0 %v4921
    %6137 = vmatpush.bf16.msra.mxu0 %v4914
    %6138 = vmatpush.bf16.msra.mxu0 %v4907
    %6139 = vmatpush.bf16.msra.mxu0 %v4900
    %6140 = vmatpush.bf16.msra.mxu0 %v4893
    %6141 = vmatpush.bf16.msra.mxu0 %v4886
    %6142 = vmatpush.bf16.msra.mxu0 %v4879
    %6143 = vmatmul.bf16.gmra.mxu0 %v3112
    %v6144 = vpop.f32.mrf.mxu0
    %v6145 = vadd.f32 %v6132, %v6144
    %v6146 = vpop.f32.mrf.mxu0
    %6147 = vdwg.mxu0
    %6148 = vmatpush.bf16.msra.mxu0 %v4984
    %6149 = vmatpush.bf16.msra.mxu0 %v4977
    %6150 = vmatpush.bf16.msra.mxu0 %v4970
    %6151 = vmatpush.bf16.msra.mxu0 %v4963
    %6152 = vmatpush.bf16.msra.mxu0 %v4956
    %6153 = vmatpush.bf16.msra.mxu0 %v4949
    %6154 = vmatpush.bf16.msra.mxu0 %v4942
    %6155 = vmatpush.bf16.msra.mxu0 %v4935
    %6156 = vmatmul.bf16.gmra.mxu0 %v3113
    %v6157 = vpop.f32.mrf.mxu0
    %v6158 = vadd.f32 %v6145, %v6157
    %v6159 = vpop.f32.mrf.mxu0
    %6160 = vdwg.mxu0
    %v6161 = vxor.u32 %v5534, 2147483648
    %v6162 = vxor.u32 %v5638, 2147483648
    %v6163 = vxor.u32 %v5742, 2147483648
    %v6164 = vxor.u32 %v5846, 2147483648
    %v6165 = vxor.u32 %v5950, 2147483648
    %v6166 = vxor.u32 %v6054, 2147483648
    %v6167 = vxor.u32 %v6158, 2147483648
    %v6168 = vmul.f32 %v6161, 1.442695
    %v6169 = vpow.pop %v6168
    %v6170 = vmul.f32 %v6162, 1.442695
    %v6171 = vpow.pop %v6170
    %v6172 = vmul.f32 %v6163, 1.442695
    %v6173 = vpow.pop %v6172
    %v6174 = vmul.f32 %v6164, 1.442695
    %v6175 = vpow.pop %v6174
    %v6176 = vmul.f32 %v6165, 1.442695
    %v6177 = vpow.pop %v6176
    %v6178 = vmul.f32 %v6166, 1.442695
    %v6179 = vpow.pop %v6178
    %v6180 = vmul.f32 %v6167, 1.442695
    %v6181 = vpow.pop %v6180
    %v6182 = vadd.f32 %v6169, 1.0
    %v6183 = vadd.f32 %v6171, 1.0
    %v6184 = vadd.f32 %v6173, 1.0
    %v6185 = vadd.f32 %v6175, 1.0
    %v6186 = vadd.f32 %v6177, 1.0
    %v6187 = vadd.f32 %v6179, 1.0
    %v6188 = vadd.f32 %v6181, 1.0
    %v6189 = vrcp.pop %v6182
    %v6190 = vmul.f32 %v6182, %v6189
    %v6191 = vsub.f32 1.0, %v6190
    %v6192 = vmul.f32 %v6189, %v6191
    %v6193 = vadd.f32 %v6189, %v6192
    %vm6194 = vweird.f32 %v6182
    %vm6195 = vweird.f32 %v6189
    %vm6196 = vmor %vm6194, %vm6195
    %v6197 = vsel %vm6196, %v6189, %v6193
    %v6198 = vand.u32 2147483647, %v6182
    %vm6199 = vcmp.eq.f32.partialorder %v6198, 8.507059e+37
    %v6200 = vand.u32 %v6182, 2147483648
    %v6201 = vor.u32 1.1754944e-38, %v6200
    %v6202 = vsel %vm6199, %v6201, %v6197
    %v6203 = vmul.f32 1.0, %v6202
    %v6204 = vrcp.pop %v6183
    %v6205 = vmul.f32 %v6183, %v6204
    %v6206 = vsub.f32 1.0, %v6205
    %v6207 = vmul.f32 %v6204, %v6206
    %v6208 = vadd.f32 %v6204, %v6207
    %vm6209 = vweird.f32 %v6183
    %vm6210 = vweird.f32 %v6204
    %vm6211 = vmor %vm6209, %vm6210
    %v6212 = vsel %vm6211, %v6204, %v6208
    %v6213 = vand.u32 2147483647, %v6183
    %vm6214 = vcmp.eq.f32.partialorder %v6213, 8.507059e+37
    %v6215 = vand.u32 %v6183, 2147483648
    %v6216 = vor.u32 1.1754944e-38, %v6215
    %v6217 = vsel %vm6214, %v6216, %v6212
    %v6218 = vmul.f32 1.0, %v6217
    %v6219 = vrcp.pop %v6184
    %v6220 = vmul.f32 %v6184, %v6219
    %v6221 = vsub.f32 1.0, %v6220
    %v6222 = vmul.f32 %v6219, %v6221
    %v6223 = vadd.f32 %v6219, %v6222
    %vm6224 = vweird.f32 %v6184
    %vm6225 = vweird.f32 %v6219
    %vm6226 = vmor %vm6224, %vm6225
    %v6227 = vsel %vm6226, %v6219, %v6223
    %v6228 = vand.u32 2147483647, %v6184
    %vm6229 = vcmp.eq.f32.partialorder %v6228, 8.507059e+37
    %v6230 = vand.u32 %v6184, 2147483648
    %v6231 = vor.u32 1.1754944e-38, %v6230
    %v6232 = vsel %vm6229, %v6231, %v6227
    %v6233 = vmul.f32 1.0, %v6232
    %v6234 = vrcp.pop %v6185
    %v6235 = vmul.f32 %v6185, %v6234
    %v6236 = vsub.f32 1.0, %v6235
    %v6237 = vmul.f32 %v6234, %v6236
    %v6238 = vadd.f32 %v6234, %v6237
    %vm6239 = vweird.f32 %v6185
    %vm6240 = vweird.f32 %v6234
    %vm6241 = vmor %vm6239, %vm6240
    %v6242 = vsel %vm6241, %v6234, %v6238
    %v6243 = vand.u32 2147483647, %v6185
    %vm6244 = vcmp.eq.f32.partialorder %v6243, 8.507059e+37
    %v6245 = vand.u32 %v6185, 2147483648
    %v6246 = vor.u32 1.1754944e-38, %v6245
    %v6247 = vsel %vm6244, %v6246, %v6242
    %v6248 = vmul.f32 1.0, %v6247
    %v6249 = vrcp.pop %v6186
    %v6250 = vmul.f32 %v6186, %v6249
    %v6251 = vsub.f32 1.0, %v6250
    %v6252 = vmul.f32 %v6249, %v6251
    %v6253 = vadd.f32 %v6249, %v6252
    %vm6254 = vweird.f32 %v6186
    %vm6255 = vweird.f32 %v6249
    %vm6256 = vmor %vm6254, %vm6255
    %v6257 = vsel %vm6256, %v6249, %v6253
    %v6258 = vand.u32 2147483647, %v6186
    %vm6259 = vcmp.eq.f32.partialorder %v6258, 8.507059e+37
    %v6260 = vand.u32 %v6186, 2147483648
    %v6261 = vor.u32 1.1754944e-38, %v6260
    %v6262 = vsel %vm6259, %v6261, %v6257
    %v6263 = vmul.f32 1.0, %v6262
    %v6264 = vrcp.pop %v6187
    %v6265 = vmul.f32 %v6187, %v6264
    %v6266 = vsub.f32 1.0, %v6265
    %v6267 = vmul.f32 %v6264, %v6266
    %v6268 = vadd.f32 %v6264, %v6267
    %vm6269 = vweird.f32 %v6187
    %vm6270 = vweird.f32 %v6264
    %vm6271 = vmor %vm6269, %vm6270
    %v6272 = vsel %vm6271, %v6264, %v6268
    %v6273 = vand.u32 2147483647, %v6187
    %vm6274 = vcmp.eq.f32.partialorder %v6273, 8.507059e+37
    %v6275 = vand.u32 %v6187, 2147483648
    %v6276 = vor.u32 1.1754944e-38, %v6275
    %v6277 = vsel %vm6274, %v6276, %v6272
    %v6278 = vmul.f32 1.0, %v6277
    %v6279 = vrcp.pop %v6188
    %v6280 = vmul.f32 %v6188, %v6279
    %v6281 = vsub.f32 1.0, %v6280
    %v6282 = vmul.f32 %v6279, %v6281
    %v6283 = vadd.f32 %v6279, %v6282
    %vm6284 = vweird.f32 %v6188
    %vm6285 = vweird.f32 %v6279
    %vm6286 = vmor %vm6284, %vm6285
    %v6287 = vsel %vm6286, %v6279, %v6283
    %v6288 = vand.u32 2147483647, %v6188
    %vm6289 = vcmp.eq.f32.partialorder %v6288, 8.507059e+37
    %v6290 = vand.u32 %v6188, 2147483648
    %v6291 = vor.u32 1.1754944e-38, %v6290
    %v6292 = vsel %vm6289, %v6291, %v6287
    %v6293 = vmul.f32 1.0, %v6292
    %6294 = vst [vmem:[#allocation19] sm:$0xff] %v6203
    %6295 = vst [vmem:[#allocation19 + $0x8] sm:$0xff] %v6218
    %6296 = vst [vmem:[#allocation19 + $0x10] sm:$0xff] %v6233
    %6297 = vst [vmem:[#allocation19 + $0x18] sm:$0xff] %v6248
    %6298 = vst [vmem:[#allocation19 + $0x20] sm:$0xff] %v6263
    %6299 = vst [vmem:[#allocation19 + $0x28] sm:$0xff] %v6278
    %6300 = vst [vmem:[#allocation19 + $0x30] sm:$0xff] %v6293
    // Predicated region
    $region86: #{_lambda_.1} parent=1 // pred_check
      _
    $region87: #{_lambda_.1} parent=1 // pred_check_branch
      %6302 = sbr.rel (0) target = $region89
    $region88: #{_lambda_.1} parent=1 // pred_region
      %6304 = vsyncadd [#allocation4], 0
      %s6306 = sshll.u32 [#allocation19], 4
      %s6307 = int_to_ptr.vmem [resolvable:$true] %s6306
      %s6308 = sshll.u32 %s11, 4
      %s6309 = int_to_ptr.hbm [resolvable:$true] %s6308
      %6311 = dma.vmem_to_hbm [thread:$0]  %s6307, 896, %s6309, [#allocation4]
    $region89: #{_lambda_.1} parent=1 // pred_fallthru
      _
    // Predicated region
    $region90: #{_lambda_.1} parent=1 // pred_check
      _
    $region91: #{_lambda_.1} parent=1 // pred_check_branch
      %6313 = sbr.rel (0) target = $region93
    $region92: #{_lambda_.1} parent=1 // pred_region
      %6315 = dma.done [#allocation4], 896
    $region93: #{_lambda_.1} parent=1 // pred_fallthru
      _
    %6316 = vsyncpa [#allocation3], 1
    %6317 = vsyncpa [#allocation6], 1
    %6318 = vsyncpa [#allocation9], 1
    %6319 = vsyncpa [#allocation12], 1
    %6320 = vsyncpa [#allocation15], 1
    %6321 = vsyncpa [#allocation18], 1
    %6322 = vsyncpa [#allocation4], 1

</llo_original>
